<compile_context>
chip_gen: v6e
topology: v6e:2x2x1
jax: 0.10.0
libtpu: 0.0.40
codegen_flags: <defaults>
</compile_context>

<pallas_src>
import functools

import jax
import jax.numpy as jnp
from jax.experimental import pallas as pl
from jax.experimental.pallas import tpu as pltpu


# ----------------------------- Pallas kernel ------------------------------- #

def _layernorm(v, w, b, eps=1e-5):
    mu = jnp.mean(v, axis=-1, keepdims=True)
    var = jnp.mean((v - mu) ** 2, axis=-1, keepdims=True)
    return (v - mu) * jax.lax.rsqrt(var + eps) * w + b


def transformer_stack_kernel(
    x_ref,
    ln1_w_ref, ln1_b_ref, wq_ref, wk_ref, wv_ref, wout_ref, bout_ref,
    ln2_w_ref, ln2_b_ref, w1_ref, b1_ref, w2_ref, b2_ref,
    ln3_w_ref, ln3_b_ref, w3_ref, b3_ref,
    o_ref,
    *, depth, heads, batch, seq,
):
    # x is the flattened activation (B*N, D); it stays in VMEM for the whole stack.
    x = x_ref[...].astype(jnp.float32)

    for l in range(depth):                       # static unroll over layers
        # ---------------- PreNorm + multi-head attention + residual ----------------
        xn = _layernorm(x, ln1_w_ref[l], ln1_b_ref[l])                 # (BN, D)
        attn_parts = [None] * batch
        for h in range(heads):                   # static unroll over heads
            idx = l * heads + h                  # leading-dim index into stacked weights
            # Per-head projections (softmax scale already folded into wq at prep time).
            q = jnp.dot(xn, wq_ref[idx], preferred_element_type=jnp.float32)   # (BN, d)
            k = jnp.dot(xn, wk_ref[idx], preferred_element_type=jnp.float32)   # (BN, d)
            v = jnp.dot(xn, wv_ref[idx], preferred_element_type=jnp.float32)   # (BN, d)
            for b in range(batch):               # tiny static loop; sublane-aligned rows
                r = slice(b * seq, (b + 1) * seq)
                dots = jax.lax.dot_general(
                    q[r], k[r], (((1,), (1,)), ((), ())),
                    preferred_element_type=jnp.float32)                        # (N, N)
                dots = dots - jnp.max(dots, axis=-1, keepdims=True)
                e = jnp.exp(dots)
                p = e * pl.reciprocal(jnp.sum(e, axis=-1, keepdims=True),
                                      approx=True)
                oh = jnp.dot(p, v[r], preferred_element_type=jnp.float32)      # (N, d)
                # Project this head straight to model dim and accumulate (no concat).
                c = jnp.dot(oh, wout_ref[idx],
                            preferred_element_type=jnp.float32)                # (N, D)
                attn_parts[b] = c if attn_parts[b] is None else attn_parts[b] + c
        attn_out = jnp.concatenate(attn_parts, axis=0) + bout_ref[l]           # (BN, D)
        x = x + attn_out                                                       # residual 1

        # ---------------- PreNorm + FeedForward + residual ----------------
        xn = _layernorm(x, ln2_w_ref[l], ln2_b_ref[l])
        h1 = jnp.dot(xn, w1_ref[l], preferred_element_type=jnp.float32) + b1_ref[l]
        # exact (erf-based) GELU, matching torch.nn.GELU()
        h1 = 0.5 * h1 * (1.0 + jax.lax.erf(h1 * 0.7071067811865476))
        h2 = jnp.dot(h1, w2_ref[l], preferred_element_type=jnp.float32) + b2_ref[l]
        h2 = _layernorm(h2, ln3_w_ref[l], ln3_b_ref[l])
        ff = jnp.dot(h2, w3_ref[l], preferred_element_type=jnp.float32) + b3_ref[l]
        x = x + ff                                                             # residual 2

    o_ref[...] = x.astype(o_ref.dtype)


# ------------------------------- Wrapper ------------------------------------ #

_WEIGHT_ORDER = (
    "ln1_w", "ln1_b", "wq", "wk", "wv", "wout", "bout",
    "ln2_w", "ln2_b", "w1", "b1", "w2", "b2", "ln3_w", "ln3_b", "w3", "b3",
)


def _full_spec(shape):
    nd = len(shape)
    return pl.BlockSpec(shape, lambda i, _nd=nd: (0,) * _nd)


def prepare_params(layers, *, heads, dim_head):
    """Stack per-layer weights along depth and pre-split attention weights per head.

    The softmax scale (dim_head**-0.5) is folded into the Q projection here, so the
    kernel never multiplies the (N, N) score matrix by a scalar.
    """
    depth = len(layers)
    d = dim_head
    inner = heads * d
    scale = float(d) ** -0.5

    def stack(key):
        return jnp.stack([layer[key] for layer in layers], axis=0)

    wqkv = stack("wqkv")                           # (depth, D, 3*inner)
    D = wqkv.shape[1]

    def per_head_in(w):                            # (depth, D, inner) -> (depth*heads, D, d)
        return (w.reshape(depth, D, heads, d)
                 .transpose(0, 2, 1, 3)
                 .reshape(depth * heads, D, d))

    wq = per_head_in(wqkv[:, :, :inner]) * scale   # fold scale into Q
    wk = per_head_in(wqkv[:, :, inner:2 * inner])
    wv = per_head_in(wqkv[:, :, 2 * inner:])
    wout = stack("wout").reshape(depth, heads, d, D).reshape(depth * heads, d, D)

    return dict(
        ln1_w=stack("ln1_w"), ln1_b=stack("ln1_b"),
        wq=wq, wk=wk, wv=wv, wout=wout, bout=stack("bout"),
        ln2_w=stack("ln2_w"), ln2_b=stack("ln2_b"),
        w1=stack("w1"), b1=stack("b1"), w2=stack("w2"), b2=stack("b2"),
        ln3_w=stack("ln3_w"), ln3_b=stack("ln3_b"),
        w3=stack("w3"), b3=stack("b3"),
    )


@jax.jit
def transformer_forward(x, stacked):
    """Applies the full `depth`-layer transformer in a single fused Pallas kernel.

    x: (B, N, D) float32.  `stacked` comes from prepare_params().
    """
    B, N, D = x.shape
    depth = stacked["w1"].shape[0]
    heads = stacked["wq"].shape[0] // depth

    xf = x.reshape(B * N, D)
    kernel = functools.partial(
        transformer_stack_kernel, depth=depth, heads=heads, batch=B, seq=N)

    weights = [stacked[k] for k in _WEIGHT_ORDER]
    in_specs = [_full_spec(xf.shape)] + [_full_spec(w.shape) for w in weights]

    out = pl.pallas_call(
        kernel,
        out_shape=jax.ShapeDtypeStruct((B * N, D), x.dtype),
        grid=(1,),                                # whole problem in one step; no megacore split
        in_specs=in_specs,
        out_specs=_full_spec((B * N, D)),
        compiler_params=pltpu.CompilerParams(
            dimension_semantics=("arbitrary",)),
    )(xf, *weights)
    return out.reshape(B, N, D)


# --------------------------- Parameter init --------------------------------- #

def init_params(key, depth, dim, heads, dim_head, mlp_dim, num_classes=7):
    inner = heads * dim_head
    layers = []
    for _ in range(depth):
        keys = jax.random.split(key, 16)
        key = keys[0]
        nrm = lambda k, shp, s=0.05: (s * jax.random.normal(k, shp)).astype(jnp.float32)
        layer = dict(
            ln1_w=jnp.ones((1, dim), jnp.float32) + nrm(keys[1], (1, dim), 0.02),
            ln1_b=nrm(keys[2], (1, dim), 0.02),
            wqkv=nrm(keys[3], (dim, 3 * inner)),          # transposed PyTorch (out,in)
            wout=nrm(keys[4], (inner, dim)),
            bout=nrm(keys[5], (1, dim), 0.02),
            ln2_w=jnp.ones((1, dim), jnp.float32) + nrm(keys[6], (1, dim), 0.02),
            ln2_b=nrm(keys[7], (1, dim), 0.02),
            w1=nrm(keys[8], (dim, mlp_dim)),
            b1=nrm(keys[9], (1, mlp_dim), 0.02),
            w2=nrm(keys[10], (mlp_dim, dim)),
            b2=nrm(keys[11], (1, dim), 0.02),
            ln3_w=jnp.ones((1, dim), jnp.float32) + nrm(keys[12], (1, dim), 0.02),
            ln3_b=nrm(keys[13], (1, dim), 0.02),
            w3=nrm(keys[14], (dim, num_classes)),
            b3=nrm(keys[15], (1, num_classes), 0.02),
        )
        layers.append(layer)
    return layers


# ------------------------- Pure-JAX reference -------------------------------- #

def _ref_ln(v, w, b, eps=1e-5):
    mu = jnp.mean(v, axis=-1, keepdims=True)
    var = jnp.mean((v - mu) ** 2, axis=-1, keepdims=True)
    return (v - mu) / jnp.sqrt(var + eps) * w + b


def reference_forward(x, layers, *, heads, dim_head):
    HI = jax.lax.Precision.HIGHEST
    scale = float(dim_head) ** -0.5
    inner = heads * dim_head
    B, N, D = x.shape
    for p in layers:
        xn = _ref_ln(x, p["ln1_w"][0], p["ln1_b"][0])
        qkv = jnp.dot(xn, p["wqkv"], precision=HI)
        q, k, v = jnp.split(qkv, 3, axis=-1)

        def heads_split(t):  # (B, N, h*d) -> (B, h, N, d)
            return t.reshape(B, N, heads, dim_head).transpose(0, 2, 1, 3)

        q, k, v = map(heads_split, (q, k, v))
        dots = jnp.einsum("bhnd,bhmd->bhnm", q, k, precision=HI) * scale
        attn = jax.nn.softmax(dots, axis=-1)
        out = jnp.einsum("bhnm,bhmd->bhnd", attn, v, precision=HI)
        out = out.transpose(0, 2, 1, 3).reshape(B, N, inner)
        x = jnp.dot(out, p["wout"], precision=HI) + p["bout"][0] + x

        xn = _ref_ln(x, p["ln2_w"][0], p["ln2_b"][0])
        h1 = jnp.dot(xn, p["w1"], precision=HI) + p["b1"][0]
        h1 = jax.nn.gelu(h1, approximate=False)
        h2 = jnp.dot(h1, p["w2"], precision=HI) + p["b2"][0]
        h2 = _ref_ln(h2, p["ln3_w"][0], p["ln3_b"][0])
        ff = jnp.dot(h2, p["w3"], precision=HI) + p["b3"][0]
        x = x + ff
    return x


# --------------------------------- main -------------------------------------- #

if __name__ == "__main__":
    # Small shapes consistent with the module. dim must equal num_classes (=7)
    # for the FeedForward residual / layer stacking to be shape-consistent.
    B, N, dim = 2, 8, 7
    depth, heads, dim_head, mlp_dim = 2, 2, 4, 16

    key = jax.random.PRNGKey(0)
    kx, kp = jax.random.split(key)
    x = jax.random.normal(kx, (B, N, dim), dtype=jnp.float32)
    layers = init_params(kp, depth, dim, heads, dim_head, mlp_dim, num_classes=7)
    stacked = prepare_params(layers, heads=heads, dim_head=dim_head)

    out = transformer_forward(x, stacked)
    out = jax.block_until_ready(out)

    ref = reference_forward(x, layers, heads=heads, dim_head=dim_head)
    assert out.shape == (B, N, dim)
    assert jnp.allclose(out, ref, rtol=1e-2, atol=1e-2), (
        f"max abs err {jnp.max(jnp.abs(out - ref))}")

    print("KERNEL_OK")
</pallas_src>

<mosaic_0001>
module attributes {stable_mosaic.version = 11 : i64} {
  func.func @transformer_stack_kernel(%arg0: i32, %arg1: memref<16x7xf32, #tpu.memory_space<vmem>>, %arg2: memref<2x1x7xf32, #tpu.memory_space<vmem>>, %arg3: memref<2x1x7xf32, #tpu.memory_space<vmem>>, %arg4: memref<4x7x4xf32, #tpu.memory_space<vmem>>, %arg5: memref<4x7x4xf32, #tpu.memory_space<vmem>>, %arg6: memref<4x7x4xf32, #tpu.memory_space<vmem>>, %arg7: memref<4x4x7xf32, #tpu.memory_space<vmem>>, %arg8: memref<2x1x7xf32, #tpu.memory_space<vmem>>, %arg9: memref<2x1x7xf32, #tpu.memory_space<vmem>>, %arg10: memref<2x1x7xf32, #tpu.memory_space<vmem>>, %arg11: memref<2x7x16xf32, #tpu.memory_space<vmem>>, %arg12: memref<2x1x16xf32, #tpu.memory_space<vmem>>, %arg13: memref<2x16x7xf32, #tpu.memory_space<vmem>>, %arg14: memref<2x1x7xf32, #tpu.memory_space<vmem>>, %arg15: memref<2x1x7xf32, #tpu.memory_space<vmem>>, %arg16: memref<2x1x7xf32, #tpu.memory_space<vmem>>, %arg17: memref<2x7x7xf32, #tpu.memory_space<vmem>>, %arg18: memref<2x1x7xf32, #tpu.memory_space<vmem>>, %arg19: memref<16x7xf32, #tpu.memory_space<vmem>>) attributes {dimension_semantics = [#tpu.dimension_semantics<arbitrary>], iteration_bounds = array<i64: 1>, scalar_prefetch = 0 : i64, scratch_operands = 0 : i64, tpu.core_type = #tpu.core_type<tc>, window_params = [{pipeline_mode = #tpu.pipeline_mode<synchronous>, transform_indices = @transform_0, window_bounds = array<i64: 16, 7>}, {pipeline_mode = #tpu.pipeline_mode<synchronous>, transform_indices = @transform_1, window_bounds = array<i64: 2, 1, 7>}, {pipeline_mode = #tpu.pipeline_mode<synchronous>, transform_indices = @transform_2, window_bounds = array<i64: 2, 1, 7>}, {pipeline_mode = #tpu.pipeline_mode<synchronous>, transform_indices = @transform_3, window_bounds = array<i64: 4, 7, 4>}, {pipeline_mode = #tpu.pipeline_mode<synchronous>, transform_indices = @transform_4, window_bounds = array<i64: 4, 7, 4>}, {pipeline_mode = #tpu.pipeline_mode<synchronous>, transform_indices = @transform_5, window_bounds = array<i64: 4, 7, 4>}, {pipeline_mode = #tpu.pipeline_mode<synchronous>, transform_indices = @transform_6, window_bounds = array<i64: 4, 4, 7>}, {pipeline_mode = #tpu.pipeline_mode<synchronous>, transform_indices = @transform_7, window_bounds = array<i64: 2, 1, 7>}, {pipeline_mode = #tpu.pipeline_mode<synchronous>, transform_indices = @transform_8, window_bounds = array<i64: 2, 1, 7>}, {pipeline_mode = #tpu.pipeline_mode<synchronous>, transform_indices = @transform_9, window_bounds = array<i64: 2, 1, 7>}, {pipeline_mode = #tpu.pipeline_mode<synchronous>, transform_indices = @transform_10, window_bounds = array<i64: 2, 7, 16>}, {pipeline_mode = #tpu.pipeline_mode<synchronous>, transform_indices = @transform_11, window_bounds = array<i64: 2, 1, 16>}, {pipeline_mode = #tpu.pipeline_mode<synchronous>, transform_indices = @transform_12, window_bounds = array<i64: 2, 16, 7>}, {pipeline_mode = #tpu.pipeline_mode<synchronous>, transform_indices = @transform_13, window_bounds = array<i64: 2, 1, 7>}, {pipeline_mode = #tpu.pipeline_mode<synchronous>, transform_indices = @transform_14, window_bounds = array<i64: 2, 1, 7>}, {pipeline_mode = #tpu.pipeline_mode<synchronous>, transform_indices = @transform_15, window_bounds = array<i64: 2, 1, 7>}, {pipeline_mode = #tpu.pipeline_mode<synchronous>, transform_indices = @transform_16, window_bounds = array<i64: 2, 7, 7>}, {pipeline_mode = #tpu.pipeline_mode<synchronous>, transform_indices = @transform_17, window_bounds = array<i64: 2, 1, 7>}, {pipeline_mode = #tpu.pipeline_mode<synchronous>, transform_indices = @transform_18, window_bounds = array<i64: 16, 7>}]} {
    %c0 = arith.constant 0 : index
    %c0_0 = arith.constant 0 : index
    %0 = vector.load %arg1[%c0, %c0_0] : memref<16x7xf32, #tpu.memory_space<vmem>>, vector<16x7xf32>
    %c0_1 = arith.constant 0 : index
    %c0_2 = arith.constant 0 : index
    %c0_3 = arith.constant 0 : index
    %1 = vector.load %arg2[%c0_1, %c0_2, %c0_3] : memref<2x1x7xf32, #tpu.memory_space<vmem>>, vector<1x1x7xf32>
    %2 = vector.shape_cast %1 : vector<1x1x7xf32> to vector<1x7xf32>
    %c0_4 = arith.constant 0 : index
    %c0_5 = arith.constant 0 : index
    %c0_6 = arith.constant 0 : index
    %3 = vector.load %arg3[%c0_4, %c0_5, %c0_6] : memref<2x1x7xf32, #tpu.memory_space<vmem>>, vector<1x1x7xf32>
    %4 = vector.shape_cast %3 : vector<1x1x7xf32> to vector<1x7xf32>
    %cst = arith.constant dense<0.000000e+00> : vector<16xf32>
    %5 = vector.multi_reduction <add>, %0, %cst [1] : vector<16x7xf32> to vector<16xf32>
    %6 = vector.shape_cast %5 : vector<16xf32> to vector<16x1xf32>
    %cst_7 = arith.constant 7.000000e+00 : f32
    %7 = vector.broadcast %cst_7 : f32 to vector<16x1xf32>
    %8 = arith.divf %6, %7 : vector<16x1xf32>
    %9 = vector.broadcast %8 : vector<16x1xf32> to vector<16x7xf32>
    %10 = arith.subf %0, %9 : vector<16x7xf32>
    %11 = arith.mulf %10, %10 : vector<16x7xf32>
    %cst_8 = arith.constant dense<0.000000e+00> : vector<16xf32>
    %12 = vector.multi_reduction <add>, %11, %cst_8 [1] : vector<16x7xf32> to vector<16xf32>
    %13 = vector.shape_cast %12 : vector<16xf32> to vector<16x1xf32>
    %cst_9 = arith.constant 7.000000e+00 : f32
    %14 = vector.broadcast %cst_9 : f32 to vector<16x1xf32>
    %15 = arith.divf %13, %14 : vector<16x1xf32>
    %16 = vector.broadcast %8 : vector<16x1xf32> to vector<16x7xf32>
    %17 = arith.subf %0, %16 : vector<16x7xf32>
    %cst_10 = arith.constant 9.99999974E-6 : f32
    %18 = vector.broadcast %cst_10 : f32 to vector<16x1xf32>
    %19 = arith.addf %15, %18 : vector<16x1xf32>
    %20 = math.rsqrt %19 : vector<16x1xf32>
    %21 = vector.broadcast %20 : vector<16x1xf32> to vector<16x7xf32>
    %22 = arith.mulf %17, %21 : vector<16x7xf32>
    %23 = vector.broadcast %2 : vector<1x7xf32> to vector<16x7xf32>
    %24 = arith.mulf %22, %23 : vector<16x7xf32>
    %25 = vector.broadcast %4 : vector<1x7xf32> to vector<16x7xf32>
    %26 = arith.addf %24, %25 : vector<16x7xf32>
    %c0_11 = arith.constant 0 : index
    %c0_12 = arith.constant 0 : index
    %c0_13 = arith.constant 0 : index
    %27 = vector.load %arg4[%c0_11, %c0_12, %c0_13] : memref<4x7x4xf32, #tpu.memory_space<vmem>>, vector<1x7x4xf32>
    %28 = vector.shape_cast %27 : vector<1x7x4xf32> to vector<7x4xf32>
    %cst_14 = arith.constant dense<0.000000e+00> : vector<16x4xf32>
    %29 = tpu.matmul %26, %28, %cst_14 {dimension_numbers = #tpu.dot_dimension_numbers<[1], [0], [0], [1], [0, 0, 1, 1], [], []>} : vector<16x7xf32>, vector<7x4xf32>, vector<16x4xf32> -> vector<16x4xf32>
    %c0_15 = arith.constant 0 : index
    %c0_16 = arith.constant 0 : index
    %c0_17 = arith.constant 0 : index
    %30 = vector.load %arg5[%c0_15, %c0_16, %c0_17] : memref<4x7x4xf32, #tpu.memory_space<vmem>>, vector<1x7x4xf32>
    %31 = vector.shape_cast %30 : vector<1x7x4xf32> to vector<7x4xf32>
    %cst_18 = arith.constant dense<0.000000e+00> : vector<16x4xf32>
    %32 = tpu.matmul %26, %31, %cst_18 {dimension_numbers = #tpu.dot_dimension_numbers<[1], [0], [0], [1], [0, 0, 1, 1], [], []>} : vector<16x7xf32>, vector<7x4xf32>, vector<16x4xf32> -> vector<16x4xf32>
    %c0_19 = arith.constant 0 : index
    %c0_20 = arith.constant 0 : index
    %c0_21 = arith.constant 0 : index
    %33 = vector.load %arg6[%c0_19, %c0_20, %c0_21] : memref<4x7x4xf32, #tpu.memory_space<vmem>>, vector<1x7x4xf32>
    %34 = vector.shape_cast %33 : vector<1x7x4xf32> to vector<7x4xf32>
    %cst_22 = arith.constant dense<0.000000e+00> : vector<16x4xf32>
    %35 = tpu.matmul %26, %34, %cst_22 {dimension_numbers = #tpu.dot_dimension_numbers<[1], [0], [0], [1], [0, 0, 1, 1], [], []>} : vector<16x7xf32>, vector<7x4xf32>, vector<16x4xf32> -> vector<16x4xf32>
    %36 = vector.extract_strided_slice %29 {offsets = [0, 0], sizes = [8, 4], strides = [1, 1]} : vector<16x4xf32> to vector<8x4xf32>
    %37 = vector.extract_strided_slice %32 {offsets = [0, 0], sizes = [8, 4], strides = [1, 1]} : vector<16x4xf32> to vector<8x4xf32>
    %cst_23 = arith.constant dense<0.000000e+00> : vector<8x8xf32>
    %38 = tpu.matmul %36, %37, %cst_23 {dimension_numbers = #tpu.dot_dimension_numbers<[1], [1], [0], [0], [0, 0, 1, 0], [], []>} : vector<8x4xf32>, vector<8x4xf32>, vector<8x8xf32> -> vector<8x8xf32>
    %cst_24 = arith.constant dense<0xFF800000> : vector<8xf32>
    %39 = vector.multi_reduction <maximumf>, %38, %cst_24 [1] : vector<8x8xf32> to vector<8xf32>
    %40 = vector.shape_cast %39 : vector<8xf32> to vector<8x1xf32>
    %41 = vector.broadcast %40 : vector<8x1xf32> to vector<8x8xf32>
    %42 = arith.subf %38, %41 : vector<8x8xf32>
    %43 = math.exp %42 : vector<8x8xf32>
    %cst_25 = arith.constant dense<0.000000e+00> : vector<8xf32>
    %44 = vector.multi_reduction <add>, %43, %cst_25 [1] : vector<8x8xf32> to vector<8xf32>
    %45 = vector.shape_cast %44 : vector<8xf32> to vector<8x1xf32>
    %46 = tpu.reciprocal %45 {approx = true} : vector<8x1xf32> -> vector<8x1xf32>
    %47 = vector.broadcast %46 : vector<8x1xf32> to vector<8x8xf32>
    %48 = arith.mulf %43, %47 : vector<8x8xf32>
    %49 = vector.extract_strided_slice %35 {offsets = [0, 0], sizes = [8, 4], strides = [1, 1]} : vector<16x4xf32> to vector<8x4xf32>
    %cst_26 = arith.constant dense<0.000000e+00> : vector<8x4xf32>
    %50 = tpu.matmul %48, %49, %cst_26 {dimension_numbers = #tpu.dot_dimension_numbers<[1], [0], [0], [1], [0, 0, 1, 1], [], []>} : vector<8x8xf32>, vector<8x4xf32>, vector<8x4xf32> -> vector<8x4xf32>
    %c0_27 = arith.constant 0 : index
    %c0_28 = arith.constant 0 : index
    %c0_29 = arith.constant 0 : index
    %51 = vector.load %arg7[%c0_27, %c0_28, %c0_29] : memref<4x4x7xf32, #tpu.memory_space<vmem>>, vector<1x4x7xf32>
    %52 = vector.shape_cast %51 : vector<1x4x7xf32> to vector<4x7xf32>
    %cst_30 = arith.constant dense<0.000000e+00> : vector<8x7xf32>
    %53 = tpu.matmul %50, %52, %cst_30 {dimension_numbers = #tpu.dot_dimension_numbers<[1], [0], [0], [1], [0, 0, 1, 1], [], []>} : vector<8x4xf32>, vector<4x7xf32>, vector<8x7xf32> -> vector<8x7xf32>
    %54 = vector.extract_strided_slice %29 {offsets = [8, 0], sizes = [8, 4], strides = [1, 1]} : vector<16x4xf32> to vector<8x4xf32>
    %55 = vector.extract_strided_slice %32 {offsets = [8, 0], sizes = [8, 4], strides = [1, 1]} : vector<16x4xf32> to vector<8x4xf32>
    %cst_31 = arith.constant dense<0.000000e+00> : vector<8x8xf32>
    %56 = tpu.matmul %54, %55, %cst_31 {dimension_numbers = #tpu.dot_dimension_numbers<[1], [1], [0], [0], [0, 0, 1, 0], [], []>} : vector<8x4xf32>, vector<8x4xf32>, vector<8x8xf32> -> vector<8x8xf32>
    %cst_32 = arith.constant dense<0xFF800000> : vector<8xf32>
    %57 = vector.multi_reduction <maximumf>, %56, %cst_32 [1] : vector<8x8xf32> to vector<8xf32>
    %58 = vector.shape_cast %57 : vector<8xf32> to vector<8x1xf32>
    %59 = vector.broadcast %58 : vector<8x1xf32> to vector<8x8xf32>
    %60 = arith.subf %56, %59 : vector<8x8xf32>
    %61 = math.exp %60 : vector<8x8xf32>
    %cst_33 = arith.constant dense<0.000000e+00> : vector<8xf32>
    %62 = vector.multi_reduction <add>, %61, %cst_33 [1] : vector<8x8xf32> to vector<8xf32>
    %63 = vector.shape_cast %62 : vector<8xf32> to vector<8x1xf32>
    %64 = tpu.reciprocal %63 {approx = true} : vector<8x1xf32> -> vector<8x1xf32>
    %65 = vector.broadcast %64 : vector<8x1xf32> to vector<8x8xf32>
    %66 = arith.mulf %61, %65 : vector<8x8xf32>
    %67 = vector.extract_strided_slice %35 {offsets = [8, 0], sizes = [8, 4], strides = [1, 1]} : vector<16x4xf32> to vector<8x4xf32>
    %cst_34 = arith.constant dense<0.000000e+00> : vector<8x4xf32>
    %68 = tpu.matmul %66, %67, %cst_34 {dimension_numbers = #tpu.dot_dimension_numbers<[1], [0], [0], [1], [0, 0, 1, 1], [], []>} : vector<8x8xf32>, vector<8x4xf32>, vector<8x4xf32> -> vector<8x4xf32>
    %c0_35 = arith.constant 0 : index
    %c0_36 = arith.constant 0 : index
    %c0_37 = arith.constant 0 : index
    %69 = vector.load %arg7[%c0_35, %c0_36, %c0_37] : memref<4x4x7xf32, #tpu.memory_space<vmem>>, vector<1x4x7xf32>
    %70 = vector.shape_cast %69 : vector<1x4x7xf32> to vector<4x7xf32>
    %cst_38 = arith.constant dense<0.000000e+00> : vector<8x7xf32>
    %71 = tpu.matmul %68, %70, %cst_38 {dimension_numbers = #tpu.dot_dimension_numbers<[1], [0], [0], [1], [0, 0, 1, 1], [], []>} : vector<8x4xf32>, vector<4x7xf32>, vector<8x7xf32> -> vector<8x7xf32>
    %c1 = arith.constant 1 : index
    %c0_39 = arith.constant 0 : index
    %c0_40 = arith.constant 0 : index
    %72 = vector.load %arg4[%c1, %c0_39, %c0_40] : memref<4x7x4xf32, #tpu.memory_space<vmem>>, vector<1x7x4xf32>
    %73 = vector.shape_cast %72 : vector<1x7x4xf32> to vector<7x4xf32>
    %cst_41 = arith.constant dense<0.000000e+00> : vector<16x4xf32>
    %74 = tpu.matmul %26, %73, %cst_41 {dimension_numbers = #tpu.dot_dimension_numbers<[1], [0], [0], [1], [0, 0, 1, 1], [], []>} : vector<16x7xf32>, vector<7x4xf32>, vector<16x4xf32> -> vector<16x4xf32>
    %c1_42 = arith.constant 1 : index
    %c0_43 = arith.constant 0 : index
    %c0_44 = arith.constant 0 : index
    %75 = vector.load %arg5[%c1_42, %c0_43, %c0_44] : memref<4x7x4xf32, #tpu.memory_space<vmem>>, vector<1x7x4xf32>
    %76 = vector.shape_cast %75 : vector<1x7x4xf32> to vector<7x4xf32>
    %cst_45 = arith.constant dense<0.000000e+00> : vector<16x4xf32>
    %77 = tpu.matmul %26, %76, %cst_45 {dimension_numbers = #tpu.dot_dimension_numbers<[1], [0], [0], [1], [0, 0, 1, 1], [], []>} : vector<16x7xf32>, vector<7x4xf32>, vector<16x4xf32> -> vector<16x4xf32>
    %c1_46 = arith.constant 1 : index
    %c0_47 = arith.constant 0 : index
    %c0_48 = arith.constant 0 : index
    %78 = vector.load %arg6[%c1_46, %c0_47, %c0_48] : memref<4x7x4xf32, #tpu.memory_space<vmem>>, vector<1x7x4xf32>
    %79 = vector.shape_cast %78 : vector<1x7x4xf32> to vector<7x4xf32>
    %cst_49 = arith.constant dense<0.000000e+00> : vector<16x4xf32>
    %80 = tpu.matmul %26, %79, %cst_49 {dimension_numbers = #tpu.dot_dimension_numbers<[1], [0], [0], [1], [0, 0, 1, 1], [], []>} : vector<16x7xf32>, vector<7x4xf32>, vector<16x4xf32> -> vector<16x4xf32>
    %81 = vector.extract_strided_slice %74 {offsets = [0, 0], sizes = [8, 4], strides = [1, 1]} : vector<16x4xf32> to vector<8x4xf32>
    %82 = vector.extract_strided_slice %77 {offsets = [0, 0], sizes = [8, 4], strides = [1, 1]} : vector<16x4xf32> to vector<8x4xf32>
    %cst_50 = arith.constant dense<0.000000e+00> : vector<8x8xf32>
    %83 = tpu.matmul %81, %82, %cst_50 {dimension_numbers = #tpu.dot_dimension_numbers<[1], [1], [0], [0], [0, 0, 1, 0], [], []>} : vector<8x4xf32>, vector<8x4xf32>, vector<8x8xf32> -> vector<8x8xf32>
    %cst_51 = arith.constant dense<0xFF800000> : vector<8xf32>
    %84 = vector.multi_reduction <maximumf>, %83, %cst_51 [1] : vector<8x8xf32> to vector<8xf32>
    %85 = vector.shape_cast %84 : vector<8xf32> to vector<8x1xf32>
    %86 = vector.broadcast %85 : vector<8x1xf32> to vector<8x8xf32>
    %87 = arith.subf %83, %86 : vector<8x8xf32>
    %88 = math.exp %87 : vector<8x8xf32>
    %cst_52 = arith.constant dense<0.000000e+00> : vector<8xf32>
    %89 = vector.multi_reduction <add>, %88, %cst_52 [1] : vector<8x8xf32> to vector<8xf32>
    %90 = vector.shape_cast %89 : vector<8xf32> to vector<8x1xf32>
    %91 = tpu.reciprocal %90 {approx = true} : vector<8x1xf32> -> vector<8x1xf32>
    %92 = vector.broadcast %91 : vector<8x1xf32> to vector<8x8xf32>
    %93 = arith.mulf %88, %92 : vector<8x8xf32>
    %94 = vector.extract_strided_slice %80 {offsets = [0, 0], sizes = [8, 4], strides = [1, 1]} : vector<16x4xf32> to vector<8x4xf32>
    %cst_53 = arith.constant dense<0.000000e+00> : vector<8x4xf32>
    %95 = tpu.matmul %93, %94, %cst_53 {dimension_numbers = #tpu.dot_dimension_numbers<[1], [0], [0], [1], [0, 0, 1, 1], [], []>} : vector<8x8xf32>, vector<8x4xf32>, vector<8x4xf32> -> vector<8x4xf32>
    %c1_54 = arith.constant 1 : index
    %c0_55 = arith.constant 0 : index
    %c0_56 = arith.constant 0 : index
    %96 = vector.load %arg7[%c1_54, %c0_55, %c0_56] : memref<4x4x7xf32, #tpu.memory_space<vmem>>, vector<1x4x7xf32>
    %97 = vector.shape_cast %96 : vector<1x4x7xf32> to vector<4x7xf32>
    %cst_57 = arith.constant dense<0.000000e+00> : vector<8x7xf32>
    %98 = tpu.matmul %95, %97, %cst_57 {dimension_numbers = #tpu.dot_dimension_numbers<[1], [0], [0], [1], [0, 0, 1, 1], [], []>} : vector<8x4xf32>, vector<4x7xf32>, vector<8x7xf32> -> vector<8x7xf32>
    %99 = arith.addf %53, %98 : vector<8x7xf32>
    %100 = vector.extract_strided_slice %74 {offsets = [8, 0], sizes = [8, 4], strides = [1, 1]} : vector<16x4xf32> to vector<8x4xf32>
    %101 = vector.extract_strided_slice %77 {offsets = [8, 0], sizes = [8, 4], strides = [1, 1]} : vector<16x4xf32> to vector<8x4xf32>
    %cst_58 = arith.constant dense<0.000000e+00> : vector<8x8xf32>
    %102 = tpu.matmul %100, %101, %cst_58 {dimension_numbers = #tpu.dot_dimension_numbers<[1], [1], [0], [0], [0, 0, 1, 0], [], []>} : vector<8x4xf32>, vector<8x4xf32>, vector<8x8xf32> -> vector<8x8xf32>
    %cst_59 = arith.constant dense<0xFF800000> : vector<8xf32>
    %103 = vector.multi_reduction <maximumf>, %102, %cst_59 [1] : vector<8x8xf32> to vector<8xf32>
    %104 = vector.shape_cast %103 : vector<8xf32> to vector<8x1xf32>
    %105 = vector.broadcast %104 : vector<8x1xf32> to vector<8x8xf32>
    %106 = arith.subf %102, %105 : vector<8x8xf32>
    %107 = math.exp %106 : vector<8x8xf32>
    %cst_60 = arith.constant dense<0.000000e+00> : vector<8xf32>
    %108 = vector.multi_reduction <add>, %107, %cst_60 [1] : vector<8x8xf32> to vector<8xf32>
    %109 = vector.shape_cast %108 : vector<8xf32> to vector<8x1xf32>
    %110 = tpu.reciprocal %109 {approx = true} : vector<8x1xf32> -> vector<8x1xf32>
    %111 = vector.broadcast %110 : vector<8x1xf32> to vector<8x8xf32>
    %112 = arith.mulf %107, %111 : vector<8x8xf32>
    %113 = vector.extract_strided_slice %80 {offsets = [8, 0], sizes = [8, 4], strides = [1, 1]} : vector<16x4xf32> to vector<8x4xf32>
    %cst_61 = arith.constant dense<0.000000e+00> : vector<8x4xf32>
    %114 = tpu.matmul %112, %113, %cst_61 {dimension_numbers = #tpu.dot_dimension_numbers<[1], [0], [0], [1], [0, 0, 1, 1], [], []>} : vector<8x8xf32>, vector<8x4xf32>, vector<8x4xf32> -> vector<8x4xf32>
    %c1_62 = arith.constant 1 : index
    %c0_63 = arith.constant 0 : index
    %c0_64 = arith.constant 0 : index
    %115 = vector.load %arg7[%c1_62, %c0_63, %c0_64] : memref<4x4x7xf32, #tpu.memory_space<vmem>>, vector<1x4x7xf32>
    %116 = vector.shape_cast %115 : vector<1x4x7xf32> to vector<4x7xf32>
    %cst_65 = arith.constant dense<0.000000e+00> : vector<8x7xf32>
    %117 = tpu.matmul %114, %116, %cst_65 {dimension_numbers = #tpu.dot_dimension_numbers<[1], [0], [0], [1], [0, 0, 1, 1], [], []>} : vector<8x4xf32>, vector<4x7xf32>, vector<8x7xf32> -> vector<8x7xf32>
    %118 = arith.addf %71, %117 : vector<8x7xf32>
    %119 = tpu.concatenate %99, %118 in 0 : vector<8x7xf32>, vector<8x7xf32> -> vector<16x7xf32>
    %c0_66 = arith.constant 0 : index
    %c0_67 = arith.constant 0 : index
    %c0_68 = arith.constant 0 : index
    %120 = vector.load %arg8[%c0_66, %c0_67, %c0_68] : memref<2x1x7xf32, #tpu.memory_space<vmem>>, vector<1x1x7xf32>
    %121 = vector.shape_cast %120 : vector<1x1x7xf32> to vector<1x7xf32>
    %122 = vector.broadcast %121 : vector<1x7xf32> to vector<16x7xf32>
    %123 = arith.addf %119, %122 : vector<16x7xf32>
    %124 = arith.addf %0, %123 : vector<16x7xf32>
    %c0_69 = arith.constant 0 : index
    %c0_70 = arith.constant 0 : index
    %c0_71 = arith.constant 0 : index
    %125 = vector.load %arg9[%c0_69, %c0_70, %c0_71] : memref<2x1x7xf32, #tpu.memory_space<vmem>>, vector<1x1x7xf32>
    %126 = vector.shape_cast %125 : vector<1x1x7xf32> to vector<1x7xf32>
    %c0_72 = arith.constant 0 : index
    %c0_73 = arith.constant 0 : index
    %c0_74 = arith.constant 0 : index
    %127 = vector.load %arg10[%c0_72, %c0_73, %c0_74] : memref<2x1x7xf32, #tpu.memory_space<vmem>>, vector<1x1x7xf32>
    %128 = vector.shape_cast %127 : vector<1x1x7xf32> to vector<1x7xf32>
    %cst_75 = arith.constant dense<0.000000e+00> : vector<16xf32>
    %129 = vector.multi_reduction <add>, %124, %cst_75 [1] : vector<16x7xf32> to vector<16xf32>
    %130 = vector.shape_cast %129 : vector<16xf32> to vector<16x1xf32>
    %cst_76 = arith.constant 7.000000e+00 : f32
    %131 = vector.broadcast %cst_76 : f32 to vector<16x1xf32>
    %132 = arith.divf %130, %131 : vector<16x1xf32>
    %133 = vector.broadcast %132 : vector<16x1xf32> to vector<16x7xf32>
    %134 = arith.subf %124, %133 : vector<16x7xf32>
    %135 = arith.mulf %134, %134 : vector<16x7xf32>
    %cst_77 = arith.constant dense<0.000000e+00> : vector<16xf32>
    %136 = vector.multi_reduction <add>, %135, %cst_77 [1] : vector<16x7xf32> to vector<16xf32>
    %137 = vector.shape_cast %136 : vector<16xf32> to vector<16x1xf32>
    %cst_78 = arith.constant 7.000000e+00 : f32
    %138 = vector.broadcast %cst_78 : f32 to vector<16x1xf32>
    %139 = arith.divf %137, %138 : vector<16x1xf32>
    %140 = vector.broadcast %132 : vector<16x1xf32> to vector<16x7xf32>
    %141 = arith.subf %124, %140 : vector<16x7xf32>
    %cst_79 = arith.constant 9.99999974E-6 : f32
    %142 = vector.broadcast %cst_79 : f32 to vector<16x1xf32>
    %143 = arith.addf %139, %142 : vector<16x1xf32>
    %144 = math.rsqrt %143 : vector<16x1xf32>
    %145 = vector.broadcast %144 : vector<16x1xf32> to vector<16x7xf32>
    %146 = arith.mulf %141, %145 : vector<16x7xf32>
    %147 = vector.broadcast %126 : vector<1x7xf32> to vector<16x7xf32>
    %148 = arith.mulf %146, %147 : vector<16x7xf32>
    %149 = vector.broadcast %128 : vector<1x7xf32> to vector<16x7xf32>
    %150 = arith.addf %148, %149 : vector<16x7xf32>
    %c0_80 = arith.constant 0 : index
    %c0_81 = arith.constant 0 : index
    %c0_82 = arith.constant 0 : index
    %151 = vector.load %arg11[%c0_80, %c0_81, %c0_82] : memref<2x7x16xf32, #tpu.memory_space<vmem>>, vector<1x7x16xf32>
    %152 = vector.shape_cast %151 : vector<1x7x16xf32> to vector<7x16xf32>
    %cst_83 = arith.constant dense<0.000000e+00> : vector<16x16xf32>
    %153 = tpu.matmul %150, %152, %cst_83 {dimension_numbers = #tpu.dot_dimension_numbers<[1], [0], [0], [1], [0, 0, 1, 1], [], []>} : vector<16x7xf32>, vector<7x16xf32>, vector<16x16xf32> -> vector<16x16xf32>
    %c0_84 = arith.constant 0 : index
    %c0_85 = arith.constant 0 : index
    %c0_86 = arith.constant 0 : index
    %154 = vector.load %arg12[%c0_84, %c0_85, %c0_86] : memref<2x1x16xf32, #tpu.memory_space<vmem>>, vector<1x1x16xf32>
    %155 = vector.shape_cast %154 : vector<1x1x16xf32> to vector<1x16xf32>
    %156 = vector.broadcast %155 : vector<1x16xf32> to vector<16x16xf32>
    %157 = arith.addf %153, %156 : vector<16x16xf32>
    %cst_87 = arith.constant 5.000000e-01 : f32
    %158 = vector.broadcast %cst_87 : f32 to vector<16x16xf32>
    %159 = arith.mulf %158, %157 : vector<16x16xf32>
    %cst_88 = arith.constant 0.707106769 : f32
    %160 = vector.broadcast %cst_88 : f32 to vector<16x16xf32>
    %161 = arith.mulf %157, %160 : vector<16x16xf32>
    %162 = math.erf %161 : vector<16x16xf32>
    %cst_89 = arith.constant 1.000000e+00 : f32
    %163 = vector.broadcast %cst_89 : f32 to vector<16x16xf32>
    %164 = arith.addf %163, %162 : vector<16x16xf32>
    %165 = arith.mulf %159, %164 : vector<16x16xf32>
    %c0_90 = arith.constant 0 : index
    %c0_91 = arith.constant 0 : index
    %c0_92 = arith.constant 0 : index
    %166 = vector.load %arg13[%c0_90, %c0_91, %c0_92] : memref<2x16x7xf32, #tpu.memory_space<vmem>>, vector<1x16x7xf32>
    %167 = vector.shape_cast %166 : vector<1x16x7xf32> to vector<16x7xf32>
    %cst_93 = arith.constant dense<0.000000e+00> : vector<16x7xf32>
    %168 = tpu.matmul %165, %167, %cst_93 {dimension_numbers = #tpu.dot_dimension_numbers<[1], [0], [0], [1], [0, 0, 1, 1], [], []>} : vector<16x16xf32>, vector<16x7xf32>, vector<16x7xf32> -> vector<16x7xf32>
    %c0_94 = arith.constant 0 : index
    %c0_95 = arith.constant 0 : index
    %c0_96 = arith.constant 0 : index
    %169 = vector.load %arg14[%c0_94, %c0_95, %c0_96] : memref<2x1x7xf32, #tpu.memory_space<vmem>>, vector<1x1x7xf32>
    %170 = vector.shape_cast %169 : vector<1x1x7xf32> to vector<1x7xf32>
    %171 = vector.broadcast %170 : vector<1x7xf32> to vector<16x7xf32>
    %172 = arith.addf %168, %171 : vector<16x7xf32>
    %c0_97 = arith.constant 0 : index
    %c0_98 = arith.constant 0 : index
    %c0_99 = arith.constant 0 : index
    %173 = vector.load %arg15[%c0_97, %c0_98, %c0_99] : memref<2x1x7xf32, #tpu.memory_space<vmem>>, vector<1x1x7xf32>
    %174 = vector.shape_cast %173 : vector<1x1x7xf32> to vector<1x7xf32>
    %c0_100 = arith.constant 0 : index
    %c0_101 = arith.constant 0 : index
    %c0_102 = arith.constant 0 : index
    %175 = vector.load %arg16[%c0_100, %c0_101, %c0_102] : memref<2x1x7xf32, #tpu.memory_space<vmem>>, vector<1x1x7xf32>
    %176 = vector.shape_cast %175 : vector<1x1x7xf32> to vector<1x7xf32>
    %cst_103 = arith.constant dense<0.000000e+00> : vector<16xf32>
    %177 = vector.multi_reduction <add>, %172, %cst_103 [1] : vector<16x7xf32> to vector<16xf32>
    %178 = vector.shape_cast %177 : vector<16xf32> to vector<16x1xf32>
    %cst_104 = arith.constant 7.000000e+00 : f32
    %179 = vector.broadcast %cst_104 : f32 to vector<16x1xf32>
    %180 = arith.divf %178, %179 : vector<16x1xf32>
    %181 = vector.broadcast %180 : vector<16x1xf32> to vector<16x7xf32>
    %182 = arith.subf %172, %181 : vector<16x7xf32>
    %183 = arith.mulf %182, %182 : vector<16x7xf32>
    %cst_105 = arith.constant dense<0.000000e+00> : vector<16xf32>
    %184 = vector.multi_reduction <add>, %183, %cst_105 [1] : vector<16x7xf32> to vector<16xf32>
    %185 = vector.shape_cast %184 : vector<16xf32> to vector<16x1xf32>
    %cst_106 = arith.constant 7.000000e+00 : f32
    %186 = vector.broadcast %cst_106 : f32 to vector<16x1xf32>
    %187 = arith.divf %185, %186 : vector<16x1xf32>
    %188 = vector.broadcast %180 : vector<16x1xf32> to vector<16x7xf32>
    %189 = arith.subf %172, %188 : vector<16x7xf32>
    %cst_107 = arith.constant 9.99999974E-6 : f32
    %190 = vector.broadcast %cst_107 : f32 to vector<16x1xf32>
    %191 = arith.addf %187, %190 : vector<16x1xf32>
    %192 = math.rsqrt %191 : vector<16x1xf32>
    %193 = vector.broadcast %192 : vector<16x1xf32> to vector<16x7xf32>
    %194 = arith.mulf %189, %193 : vector<16x7xf32>
    %195 = vector.broadcast %174 : vector<1x7xf32> to vector<16x7xf32>
    %196 = arith.mulf %194, %195 : vector<16x7xf32>
    %197 = vector.broadcast %176 : vector<1x7xf32> to vector<16x7xf32>
    %198 = arith.addf %196, %197 : vector<16x7xf32>
    %c0_108 = arith.constant 0 : index
    %c0_109 = arith.constant 0 : index
    %c0_110 = arith.constant 0 : index
    %199 = vector.load %arg17[%c0_108, %c0_109, %c0_110] : memref<2x7x7xf32, #tpu.memory_space<vmem>>, vector<1x7x7xf32>
    %200 = vector.shape_cast %199 : vector<1x7x7xf32> to vector<7x7xf32>
    %cst_111 = arith.constant dense<0.000000e+00> : vector<16x7xf32>
    %201 = tpu.matmul %198, %200, %cst_111 {dimension_numbers = #tpu.dot_dimension_numbers<[1], [0], [0], [1], [0, 0, 1, 1], [], []>} : vector<16x7xf32>, vector<7x7xf32>, vector<16x7xf32> -> vector<16x7xf32>
    %c0_112 = arith.constant 0 : index
    %c0_113 = arith.constant 0 : index
    %c0_114 = arith.constant 0 : index
    %202 = vector.load %arg18[%c0_112, %c0_113, %c0_114] : memref<2x1x7xf32, #tpu.memory_space<vmem>>, vector<1x1x7xf32>
    %203 = vector.shape_cast %202 : vector<1x1x7xf32> to vector<1x7xf32>
    %204 = vector.broadcast %203 : vector<1x7xf32> to vector<16x7xf32>
    %205 = arith.addf %201, %204 : vector<16x7xf32>
    %206 = arith.addf %124, %205 : vector<16x7xf32>
    %c1_115 = arith.constant 1 : index
    %c0_116 = arith.constant 0 : index
    %c0_117 = arith.constant 0 : index
    %207 = vector.load %arg2[%c1_115, %c0_116, %c0_117] : memref<2x1x7xf32, #tpu.memory_space<vmem>>, vector<1x1x7xf32>
    %208 = vector.shape_cast %207 : vector<1x1x7xf32> to vector<1x7xf32>
    %c1_118 = arith.constant 1 : index
    %c0_119 = arith.constant 0 : index
    %c0_120 = arith.constant 0 : index
    %209 = vector.load %arg3[%c1_118, %c0_119, %c0_120] : memref<2x1x7xf32, #tpu.memory_space<vmem>>, vector<1x1x7xf32>
    %210 = vector.shape_cast %209 : vector<1x1x7xf32> to vector<1x7xf32>
    %cst_121 = arith.constant dense<0.000000e+00> : vector<16xf32>
    %211 = vector.multi_reduction <add>, %206, %cst_121 [1] : vector<16x7xf32> to vector<16xf32>
    %212 = vector.shape_cast %211 : vector<16xf32> to vector<16x1xf32>
    %cst_122 = arith.constant 7.000000e+00 : f32
    %213 = vector.broadcast %cst_122 : f32 to vector<16x1xf32>
    %214 = arith.divf %212, %213 : vector<16x1xf32>
    %215 = vector.broadcast %214 : vector<16x1xf32> to vector<16x7xf32>
    %216 = arith.subf %206, %215 : vector<16x7xf32>
    %217 = arith.mulf %216, %216 : vector<16x7xf32>
    %cst_123 = arith.constant dense<0.000000e+00> : vector<16xf32>
    %218 = vector.multi_reduction <add>, %217, %cst_123 [1] : vector<16x7xf32> to vector<16xf32>
    %219 = vector.shape_cast %218 : vector<16xf32> to vector<16x1xf32>
    %cst_124 = arith.constant 7.000000e+00 : f32
    %220 = vector.broadcast %cst_124 : f32 to vector<16x1xf32>
    %221 = arith.divf %219, %220 : vector<16x1xf32>
    %222 = vector.broadcast %214 : vector<16x1xf32> to vector<16x7xf32>
    %223 = arith.subf %206, %222 : vector<16x7xf32>
    %cst_125 = arith.constant 9.99999974E-6 : f32
    %224 = vector.broadcast %cst_125 : f32 to vector<16x1xf32>
    %225 = arith.addf %221, %224 : vector<16x1xf32>
    %226 = math.rsqrt %225 : vector<16x1xf32>
    %227 = vector.broadcast %226 : vector<16x1xf32> to vector<16x7xf32>
    %228 = arith.mulf %223, %227 : vector<16x7xf32>
    %229 = vector.broadcast %208 : vector<1x7xf32> to vector<16x7xf32>
    %230 = arith.mulf %228, %229 : vector<16x7xf32>
    %231 = vector.broadcast %210 : vector<1x7xf32> to vector<16x7xf32>
    %232 = arith.addf %230, %231 : vector<16x7xf32>
    %c2 = arith.constant 2 : index
    %c0_126 = arith.constant 0 : index
    %c0_127 = arith.constant 0 : index
    %233 = vector.load %arg4[%c2, %c0_126, %c0_127] : memref<4x7x4xf32, #tpu.memory_space<vmem>>, vector<1x7x4xf32>
    %234 = vector.shape_cast %233 : vector<1x7x4xf32> to vector<7x4xf32>
    %cst_128 = arith.constant dense<0.000000e+00> : vector<16x4xf32>
    %235 = tpu.matmul %232, %234, %cst_128 {dimension_numbers = #tpu.dot_dimension_numbers<[1], [0], [0], [1], [0, 0, 1, 1], [], []>} : vector<16x7xf32>, vector<7x4xf32>, vector<16x4xf32> -> vector<16x4xf32>
    %c2_129 = arith.constant 2 : index
    %c0_130 = arith.constant 0 : index
    %c0_131 = arith.constant 0 : index
    %236 = vector.load %arg5[%c2_129, %c0_130, %c0_131] : memref<4x7x4xf32, #tpu.memory_space<vmem>>, vector<1x7x4xf32>
    %237 = vector.shape_cast %236 : vector<1x7x4xf32> to vector<7x4xf32>
    %cst_132 = arith.constant dense<0.000000e+00> : vector<16x4xf32>
    %238 = tpu.matmul %232, %237, %cst_132 {dimension_numbers = #tpu.dot_dimension_numbers<[1], [0], [0], [1], [0, 0, 1, 1], [], []>} : vector<16x7xf32>, vector<7x4xf32>, vector<16x4xf32> -> vector<16x4xf32>
    %c2_133 = arith.constant 2 : index
    %c0_134 = arith.constant 0 : index
    %c0_135 = arith.constant 0 : index
    %239 = vector.load %arg6[%c2_133, %c0_134, %c0_135] : memref<4x7x4xf32, #tpu.memory_space<vmem>>, vector<1x7x4xf32>
    %240 = vector.shape_cast %239 : vector<1x7x4xf32> to vector<7x4xf32>
    %cst_136 = arith.constant dense<0.000000e+00> : vector<16x4xf32>
    %241 = tpu.matmul %232, %240, %cst_136 {dimension_numbers = #tpu.dot_dimension_numbers<[1], [0], [0], [1], [0, 0, 1, 1], [], []>} : vector<16x7xf32>, vector<7x4xf32>, vector<16x4xf32> -> vector<16x4xf32>
    %242 = vector.extract_strided_slice %235 {offsets = [0, 0], sizes = [8, 4], strides = [1, 1]} : vector<16x4xf32> to vector<8x4xf32>
    %243 = vector.extract_strided_slice %238 {offsets = [0, 0], sizes = [8, 4], strides = [1, 1]} : vector<16x4xf32> to vector<8x4xf32>
    %cst_137 = arith.constant dense<0.000000e+00> : vector<8x8xf32>
    %244 = tpu.matmul %242, %243, %cst_137 {dimension_numbers = #tpu.dot_dimension_numbers<[1], [1], [0], [0], [0, 0, 1, 0], [], []>} : vector<8x4xf32>, vector<8x4xf32>, vector<8x8xf32> -> vector<8x8xf32>
    %cst_138 = arith.constant dense<0xFF800000> : vector<8xf32>
    %245 = vector.multi_reduction <maximumf>, %244, %cst_138 [1] : vector<8x8xf32> to vector<8xf32>
    %246 = vector.shape_cast %245 : vector<8xf32> to vector<8x1xf32>
    %247 = vector.broadcast %246 : vector<8x1xf32> to vector<8x8xf32>
    %248 = arith.subf %244, %247 : vector<8x8xf32>
    %249 = math.exp %248 : vector<8x8xf32>
    %cst_139 = arith.constant dense<0.000000e+00> : vector<8xf32>
    %250 = vector.multi_reduction <add>, %249, %cst_139 [1] : vector<8x8xf32> to vector<8xf32>
    %251 = vector.shape_cast %250 : vector<8xf32> to vector<8x1xf32>
    %252 = tpu.reciprocal %251 {approx = true} : vector<8x1xf32> -> vector<8x1xf32>
    %253 = vector.broadcast %252 : vector<8x1xf32> to vector<8x8xf32>
    %254 = arith.mulf %249, %253 : vector<8x8xf32>
    %255 = vector.extract_strided_slice %241 {offsets = [0, 0], sizes = [8, 4], strides = [1, 1]} : vector<16x4xf32> to vector<8x4xf32>
    %cst_140 = arith.constant dense<0.000000e+00> : vector<8x4xf32>
    %256 = tpu.matmul %254, %255, %cst_140 {dimension_numbers = #tpu.dot_dimension_numbers<[1], [0], [0], [1], [0, 0, 1, 1], [], []>} : vector<8x8xf32>, vector<8x4xf32>, vector<8x4xf32> -> vector<8x4xf32>
    %c2_141 = arith.constant 2 : index
    %c0_142 = arith.constant 0 : index
    %c0_143 = arith.constant 0 : index
    %257 = vector.load %arg7[%c2_141, %c0_142, %c0_143] : memref<4x4x7xf32, #tpu.memory_space<vmem>>, vector<1x4x7xf32>
    %258 = vector.shape_cast %257 : vector<1x4x7xf32> to vector<4x7xf32>
    %cst_144 = arith.constant dense<0.000000e+00> : vector<8x7xf32>
    %259 = tpu.matmul %256, %258, %cst_144 {dimension_numbers = #tpu.dot_dimension_numbers<[1], [0], [0], [1], [0, 0, 1, 1], [], []>} : vector<8x4xf32>, vector<4x7xf32>, vector<8x7xf32> -> vector<8x7xf32>
    %260 = vector.extract_strided_slice %235 {offsets = [8, 0], sizes = [8, 4], strides = [1, 1]} : vector<16x4xf32> to vector<8x4xf32>
    %261 = vector.extract_strided_slice %238 {offsets = [8, 0], sizes = [8, 4], strides = [1, 1]} : vector<16x4xf32> to vector<8x4xf32>
    %cst_145 = arith.constant dense<0.000000e+00> : vector<8x8xf32>
    %262 = tpu.matmul %260, %261, %cst_145 {dimension_numbers = #tpu.dot_dimension_numbers<[1], [1], [0], [0], [0, 0, 1, 0], [], []>} : vector<8x4xf32>, vector<8x4xf32>, vector<8x8xf32> -> vector<8x8xf32>
    %cst_146 = arith.constant dense<0xFF800000> : vector<8xf32>
    %263 = vector.multi_reduction <maximumf>, %262, %cst_146 [1] : vector<8x8xf32> to vector<8xf32>
    %264 = vector.shape_cast %263 : vector<8xf32> to vector<8x1xf32>
    %265 = vector.broadcast %264 : vector<8x1xf32> to vector<8x8xf32>
    %266 = arith.subf %262, %265 : vector<8x8xf32>
    %267 = math.exp %266 : vector<8x8xf32>
    %cst_147 = arith.constant dense<0.000000e+00> : vector<8xf32>
    %268 = vector.multi_reduction <add>, %267, %cst_147 [1] : vector<8x8xf32> to vector<8xf32>
    %269 = vector.shape_cast %268 : vector<8xf32> to vector<8x1xf32>
    %270 = tpu.reciprocal %269 {approx = true} : vector<8x1xf32> -> vector<8x1xf32>
    %271 = vector.broadcast %270 : vector<8x1xf32> to vector<8x8xf32>
    %272 = arith.mulf %267, %271 : vector<8x8xf32>
    %273 = vector.extract_strided_slice %241 {offsets = [8, 0], sizes = [8, 4], strides = [1, 1]} : vector<16x4xf32> to vector<8x4xf32>
    %cst_148 = arith.constant dense<0.000000e+00> : vector<8x4xf32>
    %274 = tpu.matmul %272, %273, %cst_148 {dimension_numbers = #tpu.dot_dimension_numbers<[1], [0], [0], [1], [0, 0, 1, 1], [], []>} : vector<8x8xf32>, vector<8x4xf32>, vector<8x4xf32> -> vector<8x4xf32>
    %c2_149 = arith.constant 2 : index
    %c0_150 = arith.constant 0 : index
    %c0_151 = arith.constant 0 : index
    %275 = vector.load %arg7[%c2_149, %c0_150, %c0_151] : memref<4x4x7xf32, #tpu.memory_space<vmem>>, vector<1x4x7xf32>
    %276 = vector.shape_cast %275 : vector<1x4x7xf32> to vector<4x7xf32>
    %cst_152 = arith.constant dense<0.000000e+00> : vector<8x7xf32>
    %277 = tpu.matmul %274, %276, %cst_152 {dimension_numbers = #tpu.dot_dimension_numbers<[1], [0], [0], [1], [0, 0, 1, 1], [], []>} : vector<8x4xf32>, vector<4x7xf32>, vector<8x7xf32> -> vector<8x7xf32>
    %c3 = arith.constant 3 : index
    %c0_153 = arith.constant 0 : index
    %c0_154 = arith.constant 0 : index
    %278 = vector.load %arg4[%c3, %c0_153, %c0_154] : memref<4x7x4xf32, #tpu.memory_space<vmem>>, vector<1x7x4xf32>
    %279 = vector.shape_cast %278 : vector<1x7x4xf32> to vector<7x4xf32>
    %cst_155 = arith.constant dense<0.000000e+00> : vector<16x4xf32>
    %280 = tpu.matmul %232, %279, %cst_155 {dimension_numbers = #tpu.dot_dimension_numbers<[1], [0], [0], [1], [0, 0, 1, 1], [], []>} : vector<16x7xf32>, vector<7x4xf32>, vector<16x4xf32> -> vector<16x4xf32>
    %c3_156 = arith.constant 3 : index
    %c0_157 = arith.constant 0 : index
    %c0_158 = arith.constant 0 : index
    %281 = vector.load %arg5[%c3_156, %c0_157, %c0_158] : memref<4x7x4xf32, #tpu.memory_space<vmem>>, vector<1x7x4xf32>
    %282 = vector.shape_cast %281 : vector<1x7x4xf32> to vector<7x4xf32>
    %cst_159 = arith.constant dense<0.000000e+00> : vector<16x4xf32>
    %283 = tpu.matmul %232, %282, %cst_159 {dimension_numbers = #tpu.dot_dimension_numbers<[1], [0], [0], [1], [0, 0, 1, 1], [], []>} : vector<16x7xf32>, vector<7x4xf32>, vector<16x4xf32> -> vector<16x4xf32>
    %c3_160 = arith.constant 3 : index
    %c0_161 = arith.constant 0 : index
    %c0_162 = arith.constant 0 : index
    %284 = vector.load %arg6[%c3_160, %c0_161, %c0_162] : memref<4x7x4xf32, #tpu.memory_space<vmem>>, vector<1x7x4xf32>
    %285 = vector.shape_cast %284 : vector<1x7x4xf32> to vector<7x4xf32>
    %cst_163 = arith.constant dense<0.000000e+00> : vector<16x4xf32>
    %286 = tpu.matmul %232, %285, %cst_163 {dimension_numbers = #tpu.dot_dimension_numbers<[1], [0], [0], [1], [0, 0, 1, 1], [], []>} : vector<16x7xf32>, vector<7x4xf32>, vector<16x4xf32> -> vector<16x4xf32>
    %287 = vector.extract_strided_slice %280 {offsets = [0, 0], sizes = [8, 4], strides = [1, 1]} : vector<16x4xf32> to vector<8x4xf32>
    %288 = vector.extract_strided_slice %283 {offsets = [0, 0], sizes = [8, 4], strides = [1, 1]} : vector<16x4xf32> to vector<8x4xf32>
    %cst_164 = arith.constant dense<0.000000e+00> : vector<8x8xf32>
    %289 = tpu.matmul %287, %288, %cst_164 {dimension_numbers = #tpu.dot_dimension_numbers<[1], [1], [0], [0], [0, 0, 1, 0], [], []>} : vector<8x4xf32>, vector<8x4xf32>, vector<8x8xf32> -> vector<8x8xf32>
    %cst_165 = arith.constant dense<0xFF800000> : vector<8xf32>
    %290 = vector.multi_reduction <maximumf>, %289, %cst_165 [1] : vector<8x8xf32> to vector<8xf32>
    %291 = vector.shape_cast %290 : vector<8xf32> to vector<8x1xf32>
    %292 = vector.broadcast %291 : vector<8x1xf32> to vector<8x8xf32>
    %293 = arith.subf %289, %292 : vector<8x8xf32>
    %294 = math.exp %293 : vector<8x8xf32>
    %cst_166 = arith.constant dense<0.000000e+00> : vector<8xf32>
    %295 = vector.multi_reduction <add>, %294, %cst_166 [1] : vector<8x8xf32> to vector<8xf32>
    %296 = vector.shape_cast %295 : vector<8xf32> to vector<8x1xf32>
    %297 = tpu.reciprocal %296 {approx = true} : vector<8x1xf32> -> vector<8x1xf32>
    %298 = vector.broadcast %297 : vector<8x1xf32> to vector<8x8xf32>
    %299 = arith.mulf %294, %298 : vector<8x8xf32>
    %300 = vector.extract_strided_slice %286 {offsets = [0, 0], sizes = [8, 4], strides = [1, 1]} : vector<16x4xf32> to vector<8x4xf32>
    %cst_167 = arith.constant dense<0.000000e+00> : vector<8x4xf32>
    %301 = tpu.matmul %299, %300, %cst_167 {dimension_numbers = #tpu.dot_dimension_numbers<[1], [0], [0], [1], [0, 0, 1, 1], [], []>} : vector<8x8xf32>, vector<8x4xf32>, vector<8x4xf32> -> vector<8x4xf32>
    %c3_168 = arith.constant 3 : index
    %c0_169 = arith.constant 0 : index
    %c0_170 = arith.constant 0 : index
    %302 = vector.load %arg7[%c3_168, %c0_169, %c0_170] : memref<4x4x7xf32, #tpu.memory_space<vmem>>, vector<1x4x7xf32>
    %303 = vector.shape_cast %302 : vector<1x4x7xf32> to vector<4x7xf32>
    %cst_171 = arith.constant dense<0.000000e+00> : vector<8x7xf32>
    %304 = tpu.matmul %301, %303, %cst_171 {dimension_numbers = #tpu.dot_dimension_numbers<[1], [0], [0], [1], [0, 0, 1, 1], [], []>} : vector<8x4xf32>, vector<4x7xf32>, vector<8x7xf32> -> vector<8x7xf32>
    %305 = arith.addf %259, %304 : vector<8x7xf32>
    %306 = vector.extract_strided_slice %280 {offsets = [8, 0], sizes = [8, 4], strides = [1, 1]} : vector<16x4xf32> to vector<8x4xf32>
    %307 = vector.extract_strided_slice %283 {offsets = [8, 0], sizes = [8, 4], strides = [1, 1]} : vector<16x4xf32> to vector<8x4xf32>
    %cst_172 = arith.constant dense<0.000000e+00> : vector<8x8xf32>
    %308 = tpu.matmul %306, %307, %cst_172 {dimension_numbers = #tpu.dot_dimension_numbers<[1], [1], [0], [0], [0, 0, 1, 0], [], []>} : vector<8x4xf32>, vector<8x4xf32>, vector<8x8xf32> -> vector<8x8xf32>
    %cst_173 = arith.constant dense<0xFF800000> : vector<8xf32>
    %309 = vector.multi_reduction <maximumf>, %308, %cst_173 [1] : vector<8x8xf32> to vector<8xf32>
    %310 = vector.shape_cast %309 : vector<8xf32> to vector<8x1xf32>
    %311 = vector.broadcast %310 : vector<8x1xf32> to vector<8x8xf32>
    %312 = arith.subf %308, %311 : vector<8x8xf32>
    %313 = math.exp %312 : vector<8x8xf32>
    %cst_174 = arith.constant dense<0.000000e+00> : vector<8xf32>
    %314 = vector.multi_reduction <add>, %313, %cst_174 [1] : vector<8x8xf32> to vector<8xf32>
    %315 = vector.shape_cast %314 : vector<8xf32> to vector<8x1xf32>
    %316 = tpu.reciprocal %315 {approx = true} : vector<8x1xf32> -> vector<8x1xf32>
    %317 = vector.broadcast %316 : vector<8x1xf32> to vector<8x8xf32>
    %318 = arith.mulf %313, %317 : vector<8x8xf32>
    %319 = vector.extract_strided_slice %286 {offsets = [8, 0], sizes = [8, 4], strides = [1, 1]} : vector<16x4xf32> to vector<8x4xf32>
    %cst_175 = arith.constant dense<0.000000e+00> : vector<8x4xf32>
    %320 = tpu.matmul %318, %319, %cst_175 {dimension_numbers = #tpu.dot_dimension_numbers<[1], [0], [0], [1], [0, 0, 1, 1], [], []>} : vector<8x8xf32>, vector<8x4xf32>, vector<8x4xf32> -> vector<8x4xf32>
    %c3_176 = arith.constant 3 : index
    %c0_177 = arith.constant 0 : index
    %c0_178 = arith.constant 0 : index
    %321 = vector.load %arg7[%c3_176, %c0_177, %c0_178] : memref<4x4x7xf32, #tpu.memory_space<vmem>>, vector<1x4x7xf32>
    %322 = vector.shape_cast %321 : vector<1x4x7xf32> to vector<4x7xf32>
    %cst_179 = arith.constant dense<0.000000e+00> : vector<8x7xf32>
    %323 = tpu.matmul %320, %322, %cst_179 {dimension_numbers = #tpu.dot_dimension_numbers<[1], [0], [0], [1], [0, 0, 1, 1], [], []>} : vector<8x4xf32>, vector<4x7xf32>, vector<8x7xf32> -> vector<8x7xf32>
    %324 = arith.addf %277, %323 : vector<8x7xf32>
    %325 = tpu.concatenate %305, %324 in 0 : vector<8x7xf32>, vector<8x7xf32> -> vector<16x7xf32>
    %c1_180 = arith.constant 1 : index
    %c0_181 = arith.constant 0 : index
    %c0_182 = arith.constant 0 : index
    %326 = vector.load %arg8[%c1_180, %c0_181, %c0_182] : memref<2x1x7xf32, #tpu.memory_space<vmem>>, vector<1x1x7xf32>
    %327 = vector.shape_cast %326 : vector<1x1x7xf32> to vector<1x7xf32>
    %328 = vector.broadcast %327 : vector<1x7xf32> to vector<16x7xf32>
    %329 = arith.addf %325, %328 : vector<16x7xf32>
    %330 = arith.addf %206, %329 : vector<16x7xf32>
    %c1_183 = arith.constant 1 : index
    %c0_184 = arith.constant 0 : index
    %c0_185 = arith.constant 0 : index
    %331 = vector.load %arg9[%c1_183, %c0_184, %c0_185] : memref<2x1x7xf32, #tpu.memory_space<vmem>>, vector<1x1x7xf32>
    %332 = vector.shape_cast %331 : vector<1x1x7xf32> to vector<1x7xf32>
    %c1_186 = arith.constant 1 : index
    %c0_187 = arith.constant 0 : index
    %c0_188 = arith.constant 0 : index
    %333 = vector.load %arg10[%c1_186, %c0_187, %c0_188] : memref<2x1x7xf32, #tpu.memory_space<vmem>>, vector<1x1x7xf32>
    %334 = vector.shape_cast %333 : vector<1x1x7xf32> to vector<1x7xf32>
    %cst_189 = arith.constant dense<0.000000e+00> : vector<16xf32>
    %335 = vector.multi_reduction <add>, %330, %cst_189 [1] : vector<16x7xf32> to vector<16xf32>
    %336 = vector.shape_cast %335 : vector<16xf32> to vector<16x1xf32>
    %cst_190 = arith.constant 7.000000e+00 : f32
    %337 = vector.broadcast %cst_190 : f32 to vector<16x1xf32>
    %338 = arith.divf %336, %337 : vector<16x1xf32>
    %339 = vector.broadcast %338 : vector<16x1xf32> to vector<16x7xf32>
    %340 = arith.subf %330, %339 : vector<16x7xf32>
    %341 = arith.mulf %340, %340 : vector<16x7xf32>
    %cst_191 = arith.constant dense<0.000000e+00> : vector<16xf32>
    %342 = vector.multi_reduction <add>, %341, %cst_191 [1] : vector<16x7xf32> to vector<16xf32>
    %343 = vector.shape_cast %342 : vector<16xf32> to vector<16x1xf32>
    %cst_192 = arith.constant 7.000000e+00 : f32
    %344 = vector.broadcast %cst_192 : f32 to vector<16x1xf32>
    %345 = arith.divf %343, %344 : vector<16x1xf32>
    %346 = vector.broadcast %338 : vector<16x1xf32> to vector<16x7xf32>
    %347 = arith.subf %330, %346 : vector<16x7xf32>
    %cst_193 = arith.constant 9.99999974E-6 : f32
    %348 = vector.broadcast %cst_193 : f32 to vector<16x1xf32>
    %349 = arith.addf %345, %348 : vector<16x1xf32>
    %350 = math.rsqrt %349 : vector<16x1xf32>
    %351 = vector.broadcast %350 : vector<16x1xf32> to vector<16x7xf32>
    %352 = arith.mulf %347, %351 : vector<16x7xf32>
    %353 = vector.broadcast %332 : vector<1x7xf32> to vector<16x7xf32>
    %354 = arith.mulf %352, %353 : vector<16x7xf32>
    %355 = vector.broadcast %334 : vector<1x7xf32> to vector<16x7xf32>
    %356 = arith.addf %354, %355 : vector<16x7xf32>
    %c1_194 = arith.constant 1 : index
    %c0_195 = arith.constant 0 : index
    %c0_196 = arith.constant 0 : index
    %357 = vector.load %arg11[%c1_194, %c0_195, %c0_196] : memref<2x7x16xf32, #tpu.memory_space<vmem>>, vector<1x7x16xf32>
    %358 = vector.shape_cast %357 : vector<1x7x16xf32> to vector<7x16xf32>
    %cst_197 = arith.constant dense<0.000000e+00> : vector<16x16xf32>
    %359 = tpu.matmul %356, %358, %cst_197 {dimension_numbers = #tpu.dot_dimension_numbers<[1], [0], [0], [1], [0, 0, 1, 1], [], []>} : vector<16x7xf32>, vector<7x16xf32>, vector<16x16xf32> -> vector<16x16xf32>
    %c1_198 = arith.constant 1 : index
    %c0_199 = arith.constant 0 : index
    %c0_200 = arith.constant 0 : index
    %360 = vector.load %arg12[%c1_198, %c0_199, %c0_200] : memref<2x1x16xf32, #tpu.memory_space<vmem>>, vector<1x1x16xf32>
    %361 = vector.shape_cast %360 : vector<1x1x16xf32> to vector<1x16xf32>
    %362 = vector.broadcast %361 : vector<1x16xf32> to vector<16x16xf32>
    %363 = arith.addf %359, %362 : vector<16x16xf32>
    %cst_201 = arith.constant 5.000000e-01 : f32
    %364 = vector.broadcast %cst_201 : f32 to vector<16x16xf32>
    %365 = arith.mulf %364, %363 : vector<16x16xf32>
    %cst_202 = arith.constant 0.707106769 : f32
    %366 = vector.broadcast %cst_202 : f32 to vector<16x16xf32>
    %367 = arith.mulf %363, %366 : vector<16x16xf32>
    %368 = math.erf %367 : vector<16x16xf32>
    %cst_203 = arith.constant 1.000000e+00 : f32
    %369 = vector.broadcast %cst_203 : f32 to vector<16x16xf32>
    %370 = arith.addf %369, %368 : vector<16x16xf32>
    %371 = arith.mulf %365, %370 : vector<16x16xf32>
    %c1_204 = arith.constant 1 : index
    %c0_205 = arith.constant 0 : index
    %c0_206 = arith.constant 0 : index
    %372 = vector.load %arg13[%c1_204, %c0_205, %c0_206] : memref<2x16x7xf32, #tpu.memory_space<vmem>>, vector<1x16x7xf32>
    %373 = vector.shape_cast %372 : vector<1x16x7xf32> to vector<16x7xf32>
    %cst_207 = arith.constant dense<0.000000e+00> : vector<16x7xf32>
    %374 = tpu.matmul %371, %373, %cst_207 {dimension_numbers = #tpu.dot_dimension_numbers<[1], [0], [0], [1], [0, 0, 1, 1], [], []>} : vector<16x16xf32>, vector<16x7xf32>, vector<16x7xf32> -> vector<16x7xf32>
    %c1_208 = arith.constant 1 : index
    %c0_209 = arith.constant 0 : index
    %c0_210 = arith.constant 0 : index
    %375 = vector.load %arg14[%c1_208, %c0_209, %c0_210] : memref<2x1x7xf32, #tpu.memory_space<vmem>>, vector<1x1x7xf32>
    %376 = vector.shape_cast %375 : vector<1x1x7xf32> to vector<1x7xf32>
    %377 = vector.broadcast %376 : vector<1x7xf32> to vector<16x7xf32>
    %378 = arith.addf %374, %377 : vector<16x7xf32>
    %c1_211 = arith.constant 1 : index
    %c0_212 = arith.constant 0 : index
    %c0_213 = arith.constant 0 : index
    %379 = vector.load %arg15[%c1_211, %c0_212, %c0_213] : memref<2x1x7xf32, #tpu.memory_space<vmem>>, vector<1x1x7xf32>
    %380 = vector.shape_cast %379 : vector<1x1x7xf32> to vector<1x7xf32>
    %c1_214 = arith.constant 1 : index
    %c0_215 = arith.constant 0 : index
    %c0_216 = arith.constant 0 : index
    %381 = vector.load %arg16[%c1_214, %c0_215, %c0_216] : memref<2x1x7xf32, #tpu.memory_space<vmem>>, vector<1x1x7xf32>
    %382 = vector.shape_cast %381 : vector<1x1x7xf32> to vector<1x7xf32>
    %cst_217 = arith.constant dense<0.000000e+00> : vector<16xf32>
    %383 = vector.multi_reduction <add>, %378, %cst_217 [1] : vector<16x7xf32> to vector<16xf32>
    %384 = vector.shape_cast %383 : vector<16xf32> to vector<16x1xf32>
    %cst_218 = arith.constant 7.000000e+00 : f32
    %385 = vector.broadcast %cst_218 : f32 to vector<16x1xf32>
    %386 = arith.divf %384, %385 : vector<16x1xf32>
    %387 = vector.broadcast %386 : vector<16x1xf32> to vector<16x7xf32>
    %388 = arith.subf %378, %387 : vector<16x7xf32>
    %389 = arith.mulf %388, %388 : vector<16x7xf32>
    %cst_219 = arith.constant dense<0.000000e+00> : vector<16xf32>
    %390 = vector.multi_reduction <add>, %389, %cst_219 [1] : vector<16x7xf32> to vector<16xf32>
    %391 = vector.shape_cast %390 : vector<16xf32> to vector<16x1xf32>
    %cst_220 = arith.constant 7.000000e+00 : f32
    %392 = vector.broadcast %cst_220 : f32 to vector<16x1xf32>
    %393 = arith.divf %391, %392 : vector<16x1xf32>
    %394 = vector.broadcast %386 : vector<16x1xf32> to vector<16x7xf32>
    %395 = arith.subf %378, %394 : vector<16x7xf32>
    %cst_221 = arith.constant 9.99999974E-6 : f32
    %396 = vector.broadcast %cst_221 : f32 to vector<16x1xf32>
    %397 = arith.addf %393, %396 : vector<16x1xf32>
    %398 = math.rsqrt %397 : vector<16x1xf32>
    %399 = vector.broadcast %398 : vector<16x1xf32> to vector<16x7xf32>
    %400 = arith.mulf %395, %399 : vector<16x7xf32>
    %401 = vector.broadcast %380 : vector<1x7xf32> to vector<16x7xf32>
    %402 = arith.mulf %400, %401 : vector<16x7xf32>
    %403 = vector.broadcast %382 : vector<1x7xf32> to vector<16x7xf32>
    %404 = arith.addf %402, %403 : vector<16x7xf32>
    %c1_222 = arith.constant 1 : index
    %c0_223 = arith.constant 0 : index
    %c0_224 = arith.constant 0 : index
    %405 = vector.load %arg17[%c1_222, %c0_223, %c0_224] : memref<2x7x7xf32, #tpu.memory_space<vmem>>, vector<1x7x7xf32>
    %406 = vector.shape_cast %405 : vector<1x7x7xf32> to vector<7x7xf32>
    %cst_225 = arith.constant dense<0.000000e+00> : vector<16x7xf32>
    %407 = tpu.matmul %404, %406, %cst_225 {dimension_numbers = #tpu.dot_dimension_numbers<[1], [0], [0], [1], [0, 0, 1, 1], [], []>} : vector<16x7xf32>, vector<7x7xf32>, vector<16x7xf32> -> vector<16x7xf32>
    %c1_226 = arith.constant 1 : index
    %c0_227 = arith.constant 0 : index
    %c0_228 = arith.constant 0 : index
    %408 = vector.load %arg18[%c1_226, %c0_227, %c0_228] : memref<2x1x7xf32, #tpu.memory_space<vmem>>, vector<1x1x7xf32>
    %409 = vector.shape_cast %408 : vector<1x1x7xf32> to vector<1x7xf32>
    %410 = vector.broadcast %409 : vector<1x7xf32> to vector<16x7xf32>
    %411 = arith.addf %407, %410 : vector<16x7xf32>
    %412 = arith.addf %330, %411 : vector<16x7xf32>
    %c0_229 = arith.constant 0 : index
    %c0_230 = arith.constant 0 : index
    %413 = vector.load %arg19[%c0_229, %c0_230] : memref<16x7xf32, #tpu.memory_space<vmem>>, vector<16x7xf32>
    tpu.vector_store %arg19[%c0_229, %c0_230], %412 {strides = array<i32>} : memref<16x7xf32, #tpu.memory_space<vmem>>, vector<16x7xf32>,
    return
  }
  func.func @transform_0(%arg0: i32) -> (i32, i32) {
    %c0_i32 = arith.constant 0 : i32
    %c0_i32_0 = arith.constant 0 : i32
    %c0_i32_1 = arith.constant 0 : i32
    return %c0_i32, %c0_i32_0 : i32, i32
  }
  func.func @transform_1(%arg0: i32) -> (i32, i32, i32) {
    %c0_i32 = arith.constant 0 : i32
    %c0_i32_0 = arith.constant 0 : i32
    %c0_i32_1 = arith.constant 0 : i32
    %c0_i32_2 = arith.constant 0 : i32
    return %c0_i32, %c0_i32_0, %c0_i32_1 : i32, i32, i32
  }
  func.func @transform_2(%arg0: i32) -> (i32, i32, i32) {
    %c0_i32 = arith.constant 0 : i32
    %c0_i32_0 = arith.constant 0 : i32
    %c0_i32_1 = arith.constant 0 : i32
    %c0_i32_2 = arith.constant 0 : i32
    return %c0_i32, %c0_i32_0, %c0_i32_1 : i32, i32, i32
  }
  func.func @transform_3(%arg0: i32) -> (i32, i32, i32) {
    %c0_i32 = arith.constant 0 : i32
    %c0_i32_0 = arith.constant 0 : i32
    %c0_i32_1 = arith.constant 0 : i32
    %c0_i32_2 = arith.constant 0 : i32
    return %c0_i32, %c0_i32_0, %c0_i32_1 : i32, i32, i32
  }
  func.func @transform_4(%arg0: i32) -> (i32, i32, i32) {
    %c0_i32 = arith.constant 0 : i32
    %c0_i32_0 = arith.constant 0 : i32
    %c0_i32_1 = arith.constant 0 : i32
    %c0_i32_2 = arith.constant 0 : i32
    return %c0_i32, %c0_i32_0, %c0_i32_1 : i32, i32, i32
  }
  func.func @transform_5(%arg0: i32) -> (i32, i32, i32) {
    %c0_i32 = arith.constant 0 : i32
    %c0_i32_0 = arith.constant 0 : i32
    %c0_i32_1 = arith.constant 0 : i32
    %c0_i32_2 = arith.constant 0 : i32
    return %c0_i32, %c0_i32_0, %c0_i32_1 : i32, i32, i32
  }
  func.func @transform_6(%arg0: i32) -> (i32, i32, i32) {
    %c0_i32 = arith.constant 0 : i32
    %c0_i32_0 = arith.constant 0 : i32
    %c0_i32_1 = arith.constant 0 : i32
    %c0_i32_2 = arith.constant 0 : i32
    return %c0_i32, %c0_i32_0, %c0_i32_1 : i32, i32, i32
  }
  func.func @transform_7(%arg0: i32) -> (i32, i32, i32) {
    %c0_i32 = arith.constant 0 : i32
    %c0_i32_0 = arith.constant 0 : i32
    %c0_i32_1 = arith.constant 0 : i32
    %c0_i32_2 = arith.constant 0 : i32
    return %c0_i32, %c0_i32_0, %c0_i32_1 : i32, i32, i32
  }
  func.func @transform_8(%arg0: i32) -> (i32, i32, i32) {
    %c0_i32 = arith.constant 0 : i32
    %c0_i32_0 = arith.constant 0 : i32
    %c0_i32_1 = arith.constant 0 : i32
    %c0_i32_2 = arith.constant 0 : i32
    return %c0_i32, %c0_i32_0, %c0_i32_1 : i32, i32, i32
  }
  func.func @transform_9(%arg0: i32) -> (i32, i32, i32) {
    %c0_i32 = arith.constant 0 : i32
    %c0_i32_0 = arith.constant 0 : i32
    %c0_i32_1 = arith.constant 0 : i32
    %c0_i32_2 = arith.constant 0 : i32
    return %c0_i32, %c0_i32_0, %c0_i32_1 : i32, i32, i32
  }
  func.func @transform_10(%arg0: i32) -> (i32, i32, i32) {
    %c0_i32 = arith.constant 0 : i32
    %c0_i32_0 = arith.constant 0 : i32
    %c0_i32_1 = arith.constant 0 : i32
    %c0_i32_2 = arith.constant 0 : i32
    return %c0_i32, %c0_i32_0, %c0_i32_1 : i32, i32, i32
  }
  func.func @transform_11(%arg0: i32) -> (i32, i32, i32) {
    %c0_i32 = arith.constant 0 : i32
    %c0_i32_0 = arith.constant 0 : i32
    %c0_i32_1 = arith.constant 0 : i32
    %c0_i32_2 = arith.constant 0 : i32
    return %c0_i32, %c0_i32_0, %c0_i32_1 : i32, i32, i32
  }
  func.func @transform_12(%arg0: i32) -> (i32, i32, i32) {
    %c0_i32 = arith.constant 0 : i32
    %c0_i32_0 = arith.constant 0 : i32
    %c0_i32_1 = arith.constant 0 : i32
    %c0_i32_2 = arith.constant 0 : i32
    return %c0_i32, %c0_i32_0, %c0_i32_1 : i32, i32, i32
  }
  func.func @transform_13(%arg0: i32) -> (i32, i32, i32) {
    %c0_i32 = arith.constant 0 : i32
    %c0_i32_0 = arith.constant 0 : i32
    %c0_i32_1 = arith.constant 0 : i32
    %c0_i32_2 = arith.constant 0 : i32
    return %c0_i32, %c0_i32_0, %c0_i32_1 : i32, i32, i32
  }
  func.func @transform_14(%arg0: i32) -> (i32, i32, i32) {
    %c0_i32 = arith.constant 0 : i32
    %c0_i32_0 = arith.constant 0 : i32
    %c0_i32_1 = arith.constant 0 : i32
    %c0_i32_2 = arith.constant 0 : i32
    return %c0_i32, %c0_i32_0, %c0_i32_1 : i32, i32, i32
  }
  func.func @transform_15(%arg0: i32) -> (i32, i32, i32) {
    %c0_i32 = arith.constant 0 : i32
    %c0_i32_0 = arith.constant 0 : i32
    %c0_i32_1 = arith.constant 0 : i32
    %c0_i32_2 = arith.constant 0 : i32
    return %c0_i32, %c0_i32_0, %c0_i32_1 : i32, i32, i32
  }
  func.func @transform_16(%arg0: i32) -> (i32, i32, i32) {
    %c0_i32 = arith.constant 0 : i32
    %c0_i32_0 = arith.constant 0 : i32
    %c0_i32_1 = arith.constant 0 : i32
    %c0_i32_2 = arith.constant 0 : i32
    return %c0_i32, %c0_i32_0, %c0_i32_1 : i32, i32, i32
  }
  func.func @transform_17(%arg0: i32) -> (i32, i32, i32) {
    %c0_i32 = arith.constant 0 : i32
    %c0_i32_0 = arith.constant 0 : i32
    %c0_i32_1 = arith.constant 0 : i32
    %c0_i32_2 = arith.constant 0 : i32
    return %c0_i32, %c0_i32_0, %c0_i32_1 : i32, i32, i32
  }
  func.func @transform_18(%arg0: i32) -> (i32, i32) {
    %c0_i32 = arith.constant 0 : i32
    %c0_i32_0 = arith.constant 0 : i32
    %c0_i32_1 = arith.constant 0 : i32
    return %c0_i32, %c0_i32_0 : i32, i32
  }
}

</mosaic_0001>

<llo_original>
// kernel: transformer_forward.1
$region0: #{transformer_forward.1}
  #allocation0 [shape = 'u32[]', space=smem, size = 0x4, offset = 0x4, fixed_abs, tag = 'smem constant byte address 0x4 - core index']
  #allocation1 [shape = 'u32[144,128]{1,0:T(1,128)}', space=vmem, size = 0x12000, scoped, tag = 'internal scratch']
  %s0 = inlined_call_operand.vmem [shape: f32[16,7], index: 0, kind: input, shape index: {}]
  %s1 = inlined_call_operand.vmem [shape: f32[2,1,7], index: 1, kind: input, shape index: {}]
  %s2 = inlined_call_operand.vmem [shape: f32[2,1,7], index: 2, kind: input, shape index: {}]
  %s3 = inlined_call_operand.vmem [shape: f32[4,7,4], index: 3, kind: input, shape index: {}]
  %s4 = inlined_call_operand.vmem [shape: f32[4,7,4], index: 4, kind: input, shape index: {}]
  %s5 = inlined_call_operand.vmem [shape: f32[4,7,4], index: 5, kind: input, shape index: {}]
  %s6 = inlined_call_operand.vmem [shape: f32[4,4,7], index: 6, kind: input, shape index: {}]
  %s7 = inlined_call_operand.vmem [shape: f32[2,1,7], index: 7, kind: input, shape index: {}]
  %s8 = inlined_call_operand.vmem [shape: f32[2,1,7], index: 8, kind: input, shape index: {}]
  %s9 = inlined_call_operand.vmem [shape: f32[2,1,7], index: 9, kind: input, shape index: {}]
  %s10 = inlined_call_operand.vmem [shape: f32[2,7,16], index: 10, kind: input, shape index: {}]
  %s11 = inlined_call_operand.vmem [shape: f32[2,1,16], index: 11, kind: input, shape index: {}]
  %s12 = inlined_call_operand.vmem [shape: f32[2,16,7], index: 12, kind: input, shape index: {}]
  %s13 = inlined_call_operand.vmem [shape: f32[2,1,7], index: 13, kind: input, shape index: {}]
  %s14 = inlined_call_operand.vmem [shape: f32[2,1,7], index: 14, kind: input, shape index: {}]
  %s15 = inlined_call_operand.vmem [shape: f32[2,1,7], index: 15, kind: input, shape index: {}]
  %s16 = inlined_call_operand.vmem [shape: f32[2,7,7], index: 16, kind: input, shape index: {}]
  %s17 = inlined_call_operand.vmem [shape: f32[2,1,7], index: 17, kind: input, shape index: {}]
  %s18 = inlined_call_operand.vmem [shape: f32[16,7], index: 18, kind: output, shape index: {}]
  %s19 = sld [smem:[#allocation0]]
  $region82: #{transformer_forward.1} parent=0
    _
  %s21 = ssub.s32 1, %s19
  %s22 = scalar_select 0, %s21, %s19
  // Predicated region
  $region2: #{transformer_forward.1} parent=0 // pred_check
    _
  $region3: #{transformer_forward.1} parent=0 // pred_check_branch
    %24 = sbr.rel (0) target = $region5
  $region4: #{transformer_forward.1} parent=0 // pred_region
    _
  $region5: #{transformer_forward.1} parent=0 // pred_fallthru
    _
  // Predicated region
  $region6: #{transformer_forward.1} parent=0 // pred_check
    _
  $region7: #{transformer_forward.1} parent=0 // pred_check_branch
    %26 = sbr.rel (0) target = $region9
  $region8: #{transformer_forward.1} parent=0 // pred_region
    _
  $region9: #{transformer_forward.1} parent=0 // pred_fallthru
    _
  // Predicated region
  $region10: #{transformer_forward.1} parent=0 // pred_check
    _
  $region11: #{transformer_forward.1} parent=0 // pred_check_branch
    %28 = sbr.rel (0) target = $region13
  $region12: #{transformer_forward.1} parent=0 // pred_region
    _
  $region13: #{transformer_forward.1} parent=0 // pred_fallthru
    _
  // Predicated region
  $region14: #{transformer_forward.1} parent=0 // pred_check
    _
  $region15: #{transformer_forward.1} parent=0 // pred_check_branch
    %30 = sbr.rel (0) target = $region17
  $region16: #{transformer_forward.1} parent=0 // pred_region
    _
  $region17: #{transformer_forward.1} parent=0 // pred_fallthru
    _
  // Predicated region
  $region18: #{transformer_forward.1} parent=0 // pred_check
    _
  $region19: #{transformer_forward.1} parent=0 // pred_check_branch
    %32 = sbr.rel (0) target = $region21
  $region20: #{transformer_forward.1} parent=0 // pred_region
    _
  $region21: #{transformer_forward.1} parent=0 // pred_fallthru
    _
  // Predicated region
  $region22: #{transformer_forward.1} parent=0 // pred_check
    _
  $region23: #{transformer_forward.1} parent=0 // pred_check_branch
    %34 = sbr.rel (0) target = $region25
  $region24: #{transformer_forward.1} parent=0 // pred_region
    _
  $region25: #{transformer_forward.1} parent=0 // pred_fallthru
    _
  // Predicated region
  $region26: #{transformer_forward.1} parent=0 // pred_check
    _
  $region27: #{transformer_forward.1} parent=0 // pred_check_branch
    %36 = sbr.rel (0) target = $region29
  $region28: #{transformer_forward.1} parent=0 // pred_region
    _
  $region29: #{transformer_forward.1} parent=0 // pred_fallthru
    _
  // Predicated region
  $region30: #{transformer_forward.1} parent=0 // pred_check
    _
  $region31: #{transformer_forward.1} parent=0 // pred_check_branch
    %38 = sbr.rel (0) target = $region33
  $region32: #{transformer_forward.1} parent=0 // pred_region
    _
  $region33: #{transformer_forward.1} parent=0 // pred_fallthru
    _
  // Predicated region
  $region34: #{transformer_forward.1} parent=0 // pred_check
    _
  $region35: #{transformer_forward.1} parent=0 // pred_check_branch
    %40 = sbr.rel (0) target = $region37
  $region36: #{transformer_forward.1} parent=0 // pred_region
    _
  $region37: #{transformer_forward.1} parent=0 // pred_fallthru
    _
  // Predicated region
  $region38: #{transformer_forward.1} parent=0 // pred_check
    _
  $region39: #{transformer_forward.1} parent=0 // pred_check_branch
    %42 = sbr.rel (0) target = $region41
  $region40: #{transformer_forward.1} parent=0 // pred_region
    _
  $region41: #{transformer_forward.1} parent=0 // pred_fallthru
    _
  // Predicated region
  $region42: #{transformer_forward.1} parent=0 // pred_check
    _
  $region43: #{transformer_forward.1} parent=0 // pred_check_branch
    %44 = sbr.rel (0) target = $region45
  $region44: #{transformer_forward.1} parent=0 // pred_region
    _
  $region45: #{transformer_forward.1} parent=0 // pred_fallthru
    _
  // Predicated region
  $region46: #{transformer_forward.1} parent=0 // pred_check
    _
  $region47: #{transformer_forward.1} parent=0 // pred_check_branch
    %46 = sbr.rel (0) target = $region49
  $region48: #{transformer_forward.1} parent=0 // pred_region
    _
  $region49: #{transformer_forward.1} parent=0 // pred_fallthru
    _
  // Predicated region
  $region50: #{transformer_forward.1} parent=0 // pred_check
    _
  $region51: #{transformer_forward.1} parent=0 // pred_check_branch
    %48 = sbr.rel (0) target = $region53
  $region52: #{transformer_forward.1} parent=0 // pred_region
    _
  $region53: #{transformer_forward.1} parent=0 // pred_fallthru
    _
  // Predicated region
  $region54: #{transformer_forward.1} parent=0 // pred_check
    _
  $region55: #{transformer_forward.1} parent=0 // pred_check_branch
    %50 = sbr.rel (0) target = $region57
  $region56: #{transformer_forward.1} parent=0 // pred_region
    _
  $region57: #{transformer_forward.1} parent=0 // pred_fallthru
    _
  // Predicated region
  $region58: #{transformer_forward.1} parent=0 // pred_check
    _
  $region59: #{transformer_forward.1} parent=0 // pred_check_branch
    %52 = sbr.rel (0) target = $region61
  $region60: #{transformer_forward.1} parent=0 // pred_region
    _
  $region61: #{transformer_forward.1} parent=0 // pred_fallthru
    _
  // Predicated region
  $region62: #{transformer_forward.1} parent=0 // pred_check
    _
  $region63: #{transformer_forward.1} parent=0 // pred_check_branch
    %54 = sbr.rel (0) target = $region65
  $region64: #{transformer_forward.1} parent=0 // pred_region
    _
  $region65: #{transformer_forward.1} parent=0 // pred_fallthru
    _
  // Predicated region
  $region66: #{transformer_forward.1} parent=0 // pred_check
    _
  $region67: #{transformer_forward.1} parent=0 // pred_check_branch
    %56 = sbr.rel (0) target = $region69
  $region68: #{transformer_forward.1} parent=0 // pred_region
    _
  $region69: #{transformer_forward.1} parent=0 // pred_fallthru
    _
  // Predicated region
  $region70: #{transformer_forward.1} parent=0 // pred_check
    _
  $region71: #{transformer_forward.1} parent=0 // pred_check_branch
    %58 = sbr.rel (0) target = $region73
  $region72: #{transformer_forward.1} parent=0 // pred_region
    _
  $region73: #{transformer_forward.1} parent=0 // pred_fallthru
    _
  %v59 = vld [vmem:[%s0] sm:$0xff]
  %v60 = vld [vmem:[%s0 + $0x8] sm:$0xff]
  %v61 = vld [vmem:[%s1] sm:$0x1]
  %v62 = vld [vmem:[%s2] sm:$0x1]
  %vm63 = vcmask 56320
  %v64 = vsel %vm63, %v59, 0.0
  %65 = vadd.xlane.f32.xlu0 %v64
  %v66 = vpop.xlane.xlu0 %65
  %v67 = vsel %vm63, %v60, 0.0
  %68 = vadd.xlane.f32.xlu0 %v67
  %v69 = vpop.xlane.xlu0 %68
  %v70 = vrcp.pop 7.0
  %v71 = vmul.f32 %v66, %v70
  %v72 = vmul.f32 %v69, %v70
  %v73 = vsub.f32 %v59, %v71
  %v74 = vsub.f32 %v60, %v72
  %v75 = vmul.f32 %v73, %v73
  %v76 = vmul.f32 %v74, %v74
  %v77 = vsel %vm63, %v75, 0.0
  %78 = vadd.xlane.f32.xlu0 %v77
  %v79 = vpop.xlane.xlu0 %78
  %v80 = vsel %vm63, %v76, 0.0
  %81 = vadd.xlane.f32.xlu0 %v80
  %v82 = vpop.xlane.xlu0 %81
  %v83 = vmul.f32 %v79, %v70
  %v84 = vmul.f32 %v82, %v70
  %v85 = vadd.f32 %v83, 1e-05
  %v86 = vadd.f32 %v84, 1e-05
  %v87 = vrsqrt.pop %v85
  %v88 = vrsqrt.pop %v86
  %v89 = vmul.f32 %v73, %v87
  %v90 = vmul.f32 %v74, %v88
  %v92 = vlaneseq
  %v93 = vshrl.u32 %v92, 7
  %v94 = vsub.s32 0, %v93
  %v95 = vrot.slane %v61, %v94
  %v97 = vmul.f32 %v89, %v95
  %v98 = vmul.f32 %v90, %v95
  %v100 = vlaneseq
  %v101 = vshrl.u32 %v100, 7
  %v102 = vsub.s32 0, %v101
  %v103 = vrot.slane %v62, %v102
  %v105 = vadd.f32 %v97, %v103
  %v106 = vadd.f32 %v98, %v103
  %v107 = vld [vmem:[%s3] sm:$0x7f]
  %v109 = vsel %vm63, %v105, 0
  %v112 = vsel %vm63, %v106, 0
  %vm114 = vcmask 1046528
  %v116 = vsel %vm114, %v107, 0
  %118 = vmatprep.subr.mxu0 0.0
  %119 = vmatpush1.msra.mxu0 0.0
  %120 = vmatprep.subr.mxu0 0.0
  %121 = vmatpush1.msra.mxu0 0.0
  %122 = vmatprep.subr.mxu0 0.0
  %123 = vmatpush1.msra.mxu0 0.0
  %124 = vmatprep.subr.mxu0 0.0
  %125 = vmatpush1.msra.mxu0 0.0
  %126 = vmatprep.subr.mxu0 0.0
  %127 = vmatpush1.msra.mxu0 0.0
  %128 = vmatprep.subr.mxu0 0.0
  %129 = vmatpush1.msra.mxu0 0.0
  %130 = vmatprep.subr.mxu0 0.0
  %131 = vmatpush1.msra.mxu0 0.0
  %132 = vmatprep.subr.mxu0 0.0
  %133 = vmatpush1.msra.mxu0 0.0
  %134 = vmatprep.subr.mxu0 0.0
  %135 = vmatpush1.msra.mxu0 0.0
  %136 = vmatprep.subr.mxu0 0.0
  %137 = vmatpush1.msra.mxu0 0.0
  %138 = vmatprep.subr.mxu0 0.0
  %139 = vmatpush1.msra.mxu0 0.0
  %140 = vmatprep.subr.mxu0 0.0
  %141 = vmatpush1.msra.mxu0 0.0
  %142 = vmatprep.subr.mxu0 0.0
  %143 = vmatpush1.msra.mxu0 0.0
  %144 = vmatprep.subr.mxu0 0.0
  %145 = vmatpush1.msra.mxu0 0.0
  %146 = vmatprep.subr.mxu0 0.0
  %147 = vmatpush1.msra.mxu0 0.0
  %148 = vmatprep.subr.mxu0 0.0
  %149 = vmatpush1.msra.mxu0 %v116
  %150 = vmatprep.subr.mxu0 0.0
  %151 = vmatpush2.msra.mxu0 0.0
  %152 = vmatprep.subr.mxu0 0.0
  %153 = vmatpush2.msra.mxu0 0.0
  %154 = vmatprep.subr.mxu0 0.0
  %155 = vmatpush2.msra.mxu0 0.0
  %156 = vmatprep.subr.mxu0 0.0
  %157 = vmatpush2.msra.mxu0 0.0
  %158 = vmatprep.subr.mxu0 0.0
  %159 = vmatpush2.msra.mxu0 0.0
  %160 = vmatprep.subr.mxu0 0.0
  %161 = vmatpush2.msra.mxu0 0.0
  %162 = vmatprep.subr.mxu0 0.0
  %163 = vmatpush2.msra.mxu0 0.0
  %164 = vmatprep.subr.mxu0 0.0
  %165 = vmatpush2.msra.mxu0 0.0
  %166 = vmatprep.subr.mxu0 0.0
  %167 = vmatpush2.msra.mxu0 0.0
  %168 = vmatprep.subr.mxu0 0.0
  %169 = vmatpush2.msra.mxu0 0.0
  %170 = vmatprep.subr.mxu0 0.0
  %171 = vmatpush2.msra.mxu0 0.0
  %172 = vmatprep.subr.mxu0 0.0
  %173 = vmatpush2.msra.mxu0 0.0
  %174 = vmatprep.subr.mxu0 0.0
  %175 = vmatpush2.msra.mxu0 0.0
  %176 = vmatprep.subr.mxu0 0.0
  %177 = vmatpush2.msra.mxu0 0.0
  %178 = vmatprep.subr.mxu0 0.0
  %179 = vmatpush2.msra.mxu0 0.0
  %180 = vmatprep.subr.mxu0 0.0
  %181 = vmatpush2.msra.mxu0 0.0
  %182 = vmatprep.mubr.f32.mxu0 0.0
  %183 = vmatmul.mubr.f32.gmra.mxu0 %v109
  %v184 = vpop.f32.mrf.mxu0
  %v185 = vadd.f32 0.0, %v184
  %v186 = vpop.f32.mrf.mxu0
  %187 = vmatprep.mubr.f32.mxu0 0.0
  %188 = vmatmul.mubr.f32.gmra.mxu0 %v112
  %v189 = vpop.f32.mrf.mxu0
  %v190 = vadd.f32 0.0, %v189
  %v191 = vpop.f32.mrf.mxu0
  %192 = vdwg.mxu0
  %v193 = vld [vmem:[%s4] sm:$0x7f]
  %v195 = vsel %vm114, %v193, 0
  %197 = vmatprep.subr.mxu0 0.0
  %198 = vmatpush1.msra.mxu0 0.0
  %199 = vmatprep.subr.mxu0 0.0
  %200 = vmatpush1.msra.mxu0 0.0
  %201 = vmatprep.subr.mxu0 0.0
  %202 = vmatpush1.msra.mxu0 0.0
  %203 = vmatprep.subr.mxu0 0.0
  %204 = vmatpush1.msra.mxu0 0.0
  %205 = vmatprep.subr.mxu0 0.0
  %206 = vmatpush1.msra.mxu0 0.0
  %207 = vmatprep.subr.mxu0 0.0
  %208 = vmatpush1.msra.mxu0 0.0
  %209 = vmatprep.subr.mxu0 0.0
  %210 = vmatpush1.msra.mxu0 0.0
  %211 = vmatprep.subr.mxu0 0.0
  %212 = vmatpush1.msra.mxu0 0.0
  %213 = vmatprep.subr.mxu0 0.0
  %214 = vmatpush1.msra.mxu0 0.0
  %215 = vmatprep.subr.mxu0 0.0
  %216 = vmatpush1.msra.mxu0 0.0
  %217 = vmatprep.subr.mxu0 0.0
  %218 = vmatpush1.msra.mxu0 0.0
  %219 = vmatprep.subr.mxu0 0.0
  %220 = vmatpush1.msra.mxu0 0.0
  %221 = vmatprep.subr.mxu0 0.0
  %222 = vmatpush1.msra.mxu0 0.0
  %223 = vmatprep.subr.mxu0 0.0
  %224 = vmatpush1.msra.mxu0 0.0
  %225 = vmatprep.subr.mxu0 0.0
  %226 = vmatpush1.msra.mxu0 0.0
  %227 = vmatprep.subr.mxu0 0.0
  %228 = vmatpush1.msra.mxu0 %v195
  %229 = vmatprep.subr.mxu0 0.0
  %230 = vmatpush2.msra.mxu0 0.0
  %231 = vmatprep.subr.mxu0 0.0
  %232 = vmatpush2.msra.mxu0 0.0
  %233 = vmatprep.subr.mxu0 0.0
  %234 = vmatpush2.msra.mxu0 0.0
  %235 = vmatprep.subr.mxu0 0.0
  %236 = vmatpush2.msra.mxu0 0.0
  %237 = vmatprep.subr.mxu0 0.0
  %238 = vmatpush2.msra.mxu0 0.0
  %239 = vmatprep.subr.mxu0 0.0
  %240 = vmatpush2.msra.mxu0 0.0
  %241 = vmatprep.subr.mxu0 0.0
  %242 = vmatpush2.msra.mxu0 0.0
  %243 = vmatprep.subr.mxu0 0.0
  %244 = vmatpush2.msra.mxu0 0.0
  %245 = vmatprep.subr.mxu0 0.0
  %246 = vmatpush2.msra.mxu0 0.0
  %247 = vmatprep.subr.mxu0 0.0
  %248 = vmatpush2.msra.mxu0 0.0
  %249 = vmatprep.subr.mxu0 0.0
  %250 = vmatpush2.msra.mxu0 0.0
  %251 = vmatprep.subr.mxu0 0.0
  %252 = vmatpush2.msra.mxu0 0.0
  %253 = vmatprep.subr.mxu0 0.0
  %254 = vmatpush2.msra.mxu0 0.0
  %255 = vmatprep.subr.mxu0 0.0
  %256 = vmatpush2.msra.mxu0 0.0
  %257 = vmatprep.subr.mxu0 0.0
  %258 = vmatpush2.msra.mxu0 0.0
  %259 = vmatprep.subr.mxu0 0.0
  %260 = vmatpush2.msra.mxu0 0.0
  %261 = vmatprep.mubr.f32.mxu0 0.0
  %262 = vmatmul.mubr.f32.gmra.mxu0 %v109
  %v263 = vpop.f32.mrf.mxu0
  %v264 = vadd.f32 0.0, %v263
  %v265 = vpop.f32.mrf.mxu0
  %266 = vmatprep.mubr.f32.mxu0 0.0
  %267 = vmatmul.mubr.f32.gmra.mxu0 %v112
  %v268 = vpop.f32.mrf.mxu0
  %v269 = vadd.f32 0.0, %v268
  %v270 = vpop.f32.mrf.mxu0
  %271 = vdwg.mxu0
  %v272 = vld [vmem:[%s5] sm:$0x7f]
  %v274 = vsel %vm114, %v272, 0
  %276 = vmatprep.subr.mxu0 0.0
  %277 = vmatpush1.msra.mxu0 0.0
  %278 = vmatprep.subr.mxu0 0.0
  %279 = vmatpush1.msra.mxu0 0.0
  %280 = vmatprep.subr.mxu0 0.0
  %281 = vmatpush1.msra.mxu0 0.0
  %282 = vmatprep.subr.mxu0 0.0
  %283 = vmatpush1.msra.mxu0 0.0
  %284 = vmatprep.subr.mxu0 0.0
  %285 = vmatpush1.msra.mxu0 0.0
  %286 = vmatprep.subr.mxu0 0.0
  %287 = vmatpush1.msra.mxu0 0.0
  %288 = vmatprep.subr.mxu0 0.0
  %289 = vmatpush1.msra.mxu0 0.0
  %290 = vmatprep.subr.mxu0 0.0
  %291 = vmatpush1.msra.mxu0 0.0
  %292 = vmatprep.subr.mxu0 0.0
  %293 = vmatpush1.msra.mxu0 0.0
  %294 = vmatprep.subr.mxu0 0.0
  %295 = vmatpush1.msra.mxu0 0.0
  %296 = vmatprep.subr.mxu0 0.0
  %297 = vmatpush1.msra.mxu0 0.0
  %298 = vmatprep.subr.mxu0 0.0
  %299 = vmatpush1.msra.mxu0 0.0
  %300 = vmatprep.subr.mxu0 0.0
  %301 = vmatpush1.msra.mxu0 0.0
  %302 = vmatprep.subr.mxu0 0.0
  %303 = vmatpush1.msra.mxu0 0.0
  %304 = vmatprep.subr.mxu0 0.0
  %305 = vmatpush1.msra.mxu0 0.0
  %306 = vmatprep.subr.mxu0 0.0
  %307 = vmatpush1.msra.mxu0 %v274
  %308 = vmatprep.subr.mxu0 0.0
  %309 = vmatpush2.msra.mxu0 0.0
  %310 = vmatprep.subr.mxu0 0.0
  %311 = vmatpush2.msra.mxu0 0.0
  %312 = vmatprep.subr.mxu0 0.0
  %313 = vmatpush2.msra.mxu0 0.0
  %314 = vmatprep.subr.mxu0 0.0
  %315 = vmatpush2.msra.mxu0 0.0
  %316 = vmatprep.subr.mxu0 0.0
  %317 = vmatpush2.msra.mxu0 0.0
  %318 = vmatprep.subr.mxu0 0.0
  %319 = vmatpush2.msra.mxu0 0.0
  %320 = vmatprep.subr.mxu0 0.0
  %321 = vmatpush2.msra.mxu0 0.0
  %322 = vmatprep.subr.mxu0 0.0
  %323 = vmatpush2.msra.mxu0 0.0
  %324 = vmatprep.subr.mxu0 0.0
  %325 = vmatpush2.msra.mxu0 0.0
  %326 = vmatprep.subr.mxu0 0.0
  %327 = vmatpush2.msra.mxu0 0.0
  %328 = vmatprep.subr.mxu0 0.0
  %329 = vmatpush2.msra.mxu0 0.0
  %330 = vmatprep.subr.mxu0 0.0
  %331 = vmatpush2.msra.mxu0 0.0
  %332 = vmatprep.subr.mxu0 0.0
  %333 = vmatpush2.msra.mxu0 0.0
  %334 = vmatprep.subr.mxu0 0.0
  %335 = vmatpush2.msra.mxu0 0.0
  %336 = vmatprep.subr.mxu0 0.0
  %337 = vmatpush2.msra.mxu0 0.0
  %338 = vmatprep.subr.mxu0 0.0
  %339 = vmatpush2.msra.mxu0 0.0
  %340 = vmatprep.mubr.f32.mxu0 0.0
  %341 = vmatmul.mubr.f32.gmra.mxu0 %v109
  %v342 = vpop.f32.mrf.mxu0
  %v343 = vadd.f32 0.0, %v342
  %v344 = vpop.f32.mrf.mxu0
  %345 = vmatprep.mubr.f32.mxu0 0.0
  %346 = vmatmul.mubr.f32.gmra.mxu0 %v112
  %v347 = vpop.f32.mrf.mxu0
  %v348 = vadd.f32 0.0, %v347
  %v349 = vpop.f32.mrf.mxu0
  %350 = vdwg.mxu0
  %vm351 = vcmask 31744
  %v353 = vsel %vm351, %v185, 0
  %v356 = vsel %vm351, %v264, 0
  %358 = vmatprep.subr.mxu0 0.0
  %359 = vmatpush1.xpose.msra.mxu0 0.0
  %360 = vmatprep.subr.mxu0 0.0
  %361 = vmatpush1.xpose.msra.mxu0 0.0
  %362 = vmatprep.subr.mxu0 0.0
  %363 = vmatpush1.xpose.msra.mxu0 0.0
  %364 = vmatprep.subr.mxu0 0.0
  %365 = vmatpush1.xpose.msra.mxu0 0.0
  %366 = vmatprep.subr.mxu0 0.0
  %367 = vmatpush1.xpose.msra.mxu0 0.0
  %368 = vmatprep.subr.mxu0 0.0
  %369 = vmatpush1.xpose.msra.mxu0 0.0
  %370 = vmatprep.subr.mxu0 0.0
  %371 = vmatpush1.xpose.msra.mxu0 0.0
  %372 = vmatprep.subr.mxu0 0.0
  %373 = vmatpush1.xpose.msra.mxu0 0.0
  %374 = vmatprep.subr.mxu0 0.0
  %375 = vmatpush1.xpose.msra.mxu0 0.0
  %376 = vmatprep.subr.mxu0 0.0
  %377 = vmatpush1.xpose.msra.mxu0 0.0
  %378 = vmatprep.subr.mxu0 0.0
  %379 = vmatpush1.xpose.msra.mxu0 0.0
  %380 = vmatprep.subr.mxu0 0.0
  %381 = vmatpush1.xpose.msra.mxu0 0.0
  %382 = vmatprep.subr.mxu0 0.0
  %383 = vmatpush1.xpose.msra.mxu0 0.0
  %384 = vmatprep.subr.mxu0 0.0
  %385 = vmatpush1.xpose.msra.mxu0 0.0
  %386 = vmatprep.subr.mxu0 0.0
  %387 = vmatpush1.xpose.msra.mxu0 0.0
  %388 = vmatprep.subr.mxu0 0.0
  %389 = vmatpush1.xpose.msra.mxu0 %v356
  %390 = vmatprep.subr.mxu0 0.0
  %391 = vmatpush2.xpose.msra.mxu0 0.0
  %392 = vmatprep.subr.mxu0 0.0
  %393 = vmatpush2.xpose.msra.mxu0 0.0
  %394 = vmatprep.subr.mxu0 0.0
  %395 = vmatpush2.xpose.msra.mxu0 0.0
  %396 = vmatprep.subr.mxu0 0.0
  %397 = vmatpush2.xpose.msra.mxu0 0.0
  %398 = vmatprep.subr.mxu0 0.0
  %399 = vmatpush2.xpose.msra.mxu0 0.0
  %400 = vmatprep.subr.mxu0 0.0
  %401 = vmatpush2.xpose.msra.mxu0 0.0
  %402 = vmatprep.subr.mxu0 0.0
  %403 = vmatpush2.xpose.msra.mxu0 0.0
  %404 = vmatprep.subr.mxu0 0.0
  %405 = vmatpush2.xpose.msra.mxu0 0.0
  %406 = vmatprep.subr.mxu0 0.0
  %407 = vmatpush2.xpose.msra.mxu0 0.0
  %408 = vmatprep.subr.mxu0 0.0
  %409 = vmatpush2.xpose.msra.mxu0 0.0
  %410 = vmatprep.subr.mxu0 0.0
  %411 = vmatpush2.xpose.msra.mxu0 0.0
  %412 = vmatprep.subr.mxu0 0.0
  %413 = vmatpush2.xpose.msra.mxu0 0.0
  %414 = vmatprep.subr.mxu0 0.0
  %415 = vmatpush2.xpose.msra.mxu0 0.0
  %416 = vmatprep.subr.mxu0 0.0
  %417 = vmatpush2.xpose.msra.mxu0 0.0
  %418 = vmatprep.subr.mxu0 0.0
  %419 = vmatpush2.xpose.msra.mxu0 0.0
  %420 = vmatprep.subr.mxu0 0.0
  %421 = vmatpush2.xpose.msra.mxu0 0.0
  %422 = vmatprep.mubr.f32.mxu0 0.0
  %423 = vmatmul.mubr.f32.gmra.mxu0 %v353
  %v424 = vpop.f32.mrf.mxu0
  %v425 = vadd.f32 0.0, %v424
  %v426 = vpop.f32.mrf.mxu0
  %427 = vdwg.mxu0
  %vm428 = vcmask 64512
  %v429 = vsel %vm428, %v425, -inf
  %430 = vmax.xlane.f32.xlu0 %v429
  %v431 = vpop.xlane.xlu0 %430
  %v432 = vsub.f32 %v425, %v431
  %v433 = vmul.f32 %v432, 1.442695
  %v434 = vpow.pop %v433
  %v435 = vsel %vm428, %v434, 0.0
  %436 = vadd.xlane.f32.xlu0 %v435
  %v437 = vpop.xlane.xlu0 %436
  %v438 = vrcp.pop %v437
  %v439 = vmul.f32 %v434, %v438
  %v441 = vsel %vm428, %v439, 0
  %443 = vmatprep.subr.mxu0 0.0
  %444 = vmatpush1.msra.mxu0 0.0
  %445 = vmatprep.subr.mxu0 0.0
  %446 = vmatpush1.msra.mxu0 0.0
  %447 = vmatprep.subr.mxu0 0.0
  %448 = vmatpush1.msra.mxu0 0.0
  %449 = vmatprep.subr.mxu0 0.0
  %450 = vmatpush1.msra.mxu0 0.0
  %451 = vmatprep.subr.mxu0 0.0
  %452 = vmatpush1.msra.mxu0 0.0
  %453 = vmatprep.subr.mxu0 0.0
  %454 = vmatpush1.msra.mxu0 0.0
  %455 = vmatprep.subr.mxu0 0.0
  %456 = vmatpush1.msra.mxu0 0.0
  %457 = vmatprep.subr.mxu0 0.0
  %458 = vmatpush1.msra.mxu0 0.0
  %459 = vmatprep.subr.mxu0 0.0
  %460 = vmatpush1.msra.mxu0 0.0
  %461 = vmatprep.subr.mxu0 0.0
  %462 = vmatpush1.msra.mxu0 0.0
  %463 = vmatprep.subr.mxu0 0.0
  %464 = vmatpush1.msra.mxu0 0.0
  %465 = vmatprep.subr.mxu0 0.0
  %466 = vmatpush1.msra.mxu0 0.0
  %467 = vmatprep.subr.mxu0 0.0
  %468 = vmatpush1.msra.mxu0 0.0
  %469 = vmatprep.subr.mxu0 0.0
  %470 = vmatpush1.msra.mxu0 0.0
  %471 = vmatprep.subr.mxu0 0.0
  %472 = vmatpush1.msra.mxu0 0.0
  %473 = vmatprep.subr.mxu0 0.0
  %474 = vmatpush1.msra.mxu0 %v343
  %475 = vmatprep.subr.mxu0 0.0
  %476 = vmatpush2.msra.mxu0 0.0
  %477 = vmatprep.subr.mxu0 0.0
  %478 = vmatpush2.msra.mxu0 0.0
  %479 = vmatprep.subr.mxu0 0.0
  %480 = vmatpush2.msra.mxu0 0.0
  %481 = vmatprep.subr.mxu0 0.0
  %482 = vmatpush2.msra.mxu0 0.0
  %483 = vmatprep.subr.mxu0 0.0
  %484 = vmatpush2.msra.mxu0 0.0
  %485 = vmatprep.subr.mxu0 0.0
  %486 = vmatpush2.msra.mxu0 0.0
  %487 = vmatprep.subr.mxu0 0.0
  %488 = vmatpush2.msra.mxu0 0.0
  %489 = vmatprep.subr.mxu0 0.0
  %490 = vmatpush2.msra.mxu0 0.0
  %491 = vmatprep.subr.mxu0 0.0
  %492 = vmatpush2.msra.mxu0 0.0
  %493 = vmatprep.subr.mxu0 0.0
  %494 = vmatpush2.msra.mxu0 0.0
  %495 = vmatprep.subr.mxu0 0.0
  %496 = vmatpush2.msra.mxu0 0.0
  %497 = vmatprep.subr.mxu0 0.0
  %498 = vmatpush2.msra.mxu0 0.0
  %499 = vmatprep.subr.mxu0 0.0
  %500 = vmatpush2.msra.mxu0 0.0
  %501 = vmatprep.subr.mxu0 0.0
  %502 = vmatpush2.msra.mxu0 0.0
  %503 = vmatprep.subr.mxu0 0.0
  %504 = vmatpush2.msra.mxu0 0.0
  %505 = vmatprep.subr.mxu0 0.0
  %506 = vmatpush2.msra.mxu0 0.0
  %507 = vmatprep.mubr.f32.mxu0 0.0
  %508 = vmatmul.mubr.f32.gmra.mxu0 %v441
  %v509 = vpop.f32.mrf.mxu0
  %v510 = vadd.f32 0.0, %v509
  %v511 = vpop.f32.mrf.mxu0
  %512 = vdwg.mxu0
  %v513 = vld [vmem:[%s6] sm:$0xf]
  %v515 = vsel %vm351, %v190, 0
  %v518 = vsel %vm351, %v269, 0
  %520 = vmatprep.subr.mxu0 0.0
  %521 = vmatpush1.xpose.msra.mxu0 0.0
  %522 = vmatprep.subr.mxu0 0.0
  %523 = vmatpush1.xpose.msra.mxu0 0.0
  %524 = vmatprep.subr.mxu0 0.0
  %525 = vmatpush1.xpose.msra.mxu0 0.0
  %526 = vmatprep.subr.mxu0 0.0
  %527 = vmatpush1.xpose.msra.mxu0 0.0
  %528 = vmatprep.subr.mxu0 0.0
  %529 = vmatpush1.xpose.msra.mxu0 0.0
  %530 = vmatprep.subr.mxu0 0.0
  %531 = vmatpush1.xpose.msra.mxu0 0.0
  %532 = vmatprep.subr.mxu0 0.0
  %533 = vmatpush1.xpose.msra.mxu0 0.0
  %534 = vmatprep.subr.mxu0 0.0
  %535 = vmatpush1.xpose.msra.mxu0 0.0
  %536 = vmatprep.subr.mxu0 0.0
  %537 = vmatpush1.xpose.msra.mxu0 0.0
  %538 = vmatprep.subr.mxu0 0.0
  %539 = vmatpush1.xpose.msra.mxu0 0.0
  %540 = vmatprep.subr.mxu0 0.0
  %541 = vmatpush1.xpose.msra.mxu0 0.0
  %542 = vmatprep.subr.mxu0 0.0
  %543 = vmatpush1.xpose.msra.mxu0 0.0
  %544 = vmatprep.subr.mxu0 0.0
  %545 = vmatpush1.xpose.msra.mxu0 0.0
  %546 = vmatprep.subr.mxu0 0.0
  %547 = vmatpush1.xpose.msra.mxu0 0.0
  %548 = vmatprep.subr.mxu0 0.0
  %549 = vmatpush1.xpose.msra.mxu0 0.0
  %550 = vmatprep.subr.mxu0 0.0
  %551 = vmatpush1.xpose.msra.mxu0 %v518
  %552 = vmatprep.subr.mxu0 0.0
  %553 = vmatpush2.xpose.msra.mxu0 0.0
  %554 = vmatprep.subr.mxu0 0.0
  %555 = vmatpush2.xpose.msra.mxu0 0.0
  %556 = vmatprep.subr.mxu0 0.0
  %557 = vmatpush2.xpose.msra.mxu0 0.0
  %558 = vmatprep.subr.mxu0 0.0
  %559 = vmatpush2.xpose.msra.mxu0 0.0
  %560 = vmatprep.subr.mxu0 0.0
  %561 = vmatpush2.xpose.msra.mxu0 0.0
  %562 = vmatprep.subr.mxu0 0.0
  %563 = vmatpush2.xpose.msra.mxu0 0.0
  %564 = vmatprep.subr.mxu0 0.0
  %565 = vmatpush2.xpose.msra.mxu0 0.0
  %566 = vmatprep.subr.mxu0 0.0
  %567 = vmatpush2.xpose.msra.mxu0 0.0
  %568 = vmatprep.subr.mxu0 0.0
  %569 = vmatpush2.xpose.msra.mxu0 0.0
  %570 = vmatprep.subr.mxu0 0.0
  %571 = vmatpush2.xpose.msra.mxu0 0.0
  %572 = vmatprep.subr.mxu0 0.0
  %573 = vmatpush2.xpose.msra.mxu0 0.0
  %574 = vmatprep.subr.mxu0 0.0
  %575 = vmatpush2.xpose.msra.mxu0 0.0
  %576 = vmatprep.subr.mxu0 0.0
  %577 = vmatpush2.xpose.msra.mxu0 0.0
  %578 = vmatprep.subr.mxu0 0.0
  %579 = vmatpush2.xpose.msra.mxu0 0.0
  %580 = vmatprep.subr.mxu0 0.0
  %581 = vmatpush2.xpose.msra.mxu0 0.0
  %582 = vmatprep.subr.mxu0 0.0
  %583 = vmatpush2.xpose.msra.mxu0 0.0
  %584 = vmatprep.mubr.f32.mxu0 0.0
  %585 = vmatmul.mubr.f32.gmra.mxu0 %v515
  %v586 = vpop.f32.mrf.mxu0
  %v587 = vadd.f32 0.0, %v586
  %v588 = vpop.f32.mrf.mxu0
  %589 = vdwg.mxu0
  %v590 = vsel %vm428, %v587, -inf
  %591 = vmax.xlane.f32.xlu0 %v590
  %v592 = vpop.xlane.xlu0 %591
  %v593 = vsub.f32 %v587, %v592
  %v594 = vmul.f32 %v593, 1.442695
  %v595 = vpow.pop %v594
  %v596 = vsel %vm428, %v595, 0.0
  %597 = vadd.xlane.f32.xlu0 %v596
  %v598 = vpop.xlane.xlu0 %597
  %v599 = vrcp.pop %v598
  %v600 = vmul.f32 %v595, %v599
  %v602 = vsel %vm428, %v600, 0
  %604 = vmatprep.subr.mxu0 0.0
  %605 = vmatpush1.msra.mxu0 0.0
  %606 = vmatprep.subr.mxu0 0.0
  %607 = vmatpush1.msra.mxu0 0.0
  %608 = vmatprep.subr.mxu0 0.0
  %609 = vmatpush1.msra.mxu0 0.0
  %610 = vmatprep.subr.mxu0 0.0
  %611 = vmatpush1.msra.mxu0 0.0
  %612 = vmatprep.subr.mxu0 0.0
  %613 = vmatpush1.msra.mxu0 0.0
  %614 = vmatprep.subr.mxu0 0.0
  %615 = vmatpush1.msra.mxu0 0.0
  %616 = vmatprep.subr.mxu0 0.0
  %617 = vmatpush1.msra.mxu0 0.0
  %618 = vmatprep.subr.mxu0 0.0
  %619 = vmatpush1.msra.mxu0 0.0
  %620 = vmatprep.subr.mxu0 0.0
  %621 = vmatpush1.msra.mxu0 0.0
  %622 = vmatprep.subr.mxu0 0.0
  %623 = vmatpush1.msra.mxu0 0.0
  %624 = vmatprep.subr.mxu0 0.0
  %625 = vmatpush1.msra.mxu0 0.0
  %626 = vmatprep.subr.mxu0 0.0
  %627 = vmatpush1.msra.mxu0 0.0
  %628 = vmatprep.subr.mxu0 0.0
  %629 = vmatpush1.msra.mxu0 0.0
  %630 = vmatprep.subr.mxu0 0.0
  %631 = vmatpush1.msra.mxu0 0.0
  %632 = vmatprep.subr.mxu0 0.0
  %633 = vmatpush1.msra.mxu0 0.0
  %634 = vmatprep.subr.mxu0 0.0
  %635 = vmatpush1.msra.mxu0 %v348
  %636 = vmatprep.subr.mxu0 0.0
  %637 = vmatpush2.msra.mxu0 0.0
  %638 = vmatprep.subr.mxu0 0.0
  %639 = vmatpush2.msra.mxu0 0.0
  %640 = vmatprep.subr.mxu0 0.0
  %641 = vmatpush2.msra.mxu0 0.0
  %642 = vmatprep.subr.mxu0 0.0
  %643 = vmatpush2.msra.mxu0 0.0
  %644 = vmatprep.subr.mxu0 0.0
  %645 = vmatpush2.msra.mxu0 0.0
  %646 = vmatprep.subr.mxu0 0.0
  %647 = vmatpush2.msra.mxu0 0.0
  %648 = vmatprep.subr.mxu0 0.0
  %649 = vmatpush2.msra.mxu0 0.0
  %650 = vmatprep.subr.mxu0 0.0
  %651 = vmatpush2.msra.mxu0 0.0
  %652 = vmatprep.subr.mxu0 0.0
  %653 = vmatpush2.msra.mxu0 0.0
  %654 = vmatprep.subr.mxu0 0.0
  %655 = vmatpush2.msra.mxu0 0.0
  %656 = vmatprep.subr.mxu0 0.0
  %657 = vmatpush2.msra.mxu0 0.0
  %658 = vmatprep.subr.mxu0 0.0
  %659 = vmatpush2.msra.mxu0 0.0
  %660 = vmatprep.subr.mxu0 0.0
  %661 = vmatpush2.msra.mxu0 0.0
  %662 = vmatprep.subr.mxu0 0.0
  %663 = vmatpush2.msra.mxu0 0.0
  %664 = vmatprep.subr.mxu0 0.0
  %665 = vmatpush2.msra.mxu0 0.0
  %666 = vmatprep.subr.mxu0 0.0
  %667 = vmatpush2.msra.mxu0 0.0
  %668 = vmatprep.mubr.f32.mxu0 0.0
  %669 = vmatmul.mubr.f32.gmra.mxu0 %v602
  %v670 = vpop.f32.mrf.mxu0
  %v671 = vadd.f32 0.0, %v670
  %v672 = vpop.f32.mrf.mxu0
  %673 = vdwg.mxu0
  %s674 = scalar_lea.vmem %s3, 8
  %v675 = vld [vmem:[%s674] sm:$0x7f]
  %v677 = vsel %vm114, %v675, 0
  %679 = vmatprep.subr.mxu0 0.0
  %680 = vmatpush1.msra.mxu0 0.0
  %681 = vmatprep.subr.mxu0 0.0
  %682 = vmatpush1.msra.mxu0 0.0
  %683 = vmatprep.subr.mxu0 0.0
  %684 = vmatpush1.msra.mxu0 0.0
  %685 = vmatprep.subr.mxu0 0.0
  %686 = vmatpush1.msra.mxu0 0.0
  %687 = vmatprep.subr.mxu0 0.0
  %688 = vmatpush1.msra.mxu0 0.0
  %689 = vmatprep.subr.mxu0 0.0
  %690 = vmatpush1.msra.mxu0 0.0
  %691 = vmatprep.subr.mxu0 0.0
  %692 = vmatpush1.msra.mxu0 0.0
  %693 = vmatprep.subr.mxu0 0.0
  %694 = vmatpush1.msra.mxu0 0.0
  %695 = vmatprep.subr.mxu0 0.0
  %696 = vmatpush1.msra.mxu0 0.0
  %697 = vmatprep.subr.mxu0 0.0
  %698 = vmatpush1.msra.mxu0 0.0
  %699 = vmatprep.subr.mxu0 0.0
  %700 = vmatpush1.msra.mxu0 0.0
  %701 = vmatprep.subr.mxu0 0.0
  %702 = vmatpush1.msra.mxu0 0.0
  %703 = vmatprep.subr.mxu0 0.0
  %704 = vmatpush1.msra.mxu0 0.0
  %705 = vmatprep.subr.mxu0 0.0
  %706 = vmatpush1.msra.mxu0 0.0
  %707 = vmatprep.subr.mxu0 0.0
  %708 = vmatpush1.msra.mxu0 0.0
  %709 = vmatprep.subr.mxu0 0.0
  %710 = vmatpush1.msra.mxu0 %v677
  %711 = vmatprep.subr.mxu0 0.0
  %712 = vmatpush2.msra.mxu0 0.0
  %713 = vmatprep.subr.mxu0 0.0
  %714 = vmatpush2.msra.mxu0 0.0
  %715 = vmatprep.subr.mxu0 0.0
  %716 = vmatpush2.msra.mxu0 0.0
  %717 = vmatprep.subr.mxu0 0.0
  %718 = vmatpush2.msra.mxu0 0.0
  %719 = vmatprep.subr.mxu0 0.0
  %720 = vmatpush2.msra.mxu0 0.0
  %721 = vmatprep.subr.mxu0 0.0
  %722 = vmatpush2.msra.mxu0 0.0
  %723 = vmatprep.subr.mxu0 0.0
  %724 = vmatpush2.msra.mxu0 0.0
  %725 = vmatprep.subr.mxu0 0.0
  %726 = vmatpush2.msra.mxu0 0.0
  %727 = vmatprep.subr.mxu0 0.0
  %728 = vmatpush2.msra.mxu0 0.0
  %729 = vmatprep.subr.mxu0 0.0
  %730 = vmatpush2.msra.mxu0 0.0
  %731 = vmatprep.subr.mxu0 0.0
  %732 = vmatpush2.msra.mxu0 0.0
  %733 = vmatprep.subr.mxu0 0.0
  %734 = vmatpush2.msra.mxu0 0.0
  %735 = vmatprep.subr.mxu0 0.0
  %736 = vmatpush2.msra.mxu0 0.0
  %737 = vmatprep.subr.mxu0 0.0
  %738 = vmatpush2.msra.mxu0 0.0
  %739 = vmatprep.subr.mxu0 0.0
  %740 = vmatpush2.msra.mxu0 0.0
  %741 = vmatprep.subr.mxu0 0.0
  %742 = vmatpush2.msra.mxu0 0.0
  %743 = vmatprep.mubr.f32.mxu0 0.0
  %744 = vmatmul.mubr.f32.gmra.mxu0 %v109
  %v745 = vpop.f32.mrf.mxu0
  %v746 = vadd.f32 0.0, %v745
  %v747 = vpop.f32.mrf.mxu0
  %748 = vmatprep.mubr.f32.mxu0 0.0
  %749 = vmatmul.mubr.f32.gmra.mxu0 %v112
  %v750 = vpop.f32.mrf.mxu0
  %v751 = vadd.f32 0.0, %v750
  %v752 = vpop.f32.mrf.mxu0
  %753 = vdwg.mxu0
  %s754 = scalar_lea.vmem %s4, 8
  %v755 = vld [vmem:[%s754] sm:$0x7f]
  %v757 = vsel %vm114, %v755, 0
  %759 = vmatprep.subr.mxu0 0.0
  %760 = vmatpush1.msra.mxu0 0.0
  %761 = vmatprep.subr.mxu0 0.0
  %762 = vmatpush1.msra.mxu0 0.0
  %763 = vmatprep.subr.mxu0 0.0
  %764 = vmatpush1.msra.mxu0 0.0
  %765 = vmatprep.subr.mxu0 0.0
  %766 = vmatpush1.msra.mxu0 0.0
  %767 = vmatprep.subr.mxu0 0.0
  %768 = vmatpush1.msra.mxu0 0.0
  %769 = vmatprep.subr.mxu0 0.0
  %770 = vmatpush1.msra.mxu0 0.0
  %771 = vmatprep.subr.mxu0 0.0
  %772 = vmatpush1.msra.mxu0 0.0
  %773 = vmatprep.subr.mxu0 0.0
  %774 = vmatpush1.msra.mxu0 0.0
  %775 = vmatprep.subr.mxu0 0.0
  %776 = vmatpush1.msra.mxu0 0.0
  %777 = vmatprep.subr.mxu0 0.0
  %778 = vmatpush1.msra.mxu0 0.0
  %779 = vmatprep.subr.mxu0 0.0
  %780 = vmatpush1.msra.mxu0 0.0
  %781 = vmatprep.subr.mxu0 0.0
  %782 = vmatpush1.msra.mxu0 0.0
  %783 = vmatprep.subr.mxu0 0.0
  %784 = vmatpush1.msra.mxu0 0.0
  %785 = vmatprep.subr.mxu0 0.0
  %786 = vmatpush1.msra.mxu0 0.0
  %787 = vmatprep.subr.mxu0 0.0
  %788 = vmatpush1.msra.mxu0 0.0
  %789 = vmatprep.subr.mxu0 0.0
  %790 = vmatpush1.msra.mxu0 %v757
  %791 = vmatprep.subr.mxu0 0.0
  %792 = vmatpush2.msra.mxu0 0.0
  %793 = vmatprep.subr.mxu0 0.0
  %794 = vmatpush2.msra.mxu0 0.0
  %795 = vmatprep.subr.mxu0 0.0
  %796 = vmatpush2.msra.mxu0 0.0
  %797 = vmatprep.subr.mxu0 0.0
  %798 = vmatpush2.msra.mxu0 0.0
  %799 = vmatprep.subr.mxu0 0.0
  %800 = vmatpush2.msra.mxu0 0.0
  %801 = vmatprep.subr.mxu0 0.0
  %802 = vmatpush2.msra.mxu0 0.0
  %803 = vmatprep.subr.mxu0 0.0
  %804 = vmatpush2.msra.mxu0 0.0
  %805 = vmatprep.subr.mxu0 0.0
  %806 = vmatpush2.msra.mxu0 0.0
  %807 = vmatprep.subr.mxu0 0.0
  %808 = vmatpush2.msra.mxu0 0.0
  %809 = vmatprep.subr.mxu0 0.0
  %810 = vmatpush2.msra.mxu0 0.0
  %811 = vmatprep.subr.mxu0 0.0
  %812 = vmatpush2.msra.mxu0 0.0
  %813 = vmatprep.subr.mxu0 0.0
  %814 = vmatpush2.msra.mxu0 0.0
  %815 = vmatprep.subr.mxu0 0.0
  %816 = vmatpush2.msra.mxu0 0.0
  %817 = vmatprep.subr.mxu0 0.0
  %818 = vmatpush2.msra.mxu0 0.0
  %819 = vmatprep.subr.mxu0 0.0
  %820 = vmatpush2.msra.mxu0 0.0
  %821 = vmatprep.subr.mxu0 0.0
  %822 = vmatpush2.msra.mxu0 0.0
  %823 = vmatprep.mubr.f32.mxu0 0.0
  %824 = vmatmul.mubr.f32.gmra.mxu0 %v109
  %v825 = vpop.f32.mrf.mxu0
  %v826 = vadd.f32 0.0, %v825
  %v827 = vpop.f32.mrf.mxu0
  %828 = vmatprep.mubr.f32.mxu0 0.0
  %829 = vmatmul.mubr.f32.gmra.mxu0 %v112
  %v830 = vpop.f32.mrf.mxu0
  %v831 = vadd.f32 0.0, %v830
  %v832 = vpop.f32.mrf.mxu0
  %833 = vdwg.mxu0
  %s834 = scalar_lea.vmem %s5, 8
  %v835 = vld [vmem:[%s834] sm:$0x7f]
  %v837 = vsel %vm114, %v835, 0
  %839 = vmatprep.subr.mxu0 0.0
  %840 = vmatpush1.msra.mxu0 0.0
  %841 = vmatprep.subr.mxu0 0.0
  %842 = vmatpush1.msra.mxu0 0.0
  %843 = vmatprep.subr.mxu0 0.0
  %844 = vmatpush1.msra.mxu0 0.0
  %845 = vmatprep.subr.mxu0 0.0
  %846 = vmatpush1.msra.mxu0 0.0
  %847 = vmatprep.subr.mxu0 0.0
  %848 = vmatpush1.msra.mxu0 0.0
  %849 = vmatprep.subr.mxu0 0.0
  %850 = vmatpush1.msra.mxu0 0.0
  %851 = vmatprep.subr.mxu0 0.0
  %852 = vmatpush1.msra.mxu0 0.0
  %853 = vmatprep.subr.mxu0 0.0
  %854 = vmatpush1.msra.mxu0 0.0
  %855 = vmatprep.subr.mxu0 0.0
  %856 = vmatpush1.msra.mxu0 0.0
  %857 = vmatprep.subr.mxu0 0.0
  %858 = vmatpush1.msra.mxu0 0.0
  %859 = vmatprep.subr.mxu0 0.0
  %860 = vmatpush1.msra.mxu0 0.0
  %861 = vmatprep.subr.mxu0 0.0
  %862 = vmatpush1.msra.mxu0 0.0
  %863 = vmatprep.subr.mxu0 0.0
  %864 = vmatpush1.msra.mxu0 0.0
  %865 = vmatprep.subr.mxu0 0.0
  %866 = vmatpush1.msra.mxu0 0.0
  %867 = vmatprep.subr.mxu0 0.0
  %868 = vmatpush1.msra.mxu0 0.0
  %869 = vmatprep.subr.mxu0 0.0
  %870 = vmatpush1.msra.mxu0 %v837
  %871 = vmatprep.subr.mxu0 0.0
  %872 = vmatpush2.msra.mxu0 0.0
  %873 = vmatprep.subr.mxu0 0.0
  %874 = vmatpush2.msra.mxu0 0.0
  %875 = vmatprep.subr.mxu0 0.0
  %876 = vmatpush2.msra.mxu0 0.0
  %877 = vmatprep.subr.mxu0 0.0
  %878 = vmatpush2.msra.mxu0 0.0
  %879 = vmatprep.subr.mxu0 0.0
  %880 = vmatpush2.msra.mxu0 0.0
  %881 = vmatprep.subr.mxu0 0.0
  %882 = vmatpush2.msra.mxu0 0.0
  %883 = vmatprep.subr.mxu0 0.0
  %884 = vmatpush2.msra.mxu0 0.0
  %885 = vmatprep.subr.mxu0 0.0
  %886 = vmatpush2.msra.mxu0 0.0
  %887 = vmatprep.subr.mxu0 0.0
  %888 = vmatpush2.msra.mxu0 0.0
  %889 = vmatprep.subr.mxu0 0.0
  %890 = vmatpush2.msra.mxu0 0.0
  %891 = vmatprep.subr.mxu0 0.0
  %892 = vmatpush2.msra.mxu0 0.0
  %893 = vmatprep.subr.mxu0 0.0
  %894 = vmatpush2.msra.mxu0 0.0
  %895 = vmatprep.subr.mxu0 0.0
  %896 = vmatpush2.msra.mxu0 0.0
  %897 = vmatprep.subr.mxu0 0.0
  %898 = vmatpush2.msra.mxu0 0.0
  %899 = vmatprep.subr.mxu0 0.0
  %900 = vmatpush2.msra.mxu0 0.0
  %901 = vmatprep.subr.mxu0 0.0
  %902 = vmatpush2.msra.mxu0 0.0
  %903 = vmatprep.mubr.f32.mxu0 0.0
  %904 = vmatmul.mubr.f32.gmra.mxu0 %v109
  %v905 = vpop.f32.mrf.mxu0
  %v906 = vadd.f32 0.0, %v905
  %v907 = vpop.f32.mrf.mxu0
  %908 = vmatprep.mubr.f32.mxu0 0.0
  %909 = vmatmul.mubr.f32.gmra.mxu0 %v112
  %v910 = vpop.f32.mrf.mxu0
  %v911 = vadd.f32 0.0, %v910
  %v912 = vpop.f32.mrf.mxu0
  %913 = vdwg.mxu0
  %v915 = vsel %vm351, %v746, 0
  %v918 = vsel %vm351, %v826, 0
  %920 = vmatprep.subr.mxu0 0.0
  %921 = vmatpush1.xpose.msra.mxu0 0.0
  %922 = vmatprep.subr.mxu0 0.0
  %923 = vmatpush1.xpose.msra.mxu0 0.0
  %924 = vmatprep.subr.mxu0 0.0
  %925 = vmatpush1.xpose.msra.mxu0 0.0
  %926 = vmatprep.subr.mxu0 0.0
  %927 = vmatpush1.xpose.msra.mxu0 0.0
  %928 = vmatprep.subr.mxu0 0.0
  %929 = vmatpush1.xpose.msra.mxu0 0.0
  %930 = vmatprep.subr.mxu0 0.0
  %931 = vmatpush1.xpose.msra.mxu0 0.0
  %932 = vmatprep.subr.mxu0 0.0
  %933 = vmatpush1.xpose.msra.mxu0 0.0
  %934 = vmatprep.subr.mxu0 0.0
  %935 = vmatpush1.xpose.msra.mxu0 0.0
  %936 = vmatprep.subr.mxu0 0.0
  %937 = vmatpush1.xpose.msra.mxu0 0.0
  %938 = vmatprep.subr.mxu0 0.0
  %939 = vmatpush1.xpose.msra.mxu0 0.0
  %940 = vmatprep.subr.mxu0 0.0
  %941 = vmatpush1.xpose.msra.mxu0 0.0
  %942 = vmatprep.subr.mxu0 0.0
  %943 = vmatpush1.xpose.msra.mxu0 0.0
  %944 = vmatprep.subr.mxu0 0.0
  %945 = vmatpush1.xpose.msra.mxu0 0.0
  %946 = vmatprep.subr.mxu0 0.0
  %947 = vmatpush1.xpose.msra.mxu0 0.0
  %948 = vmatprep.subr.mxu0 0.0
  %949 = vmatpush1.xpose.msra.mxu0 0.0
  %950 = vmatprep.subr.mxu0 0.0
  %951 = vmatpush1.xpose.msra.mxu0 %v918
  %952 = vmatprep.subr.mxu0 0.0
  %953 = vmatpush2.xpose.msra.mxu0 0.0
  %954 = vmatprep.subr.mxu0 0.0
  %955 = vmatpush2.xpose.msra.mxu0 0.0
  %956 = vmatprep.subr.mxu0 0.0
  %957 = vmatpush2.xpose.msra.mxu0 0.0
  %958 = vmatprep.subr.mxu0 0.0
  %959 = vmatpush2.xpose.msra.mxu0 0.0
  %960 = vmatprep.subr.mxu0 0.0
  %961 = vmatpush2.xpose.msra.mxu0 0.0
  %962 = vmatprep.subr.mxu0 0.0
  %963 = vmatpush2.xpose.msra.mxu0 0.0
  %964 = vmatprep.subr.mxu0 0.0
  %965 = vmatpush2.xpose.msra.mxu0 0.0
  %966 = vmatprep.subr.mxu0 0.0
  %967 = vmatpush2.xpose.msra.mxu0 0.0
  %968 = vmatprep.subr.mxu0 0.0
  %969 = vmatpush2.xpose.msra.mxu0 0.0
  %970 = vmatprep.subr.mxu0 0.0
  %971 = vmatpush2.xpose.msra.mxu0 0.0
  %972 = vmatprep.subr.mxu0 0.0
  %973 = vmatpush2.xpose.msra.mxu0 0.0
  %974 = vmatprep.subr.mxu0 0.0
  %975 = vmatpush2.xpose.msra.mxu0 0.0
  %976 = vmatprep.subr.mxu0 0.0
  %977 = vmatpush2.xpose.msra.mxu0 0.0
  %978 = vmatprep.subr.mxu0 0.0
  %979 = vmatpush2.xpose.msra.mxu0 0.0
  %980 = vmatprep.subr.mxu0 0.0
  %981 = vmatpush2.xpose.msra.mxu0 0.0
  %982 = vmatprep.subr.mxu0 0.0
  %983 = vmatpush2.xpose.msra.mxu0 0.0
  %984 = vmatprep.mubr.f32.mxu0 0.0
  %985 = vmatmul.mubr.f32.gmra.mxu0 %v915
  %v986 = vpop.f32.mrf.mxu0
  %v987 = vadd.f32 0.0, %v986
  %v988 = vpop.f32.mrf.mxu0
  %989 = vdwg.mxu0
  %v990 = vsel %vm428, %v987, -inf
  %991 = vmax.xlane.f32.xlu0 %v990
  %v992 = vpop.xlane.xlu0 %991
  %v993 = vsub.f32 %v987, %v992
  %v994 = vmul.f32 %v993, 1.442695
  %v995 = vpow.pop %v994
  %v996 = vsel %vm428, %v995, 0.0
  %997 = vadd.xlane.f32.xlu0 %v996
  %v998 = vpop.xlane.xlu0 %997
  %v999 = vrcp.pop %v998
  %v1000 = vmul.f32 %v995, %v999
  %v1002 = vsel %vm428, %v1000, 0
  %1004 = vmatprep.subr.mxu0 0.0
  %1005 = vmatpush1.msra.mxu0 0.0
  %1006 = vmatprep.subr.mxu0 0.0
  %1007 = vmatpush1.msra.mxu0 0.0
  %1008 = vmatprep.subr.mxu0 0.0
  %1009 = vmatpush1.msra.mxu0 0.0
  %1010 = vmatprep.subr.mxu0 0.0
  %1011 = vmatpush1.msra.mxu0 0.0
  %1012 = vmatprep.subr.mxu0 0.0
  %1013 = vmatpush1.msra.mxu0 0.0
  %1014 = vmatprep.subr.mxu0 0.0
  %1015 = vmatpush1.msra.mxu0 0.0
  %1016 = vmatprep.subr.mxu0 0.0
  %1017 = vmatpush1.msra.mxu0 0.0
  %1018 = vmatprep.subr.mxu0 0.0
  %1019 = vmatpush1.msra.mxu0 0.0
  %1020 = vmatprep.subr.mxu0 0.0
  %1021 = vmatpush1.msra.mxu0 0.0
  %1022 = vmatprep.subr.mxu0 0.0
  %1023 = vmatpush1.msra.mxu0 0.0
  %1024 = vmatprep.subr.mxu0 0.0
  %1025 = vmatpush1.msra.mxu0 0.0
  %1026 = vmatprep.subr.mxu0 0.0
  %1027 = vmatpush1.msra.mxu0 0.0
  %1028 = vmatprep.subr.mxu0 0.0
  %1029 = vmatpush1.msra.mxu0 0.0
  %1030 = vmatprep.subr.mxu0 0.0
  %1031 = vmatpush1.msra.mxu0 0.0
  %1032 = vmatprep.subr.mxu0 0.0
  %1033 = vmatpush1.msra.mxu0 0.0
  %1034 = vmatprep.subr.mxu0 0.0
  %1035 = vmatpush1.msra.mxu0 %v906
  %1036 = vmatprep.subr.mxu0 0.0
  %1037 = vmatpush2.msra.mxu0 0.0
  %1038 = vmatprep.subr.mxu0 0.0
  %1039 = vmatpush2.msra.mxu0 0.0
  %1040 = vmatprep.subr.mxu0 0.0
  %1041 = vmatpush2.msra.mxu0 0.0
  %1042 = vmatprep.subr.mxu0 0.0
  %1043 = vmatpush2.msra.mxu0 0.0
  %1044 = vmatprep.subr.mxu0 0.0
  %1045 = vmatpush2.msra.mxu0 0.0
  %1046 = vmatprep.subr.mxu0 0.0
  %1047 = vmatpush2.msra.mxu0 0.0
  %1048 = vmatprep.subr.mxu0 0.0
  %1049 = vmatpush2.msra.mxu0 0.0
  %1050 = vmatprep.subr.mxu0 0.0
  %1051 = vmatpush2.msra.mxu0 0.0
  %1052 = vmatprep.subr.mxu0 0.0
  %1053 = vmatpush2.msra.mxu0 0.0
  %1054 = vmatprep.subr.mxu0 0.0
  %1055 = vmatpush2.msra.mxu0 0.0
  %1056 = vmatprep.subr.mxu0 0.0
  %1057 = vmatpush2.msra.mxu0 0.0
  %1058 = vmatprep.subr.mxu0 0.0
  %1059 = vmatpush2.msra.mxu0 0.0
  %1060 = vmatprep.subr.mxu0 0.0
  %1061 = vmatpush2.msra.mxu0 0.0
  %1062 = vmatprep.subr.mxu0 0.0
  %1063 = vmatpush2.msra.mxu0 0.0
  %1064 = vmatprep.subr.mxu0 0.0
  %1065 = vmatpush2.msra.mxu0 0.0
  %1066 = vmatprep.subr.mxu0 0.0
  %1067 = vmatpush2.msra.mxu0 0.0
  %1068 = vmatprep.mubr.f32.mxu0 0.0
  %1069 = vmatmul.mubr.f32.gmra.mxu0 %v1002
  %v1070 = vpop.f32.mrf.mxu0
  %v1071 = vadd.f32 0.0, %v1070
  %v1072 = vpop.f32.mrf.mxu0
  %1073 = vdwg.mxu0
  %s1074 = scalar_lea.vmem %s6, 4
  %v1075 = vld [vmem:[%s1074] sm:$0xf]
  %v1077 = vsel %vm351, %v1071, 0
  %vm1079 = vcmask 1043456
  %v1081 = vsel %vm1079, %v1075, 0
  %1083 = vmatprep.subr.mxu0 0.0
  %1084 = vmatpush1.msra.mxu0 0.0
  %1085 = vmatprep.subr.mxu0 0.0
  %1086 = vmatpush1.msra.mxu0 0.0
  %1087 = vmatprep.subr.mxu0 0.0
  %1088 = vmatpush1.msra.mxu0 0.0
  %1089 = vmatprep.subr.mxu0 0.0
  %1090 = vmatpush1.msra.mxu0 0.0
  %1091 = vmatprep.subr.mxu0 0.0
  %1092 = vmatpush1.msra.mxu0 0.0
  %1093 = vmatprep.subr.mxu0 0.0
  %1094 = vmatpush1.msra.mxu0 0.0
  %1095 = vmatprep.subr.mxu0 0.0
  %1096 = vmatpush1.msra.mxu0 0.0
  %1097 = vmatprep.subr.mxu0 0.0
  %1098 = vmatpush1.msra.mxu0 0.0
  %1099 = vmatprep.subr.mxu0 0.0
  %1100 = vmatpush1.msra.mxu0 0.0
  %1101 = vmatprep.subr.mxu0 0.0
  %1102 = vmatpush1.msra.mxu0 0.0
  %1103 = vmatprep.subr.mxu0 0.0
  %1104 = vmatpush1.msra.mxu0 0.0
  %1105 = vmatprep.subr.mxu0 0.0
  %1106 = vmatpush1.msra.mxu0 0.0
  %1107 = vmatprep.subr.mxu0 0.0
  %1108 = vmatpush1.msra.mxu0 0.0
  %1109 = vmatprep.subr.mxu0 0.0
  %1110 = vmatpush1.msra.mxu0 0.0
  %1111 = vmatprep.subr.mxu0 0.0
  %1112 = vmatpush1.msra.mxu0 0.0
  %1113 = vmatprep.subr.mxu0 0.0
  %1114 = vmatpush1.msra.mxu0 %v1081
  %1115 = vmatprep.subr.mxu0 0.0
  %1116 = vmatpush2.msra.mxu0 0.0
  %1117 = vmatprep.subr.mxu0 0.0
  %1118 = vmatpush2.msra.mxu0 0.0
  %1119 = vmatprep.subr.mxu0 0.0
  %1120 = vmatpush2.msra.mxu0 0.0
  %1121 = vmatprep.subr.mxu0 0.0
  %1122 = vmatpush2.msra.mxu0 0.0
  %1123 = vmatprep.subr.mxu0 0.0
  %1124 = vmatpush2.msra.mxu0 0.0
  %1125 = vmatprep.subr.mxu0 0.0
  %1126 = vmatpush2.msra.mxu0 0.0
  %1127 = vmatprep.subr.mxu0 0.0
  %1128 = vmatpush2.msra.mxu0 0.0
  %1129 = vmatprep.subr.mxu0 0.0
  %1130 = vmatpush2.msra.mxu0 0.0
  %1131 = vmatprep.subr.mxu0 0.0
  %1132 = vmatpush2.msra.mxu0 0.0
  %1133 = vmatprep.subr.mxu0 0.0
  %1134 = vmatpush2.msra.mxu0 0.0
  %1135 = vmatprep.subr.mxu0 0.0
  %1136 = vmatpush2.msra.mxu0 0.0
  %1137 = vmatprep.subr.mxu0 0.0
  %1138 = vmatpush2.msra.mxu0 0.0
  %1139 = vmatprep.subr.mxu0 0.0
  %1140 = vmatpush2.msra.mxu0 0.0
  %1141 = vmatprep.subr.mxu0 0.0
  %1142 = vmatpush2.msra.mxu0 0.0
  %1143 = vmatprep.subr.mxu0 0.0
  %1144 = vmatpush2.msra.mxu0 0.0
  %1145 = vmatprep.subr.mxu0 0.0
  %1146 = vmatpush2.msra.mxu0 0.0
  %1147 = vmatprep.mubr.f32.mxu0 0.0
  %1148 = vmatmul.mubr.f32.gmra.mxu0 %v1077
  %v1149 = vpop.f32.mrf.mxu0
  %v1150 = vadd.f32 0.0, %v1149
  %v1151 = vpop.f32.mrf.mxu0
  %1152 = vdwg.mxu0
  %v1154 = vsel %vm351, %v510, 0
  %v1157 = vsel %vm1079, %v513, 0
  %1159 = vmatprep.subr.mxu0 0.0
  %1160 = vmatpush1.msra.mxu0 0.0
  %1161 = vmatprep.subr.mxu0 0.0
  %1162 = vmatpush1.msra.mxu0 0.0
  %1163 = vmatprep.subr.mxu0 0.0
  %1164 = vmatpush1.msra.mxu0 0.0
  %1165 = vmatprep.subr.mxu0 0.0
  %1166 = vmatpush1.msra.mxu0 0.0
  %1167 = vmatprep.subr.mxu0 0.0
  %1168 = vmatpush1.msra.mxu0 0.0
  %1169 = vmatprep.subr.mxu0 0.0
  %1170 = vmatpush1.msra.mxu0 0.0
  %1171 = vmatprep.subr.mxu0 0.0
  %1172 = vmatpush1.msra.mxu0 0.0
  %1173 = vmatprep.subr.mxu0 0.0
  %1174 = vmatpush1.msra.mxu0 0.0
  %1175 = vmatprep.subr.mxu0 0.0
  %1176 = vmatpush1.msra.mxu0 0.0
  %1177 = vmatprep.subr.mxu0 0.0
  %1178 = vmatpush1.msra.mxu0 0.0
  %1179 = vmatprep.subr.mxu0 0.0
  %1180 = vmatpush1.msra.mxu0 0.0
  %1181 = vmatprep.subr.mxu0 0.0
  %1182 = vmatpush1.msra.mxu0 0.0
  %1183 = vmatprep.subr.mxu0 0.0
  %1184 = vmatpush1.msra.mxu0 0.0
  %1185 = vmatprep.subr.mxu0 0.0
  %1186 = vmatpush1.msra.mxu0 0.0
  %1187 = vmatprep.subr.mxu0 0.0
  %1188 = vmatpush1.msra.mxu0 0.0
  %1189 = vmatprep.subr.mxu0 0.0
  %1190 = vmatpush1.msra.mxu0 %v1157
  %1191 = vmatprep.subr.mxu0 0.0
  %1192 = vmatpush2.msra.mxu0 0.0
  %1193 = vmatprep.subr.mxu0 0.0
  %1194 = vmatpush2.msra.mxu0 0.0
  %1195 = vmatprep.subr.mxu0 0.0
  %1196 = vmatpush2.msra.mxu0 0.0
  %1197 = vmatprep.subr.mxu0 0.0
  %1198 = vmatpush2.msra.mxu0 0.0
  %1199 = vmatprep.subr.mxu0 0.0
  %1200 = vmatpush2.msra.mxu0 0.0
  %1201 = vmatprep.subr.mxu0 0.0
  %1202 = vmatpush2.msra.mxu0 0.0
  %1203 = vmatprep.subr.mxu0 0.0
  %1204 = vmatpush2.msra.mxu0 0.0
  %1205 = vmatprep.subr.mxu0 0.0
  %1206 = vmatpush2.msra.mxu0 0.0
  %1207 = vmatprep.subr.mxu0 0.0
  %1208 = vmatpush2.msra.mxu0 0.0
  %1209 = vmatprep.subr.mxu0 0.0
  %1210 = vmatpush2.msra.mxu0 0.0
  %1211 = vmatprep.subr.mxu0 0.0
  %1212 = vmatpush2.msra.mxu0 0.0
  %1213 = vmatprep.subr.mxu0 0.0
  %1214 = vmatpush2.msra.mxu0 0.0
  %1215 = vmatprep.subr.mxu0 0.0
  %1216 = vmatpush2.msra.mxu0 0.0
  %1217 = vmatprep.subr.mxu0 0.0
  %1218 = vmatpush2.msra.mxu0 0.0
  %1219 = vmatprep.subr.mxu0 0.0
  %1220 = vmatpush2.msra.mxu0 0.0
  %1221 = vmatprep.subr.mxu0 0.0
  %1222 = vmatpush2.msra.mxu0 0.0
  %1223 = vmatprep.mubr.f32.mxu0 0.0
  %1224 = vmatmul.mubr.f32.gmra.mxu0 %v1154
  %v1225 = vpop.f32.mrf.mxu0
  %v1226 = vadd.f32 %v1150, %v1225
  %v1227 = vpop.f32.mrf.mxu0
  %1228 = vdwg.mxu0
  %v1230 = vsel %vm351, %v751, 0
  %v1233 = vsel %vm351, %v831, 0
  %1235 = vmatprep.subr.mxu0 0.0
  %1236 = vmatpush1.xpose.msra.mxu0 0.0
  %1237 = vmatprep.subr.mxu0 0.0
  %1238 = vmatpush1.xpose.msra.mxu0 0.0
  %1239 = vmatprep.subr.mxu0 0.0
  %1240 = vmatpush1.xpose.msra.mxu0 0.0
  %1241 = vmatprep.subr.mxu0 0.0
  %1242 = vmatpush1.xpose.msra.mxu0 0.0
  %1243 = vmatprep.subr.mxu0 0.0
  %1244 = vmatpush1.xpose.msra.mxu0 0.0
  %1245 = vmatprep.subr.mxu0 0.0
  %1246 = vmatpush1.xpose.msra.mxu0 0.0
  %1247 = vmatprep.subr.mxu0 0.0
  %1248 = vmatpush1.xpose.msra.mxu0 0.0
  %1249 = vmatprep.subr.mxu0 0.0
  %1250 = vmatpush1.xpose.msra.mxu0 0.0
  %1251 = vmatprep.subr.mxu0 0.0
  %1252 = vmatpush1.xpose.msra.mxu0 0.0
  %1253 = vmatprep.subr.mxu0 0.0
  %1254 = vmatpush1.xpose.msra.mxu0 0.0
  %1255 = vmatprep.subr.mxu0 0.0
  %1256 = vmatpush1.xpose.msra.mxu0 0.0
  %1257 = vmatprep.subr.mxu0 0.0
  %1258 = vmatpush1.xpose.msra.mxu0 0.0
  %1259 = vmatprep.subr.mxu0 0.0
  %1260 = vmatpush1.xpose.msra.mxu0 0.0
  %1261 = vmatprep.subr.mxu0 0.0
  %1262 = vmatpush1.xpose.msra.mxu0 0.0
  %1263 = vmatprep.subr.mxu0 0.0
  %1264 = vmatpush1.xpose.msra.mxu0 0.0
  %1265 = vmatprep.subr.mxu0 0.0
  %1266 = vmatpush1.xpose.msra.mxu0 %v1233
  %1267 = vmatprep.subr.mxu0 0.0
  %1268 = vmatpush2.xpose.msra.mxu0 0.0
  %1269 = vmatprep.subr.mxu0 0.0
  %1270 = vmatpush2.xpose.msra.mxu0 0.0
  %1271 = vmatprep.subr.mxu0 0.0
  %1272 = vmatpush2.xpose.msra.mxu0 0.0
  %1273 = vmatprep.subr.mxu0 0.0
  %1274 = vmatpush2.xpose.msra.mxu0 0.0
  %1275 = vmatprep.subr.mxu0 0.0
  %1276 = vmatpush2.xpose.msra.mxu0 0.0
  %1277 = vmatprep.subr.mxu0 0.0
  %1278 = vmatpush2.xpose.msra.mxu0 0.0
  %1279 = vmatprep.subr.mxu0 0.0
  %1280 = vmatpush2.xpose.msra.mxu0 0.0
  %1281 = vmatprep.subr.mxu0 0.0
  %1282 = vmatpush2.xpose.msra.mxu0 0.0
  %1283 = vmatprep.subr.mxu0 0.0
  %1284 = vmatpush2.xpose.msra.mxu0 0.0
  %1285 = vmatprep.subr.mxu0 0.0
  %1286 = vmatpush2.xpose.msra.mxu0 0.0
  %1287 = vmatprep.subr.mxu0 0.0
  %1288 = vmatpush2.xpose.msra.mxu0 0.0
  %1289 = vmatprep.subr.mxu0 0.0
  %1290 = vmatpush2.xpose.msra.mxu0 0.0
  %1291 = vmatprep.subr.mxu0 0.0
  %1292 = vmatpush2.xpose.msra.mxu0 0.0
  %1293 = vmatprep.subr.mxu0 0.0
  %1294 = vmatpush2.xpose.msra.mxu0 0.0
  %1295 = vmatprep.subr.mxu0 0.0
  %1296 = vmatpush2.xpose.msra.mxu0 0.0
  %1297 = vmatprep.subr.mxu0 0.0
  %1298 = vmatpush2.xpose.msra.mxu0 0.0
  %1299 = vmatprep.mubr.f32.mxu0 0.0
  %1300 = vmatmul.mubr.f32.gmra.mxu0 %v1230
  %v1301 = vpop.f32.mrf.mxu0
  %v1302 = vadd.f32 0.0, %v1301
  %v1303 = vpop.f32.mrf.mxu0
  %1304 = vdwg.mxu0
  %v1305 = vsel %vm428, %v1302, -inf
  %1306 = vmax.xlane.f32.xlu0 %v1305
  %v1307 = vpop.xlane.xlu0 %1306
  %v1308 = vsub.f32 %v1302, %v1307
  %v1309 = vmul.f32 %v1308, 1.442695
  %v1310 = vpow.pop %v1309
  %v1311 = vsel %vm428, %v1310, 0.0
  %1312 = vadd.xlane.f32.xlu0 %v1311
  %v1313 = vpop.xlane.xlu0 %1312
  %v1314 = vrcp.pop %v1313
  %v1315 = vmul.f32 %v1310, %v1314
  %v1317 = vsel %vm428, %v1315, 0
  %1319 = vmatprep.subr.mxu0 0.0
  %1320 = vmatpush1.msra.mxu0 0.0
  %1321 = vmatprep.subr.mxu0 0.0
  %1322 = vmatpush1.msra.mxu0 0.0
  %1323 = vmatprep.subr.mxu0 0.0
  %1324 = vmatpush1.msra.mxu0 0.0
  %1325 = vmatprep.subr.mxu0 0.0
  %1326 = vmatpush1.msra.mxu0 0.0
  %1327 = vmatprep.subr.mxu0 0.0
  %1328 = vmatpush1.msra.mxu0 0.0
  %1329 = vmatprep.subr.mxu0 0.0
  %1330 = vmatpush1.msra.mxu0 0.0
  %1331 = vmatprep.subr.mxu0 0.0
  %1332 = vmatpush1.msra.mxu0 0.0
  %1333 = vmatprep.subr.mxu0 0.0
  %1334 = vmatpush1.msra.mxu0 0.0
  %1335 = vmatprep.subr.mxu0 0.0
  %1336 = vmatpush1.msra.mxu0 0.0
  %1337 = vmatprep.subr.mxu0 0.0
  %1338 = vmatpush1.msra.mxu0 0.0
  %1339 = vmatprep.subr.mxu0 0.0
  %1340 = vmatpush1.msra.mxu0 0.0
  %1341 = vmatprep.subr.mxu0 0.0
  %1342 = vmatpush1.msra.mxu0 0.0
  %1343 = vmatprep.subr.mxu0 0.0
  %1344 = vmatpush1.msra.mxu0 0.0
  %1345 = vmatprep.subr.mxu0 0.0
  %1346 = vmatpush1.msra.mxu0 0.0
  %1347 = vmatprep.subr.mxu0 0.0
  %1348 = vmatpush1.msra.mxu0 0.0
  %1349 = vmatprep.subr.mxu0 0.0
  %1350 = vmatpush1.msra.mxu0 %v911
  %1351 = vmatprep.subr.mxu0 0.0
  %1352 = vmatpush2.msra.mxu0 0.0
  %1353 = vmatprep.subr.mxu0 0.0
  %1354 = vmatpush2.msra.mxu0 0.0
  %1355 = vmatprep.subr.mxu0 0.0
  %1356 = vmatpush2.msra.mxu0 0.0
  %1357 = vmatprep.subr.mxu0 0.0
  %1358 = vmatpush2.msra.mxu0 0.0
  %1359 = vmatprep.subr.mxu0 0.0
  %1360 = vmatpush2.msra.mxu0 0.0
  %1361 = vmatprep.subr.mxu0 0.0
  %1362 = vmatpush2.msra.mxu0 0.0
  %1363 = vmatprep.subr.mxu0 0.0
  %1364 = vmatpush2.msra.mxu0 0.0
  %1365 = vmatprep.subr.mxu0 0.0
  %1366 = vmatpush2.msra.mxu0 0.0
  %1367 = vmatprep.subr.mxu0 0.0
  %1368 = vmatpush2.msra.mxu0 0.0
  %1369 = vmatprep.subr.mxu0 0.0
  %1370 = vmatpush2.msra.mxu0 0.0
  %1371 = vmatprep.subr.mxu0 0.0
  %1372 = vmatpush2.msra.mxu0 0.0
  %1373 = vmatprep.subr.mxu0 0.0
  %1374 = vmatpush2.msra.mxu0 0.0
  %1375 = vmatprep.subr.mxu0 0.0
  %1376 = vmatpush2.msra.mxu0 0.0
  %1377 = vmatprep.subr.mxu0 0.0
  %1378 = vmatpush2.msra.mxu0 0.0
  %1379 = vmatprep.subr.mxu0 0.0
  %1380 = vmatpush2.msra.mxu0 0.0
  %1381 = vmatprep.subr.mxu0 0.0
  %1382 = vmatpush2.msra.mxu0 0.0
  %1383 = vmatprep.mubr.f32.mxu0 0.0
  %1384 = vmatmul.mubr.f32.gmra.mxu0 %v1317
  %v1385 = vpop.f32.mrf.mxu0
  %v1386 = vadd.f32 0.0, %v1385
  %v1387 = vpop.f32.mrf.mxu0
  %1388 = vdwg.mxu0
  %v1390 = vsel %vm351, %v1386, 0
  %1392 = vmatprep.subr.mxu0 0.0
  %1393 = vmatpush1.msra.mxu0 0.0
  %1394 = vmatprep.subr.mxu0 0.0
  %1395 = vmatpush1.msra.mxu0 0.0
  %1396 = vmatprep.subr.mxu0 0.0
  %1397 = vmatpush1.msra.mxu0 0.0
  %1398 = vmatprep.subr.mxu0 0.0
  %1399 = vmatpush1.msra.mxu0 0.0
  %1400 = vmatprep.subr.mxu0 0.0
  %1401 = vmatpush1.msra.mxu0 0.0
  %1402 = vmatprep.subr.mxu0 0.0
  %1403 = vmatpush1.msra.mxu0 0.0
  %1404 = vmatprep.subr.mxu0 0.0
  %1405 = vmatpush1.msra.mxu0 0.0
  %1406 = vmatprep.subr.mxu0 0.0
  %1407 = vmatpush1.msra.mxu0 0.0
  %1408 = vmatprep.subr.mxu0 0.0
  %1409 = vmatpush1.msra.mxu0 0.0
  %1410 = vmatprep.subr.mxu0 0.0
  %1411 = vmatpush1.msra.mxu0 0.0
  %1412 = vmatprep.subr.mxu0 0.0
  %1413 = vmatpush1.msra.mxu0 0.0
  %1414 = vmatprep.subr.mxu0 0.0
  %1415 = vmatpush1.msra.mxu0 0.0
  %1416 = vmatprep.subr.mxu0 0.0
  %1417 = vmatpush1.msra.mxu0 0.0
  %1418 = vmatprep.subr.mxu0 0.0
  %1419 = vmatpush1.msra.mxu0 0.0
  %1420 = vmatprep.subr.mxu0 0.0
  %1421 = vmatpush1.msra.mxu0 0.0
  %1422 = vmatprep.subr.mxu0 0.0
  %1423 = vmatpush1.msra.mxu0 %v1081
  %1424 = vmatprep.subr.mxu0 0.0
  %1425 = vmatpush2.msra.mxu0 0.0
  %1426 = vmatprep.subr.mxu0 0.0
  %1427 = vmatpush2.msra.mxu0 0.0
  %1428 = vmatprep.subr.mxu0 0.0
  %1429 = vmatpush2.msra.mxu0 0.0
  %1430 = vmatprep.subr.mxu0 0.0
  %1431 = vmatpush2.msra.mxu0 0.0
  %1432 = vmatprep.subr.mxu0 0.0
  %1433 = vmatpush2.msra.mxu0 0.0
  %1434 = vmatprep.subr.mxu0 0.0
  %1435 = vmatpush2.msra.mxu0 0.0
  %1436 = vmatprep.subr.mxu0 0.0
  %1437 = vmatpush2.msra.mxu0 0.0
  %1438 = vmatprep.subr.mxu0 0.0
  %1439 = vmatpush2.msra.mxu0 0.0
  %1440 = vmatprep.subr.mxu0 0.0
  %1441 = vmatpush2.msra.mxu0 0.0
  %1442 = vmatprep.subr.mxu0 0.0
  %1443 = vmatpush2.msra.mxu0 0.0
  %1444 = vmatprep.subr.mxu0 0.0
  %1445 = vmatpush2.msra.mxu0 0.0
  %1446 = vmatprep.subr.mxu0 0.0
  %1447 = vmatpush2.msra.mxu0 0.0
  %1448 = vmatprep.subr.mxu0 0.0
  %1449 = vmatpush2.msra.mxu0 0.0
  %1450 = vmatprep.subr.mxu0 0.0
  %1451 = vmatpush2.msra.mxu0 0.0
  %1452 = vmatprep.subr.mxu0 0.0
  %1453 = vmatpush2.msra.mxu0 0.0
  %1454 = vmatprep.subr.mxu0 0.0
  %1455 = vmatpush2.msra.mxu0 0.0
  %1456 = vmatprep.mubr.f32.mxu0 0.0
  %1457 = vmatmul.mubr.f32.gmra.mxu0 %v1390
  %v1458 = vpop.f32.mrf.mxu0
  %v1459 = vadd.f32 0.0, %v1458
  %v1460 = vpop.f32.mrf.mxu0
  %1461 = vdwg.mxu0
  %v1463 = vsel %vm351, %v671, 0
  %1465 = vmatprep.subr.mxu0 0.0
  %1466 = vmatpush1.msra.mxu0 0.0
  %1467 = vmatprep.subr.mxu0 0.0
  %1468 = vmatpush1.msra.mxu0 0.0
  %1469 = vmatprep.subr.mxu0 0.0
  %1470 = vmatpush1.msra.mxu0 0.0
  %1471 = vmatprep.subr.mxu0 0.0
  %1472 = vmatpush1.msra.mxu0 0.0
  %1473 = vmatprep.subr.mxu0 0.0
  %1474 = vmatpush1.msra.mxu0 0.0
  %1475 = vmatprep.subr.mxu0 0.0
  %1476 = vmatpush1.msra.mxu0 0.0
  %1477 = vmatprep.subr.mxu0 0.0
  %1478 = vmatpush1.msra.mxu0 0.0
  %1479 = vmatprep.subr.mxu0 0.0
  %1480 = vmatpush1.msra.mxu0 0.0
  %1481 = vmatprep.subr.mxu0 0.0
  %1482 = vmatpush1.msra.mxu0 0.0
  %1483 = vmatprep.subr.mxu0 0.0
  %1484 = vmatpush1.msra.mxu0 0.0
  %1485 = vmatprep.subr.mxu0 0.0
  %1486 = vmatpush1.msra.mxu0 0.0
  %1487 = vmatprep.subr.mxu0 0.0
  %1488 = vmatpush1.msra.mxu0 0.0
  %1489 = vmatprep.subr.mxu0 0.0
  %1490 = vmatpush1.msra.mxu0 0.0
  %1491 = vmatprep.subr.mxu0 0.0
  %1492 = vmatpush1.msra.mxu0 0.0
  %1493 = vmatprep.subr.mxu0 0.0
  %1494 = vmatpush1.msra.mxu0 0.0
  %1495 = vmatprep.subr.mxu0 0.0
  %1496 = vmatpush1.msra.mxu0 %v1157
  %1497 = vmatprep.subr.mxu0 0.0
  %1498 = vmatpush2.msra.mxu0 0.0
  %1499 = vmatprep.subr.mxu0 0.0
  %1500 = vmatpush2.msra.mxu0 0.0
  %1501 = vmatprep.subr.mxu0 0.0
  %1502 = vmatpush2.msra.mxu0 0.0
  %1503 = vmatprep.subr.mxu0 0.0
  %1504 = vmatpush2.msra.mxu0 0.0
  %1505 = vmatprep.subr.mxu0 0.0
  %1506 = vmatpush2.msra.mxu0 0.0
  %1507 = vmatprep.subr.mxu0 0.0
  %1508 = vmatpush2.msra.mxu0 0.0
  %1509 = vmatprep.subr.mxu0 0.0
  %1510 = vmatpush2.msra.mxu0 0.0
  %1511 = vmatprep.subr.mxu0 0.0
  %1512 = vmatpush2.msra.mxu0 0.0
  %1513 = vmatprep.subr.mxu0 0.0
  %1514 = vmatpush2.msra.mxu0 0.0
  %1515 = vmatprep.subr.mxu0 0.0
  %1516 = vmatpush2.msra.mxu0 0.0
  %1517 = vmatprep.subr.mxu0 0.0
  %1518 = vmatpush2.msra.mxu0 0.0
  %1519 = vmatprep.subr.mxu0 0.0
  %1520 = vmatpush2.msra.mxu0 0.0
  %1521 = vmatprep.subr.mxu0 0.0
  %1522 = vmatpush2.msra.mxu0 0.0
  %1523 = vmatprep.subr.mxu0 0.0
  %1524 = vmatpush2.msra.mxu0 0.0
  %1525 = vmatprep.subr.mxu0 0.0
  %1526 = vmatpush2.msra.mxu0 0.0
  %1527 = vmatprep.subr.mxu0 0.0
  %1528 = vmatpush2.msra.mxu0 0.0
  %1529 = vmatprep.mubr.f32.mxu0 0.0
  %1530 = vmatmul.mubr.f32.gmra.mxu0 %v1463
  %v1531 = vpop.f32.mrf.mxu0
  %v1532 = vadd.f32 %v1459, %v1531
  %v1533 = vpop.f32.mrf.mxu0
  %1534 = vdwg.mxu0
  %v1535 = vld [vmem:[%s7] sm:$0x1]
  %v1537 = vlaneseq
  %v1538 = vshrl.u32 %v1537, 7
  %v1539 = vsub.s32 0, %v1538
  %v1540 = vrot.slane %v1535, %v1539
  %v1542 = vadd.f32 %v1226, %v1540
  %v1543 = vadd.f32 %v1532, %v1540
  %v1544 = vadd.f32 %v59, %v1542
  %v1545 = vadd.f32 %v60, %v1543
  %v1546 = vld [vmem:[%s8] sm:$0x1]
  %v1547 = vld [vmem:[%s9] sm:$0x1]
  %v1548 = vsel %vm63, %v1544, 0.0
  %1549 = vadd.xlane.f32.xlu0 %v1548
  %v1550 = vpop.xlane.xlu0 %1549
  %v1551 = vsel %vm63, %v1545, 0.0
  %1552 = vadd.xlane.f32.xlu0 %v1551
  %v1553 = vpop.xlane.xlu0 %1552
  %v1554 = vmul.f32 %v1550, %v70
  %v1555 = vmul.f32 %v1553, %v70
  %v1556 = vsub.f32 %v1544, %v1554
  %v1557 = vsub.f32 %v1545, %v1555
  %v1558 = vmul.f32 %v1556, %v1556
  %v1559 = vmul.f32 %v1557, %v1557
  %v1560 = vsel %vm63, %v1558, 0.0
  %1561 = vadd.xlane.f32.xlu0 %v1560
  %v1562 = vpop.xlane.xlu0 %1561
  %v1563 = vsel %vm63, %v1559, 0.0
  %1564 = vadd.xlane.f32.xlu0 %v1563
  %v1565 = vpop.xlane.xlu0 %1564
  %v1566 = vmul.f32 %v1562, %v70
  %v1567 = vmul.f32 %v1565, %v70
  %v1568 = vadd.f32 %v1566, 1e-05
  %v1569 = vadd.f32 %v1567, 1e-05
  %v1570 = vrsqrt.pop %v1568
  %v1571 = vrsqrt.pop %v1569
  %v1572 = vmul.f32 %v1556, %v1570
  %v1573 = vmul.f32 %v1557, %v1571
  %v1575 = vlaneseq
  %v1576 = vshrl.u32 %v1575, 7
  %v1577 = vsub.s32 0, %v1576
  %v1578 = vrot.slane %v1546, %v1577
  %v1580 = vmul.f32 %v1572, %v1578
  %v1581 = vmul.f32 %v1573, %v1578
  %v1583 = vlaneseq
  %v1584 = vshrl.u32 %v1583, 7
  %v1585 = vsub.s32 0, %v1584
  %v1586 = vrot.slane %v1547, %v1585
  %v1588 = vadd.f32 %v1580, %v1586
  %v1589 = vadd.f32 %v1581, %v1586
  %v1590 = vld [vmem:[%s10] sm:$0x7f]
  %v1591 = vld [vmem:[%s11] sm:$0x1]
  %v1593 = vlaneseq
  %v1594 = vshrl.u32 %v1593, 7
  %v1595 = vsub.s32 0, %v1594
  %v1596 = vrot.slane %v1591, %v1595
  %v1599 = vsel %vm63, %v1588, 0
  %v1602 = vsel %vm63, %v1589, 0
  %v1605 = vsel %vm114, %v1590, 0
  %1607 = vmatprep.subr.mxu0 0.0
  %1608 = vmatpush1.msra.mxu0 0.0
  %1609 = vmatprep.subr.mxu0 0.0
  %1610 = vmatpush1.msra.mxu0 0.0
  %1611 = vmatprep.subr.mxu0 0.0
  %1612 = vmatpush1.msra.mxu0 0.0
  %1613 = vmatprep.subr.mxu0 0.0
  %1614 = vmatpush1.msra.mxu0 0.0
  %1615 = vmatprep.subr.mxu0 0.0
  %1616 = vmatpush1.msra.mxu0 0.0
  %1617 = vmatprep.subr.mxu0 0.0
  %1618 = vmatpush1.msra.mxu0 0.0
  %1619 = vmatprep.subr.mxu0 0.0
  %1620 = vmatpush1.msra.mxu0 0.0
  %1621 = vmatprep.subr.mxu0 0.0
  %1622 = vmatpush1.msra.mxu0 0.0
  %1623 = vmatprep.subr.mxu0 0.0
  %1624 = vmatpush1.msra.mxu0 0.0
  %1625 = vmatprep.subr.mxu0 0.0
  %1626 = vmatpush1.msra.mxu0 0.0
  %1627 = vmatprep.subr.mxu0 0.0
  %1628 = vmatpush1.msra.mxu0 0.0
  %1629 = vmatprep.subr.mxu0 0.0
  %1630 = vmatpush1.msra.mxu0 0.0
  %1631 = vmatprep.subr.mxu0 0.0
  %1632 = vmatpush1.msra.mxu0 0.0
  %1633 = vmatprep.subr.mxu0 0.0
  %1634 = vmatpush1.msra.mxu0 0.0
  %1635 = vmatprep.subr.mxu0 0.0
  %1636 = vmatpush1.msra.mxu0 0.0
  %1637 = vmatprep.subr.mxu0 0.0
  %1638 = vmatpush1.msra.mxu0 %v1605
  %1639 = vmatprep.subr.mxu0 0.0
  %1640 = vmatpush2.msra.mxu0 0.0
  %1641 = vmatprep.subr.mxu0 0.0
  %1642 = vmatpush2.msra.mxu0 0.0
  %1643 = vmatprep.subr.mxu0 0.0
  %1644 = vmatpush2.msra.mxu0 0.0
  %1645 = vmatprep.subr.mxu0 0.0
  %1646 = vmatpush2.msra.mxu0 0.0
  %1647 = vmatprep.subr.mxu0 0.0
  %1648 = vmatpush2.msra.mxu0 0.0
  %1649 = vmatprep.subr.mxu0 0.0
  %1650 = vmatpush2.msra.mxu0 0.0
  %1651 = vmatprep.subr.mxu0 0.0
  %1652 = vmatpush2.msra.mxu0 0.0
  %1653 = vmatprep.subr.mxu0 0.0
  %1654 = vmatpush2.msra.mxu0 0.0
  %1655 = vmatprep.subr.mxu0 0.0
  %1656 = vmatpush2.msra.mxu0 0.0
  %1657 = vmatprep.subr.mxu0 0.0
  %1658 = vmatpush2.msra.mxu0 0.0
  %1659 = vmatprep.subr.mxu0 0.0
  %1660 = vmatpush2.msra.mxu0 0.0
  %1661 = vmatprep.subr.mxu0 0.0
  %1662 = vmatpush2.msra.mxu0 0.0
  %1663 = vmatprep.subr.mxu0 0.0
  %1664 = vmatpush2.msra.mxu0 0.0
  %1665 = vmatprep.subr.mxu0 0.0
  %1666 = vmatpush2.msra.mxu0 0.0
  %1667 = vmatprep.subr.mxu0 0.0
  %1668 = vmatpush2.msra.mxu0 0.0
  %1669 = vmatprep.subr.mxu0 0.0
  %1670 = vmatpush2.msra.mxu0 0.0
  %1671 = vmatprep.mubr.f32.mxu0 0.0
  %1672 = vmatmul.mubr.f32.gmra.mxu0 %v1599
  %v1673 = vpop.f32.mrf.mxu0
  %v1674 = vadd.f32 %v1596, %v1673
  %v1675 = vpop.f32.mrf.mxu0
  %1676 = vmatprep.mubr.f32.mxu0 0.0
  %1677 = vmatmul.mubr.f32.gmra.mxu0 %v1602
  %v1678 = vpop.f32.mrf.mxu0
  %v1679 = vadd.f32 %v1596, %v1678
  %v1680 = vpop.f32.mrf.mxu0
  %1681 = vdwg.mxu0
  %v1682 = vmul.f32 %v1674, 0.5
  %v1683 = vmul.f32 %v1679, 0.5
  %v1684 = vmul.f32 %v1674, 0.70710677
  %v1685 = vmul.f32 %v1679, 0.70710677
  %v1686 = verf.f32.pop %v1684
  %v1687 = verf.f32.pop %v1685
  %v1688 = vadd.f32 %v1686, 1.0
  %v1689 = vadd.f32 %v1687, 1.0
  %v1690 = vmul.f32 %v1682, %v1688
  %v1691 = vmul.f32 %v1683, %v1689
  %v1692 = vld [vmem:[%s12] sm:$0xff]
  %v1693 = vld [vmem:[%s12 + $0x8] sm:$0xff]
  %v1694 = vld [vmem:[%s13] sm:$0x1]
  %v1696 = vlaneseq
  %v1697 = vshrl.u32 %v1696, 7
  %v1698 = vsub.s32 0, %v1697
  %v1699 = vrot.slane %v1694, %v1698
  %vm1701 = vcmask 130048
  %v1703 = vsel %vm1701, %v1690, 0
  %v1706 = vsel %vm1701, %v1691, 0
  %1708 = vmatprep.subr.mxu0 0.0
  %1709 = vmatpush1.msra.mxu0 0.0
  %1710 = vmatprep.subr.mxu0 0.0
  %1711 = vmatpush1.msra.mxu0 0.0
  %1712 = vmatprep.subr.mxu0 0.0
  %1713 = vmatpush1.msra.mxu0 0.0
  %1714 = vmatprep.subr.mxu0 0.0
  %1715 = vmatpush1.msra.mxu0 0.0
  %1716 = vmatprep.subr.mxu0 0.0
  %1717 = vmatpush1.msra.mxu0 0.0
  %1718 = vmatprep.subr.mxu0 0.0
  %1719 = vmatpush1.msra.mxu0 0.0
  %1720 = vmatprep.subr.mxu0 0.0
  %1721 = vmatpush1.msra.mxu0 0.0
  %1722 = vmatprep.subr.mxu0 0.0
  %1723 = vmatpush1.msra.mxu0 0.0
  %1724 = vmatprep.subr.mxu0 0.0
  %1725 = vmatpush1.msra.mxu0 0.0
  %1726 = vmatprep.subr.mxu0 0.0
  %1727 = vmatpush1.msra.mxu0 0.0
  %1728 = vmatprep.subr.mxu0 0.0
  %1729 = vmatpush1.msra.mxu0 0.0
  %1730 = vmatprep.subr.mxu0 0.0
  %1731 = vmatpush1.msra.mxu0 0.0
  %1732 = vmatprep.subr.mxu0 0.0
  %1733 = vmatpush1.msra.mxu0 0.0
  %1734 = vmatprep.subr.mxu0 0.0
  %1735 = vmatpush1.msra.mxu0 0.0
  %1736 = vmatprep.subr.mxu0 0.0
  %1737 = vmatpush1.msra.mxu0 %v1693
  %1738 = vmatprep.subr.mxu0 0.0
  %1739 = vmatpush1.msra.mxu0 %v1692
  %1740 = vmatprep.subr.mxu0 0.0
  %1741 = vmatpush2.msra.mxu0 0.0
  %1742 = vmatprep.subr.mxu0 0.0
  %1743 = vmatpush2.msra.mxu0 0.0
  %1744 = vmatprep.subr.mxu0 0.0
  %1745 = vmatpush2.msra.mxu0 0.0
  %1746 = vmatprep.subr.mxu0 0.0
  %1747 = vmatpush2.msra.mxu0 0.0
  %1748 = vmatprep.subr.mxu0 0.0
  %1749 = vmatpush2.msra.mxu0 0.0
  %1750 = vmatprep.subr.mxu0 0.0
  %1751 = vmatpush2.msra.mxu0 0.0
  %1752 = vmatprep.subr.mxu0 0.0
  %1753 = vmatpush2.msra.mxu0 0.0
  %1754 = vmatprep.subr.mxu0 0.0
  %1755 = vmatpush2.msra.mxu0 0.0
  %1756 = vmatprep.subr.mxu0 0.0
  %1757 = vmatpush2.msra.mxu0 0.0
  %1758 = vmatprep.subr.mxu0 0.0
  %1759 = vmatpush2.msra.mxu0 0.0
  %1760 = vmatprep.subr.mxu0 0.0
  %1761 = vmatpush2.msra.mxu0 0.0
  %1762 = vmatprep.subr.mxu0 0.0
  %1763 = vmatpush2.msra.mxu0 0.0
  %1764 = vmatprep.subr.mxu0 0.0
  %1765 = vmatpush2.msra.mxu0 0.0
  %1766 = vmatprep.subr.mxu0 0.0
  %1767 = vmatpush2.msra.mxu0 0.0
  %1768 = vmatprep.subr.mxu0 0.0
  %1769 = vmatpush2.msra.mxu0 0.0
  %1770 = vmatprep.subr.mxu0 0.0
  %1771 = vmatpush2.msra.mxu0 0.0
  %1772 = vmatprep.mubr.f32.mxu0 0.0
  %1773 = vmatmul.mubr.f32.gmra.mxu0 %v1703
  %v1774 = vpop.f32.mrf.mxu0
  %v1775 = vadd.f32 %v1699, %v1774
  %v1776 = vpop.f32.mrf.mxu0
  %1777 = vmatprep.mubr.f32.mxu0 0.0
  %1778 = vmatmul.mubr.f32.gmra.mxu0 %v1706
  %v1779 = vpop.f32.mrf.mxu0
  %v1780 = vadd.f32 %v1699, %v1779
  %v1781 = vpop.f32.mrf.mxu0
  %1782 = vdwg.mxu0
  %v1783 = vld [vmem:[%s14] sm:$0x1]
  %v1784 = vld [vmem:[%s15] sm:$0x1]
  %v1785 = vsel %vm63, %v1775, 0.0
  %1786 = vadd.xlane.f32.xlu0 %v1785
  %v1787 = vpop.xlane.xlu0 %1786
  %v1788 = vsel %vm63, %v1780, 0.0
  %1789 = vadd.xlane.f32.xlu0 %v1788
  %v1790 = vpop.xlane.xlu0 %1789
  %v1791 = vmul.f32 %v1787, %v70
  %v1792 = vmul.f32 %v1790, %v70
  %v1793 = vsub.f32 %v1775, %v1791
  %v1794 = vsub.f32 %v1780, %v1792
  %v1795 = vmul.f32 %v1793, %v1793
  %v1796 = vmul.f32 %v1794, %v1794
  %v1797 = vsel %vm63, %v1795, 0.0
  %1798 = vadd.xlane.f32.xlu0 %v1797
  %v1799 = vpop.xlane.xlu0 %1798
  %v1800 = vsel %vm63, %v1796, 0.0
  %1801 = vadd.xlane.f32.xlu0 %v1800
  %v1802 = vpop.xlane.xlu0 %1801
  %v1803 = vmul.f32 %v1799, %v70
  %v1804 = vmul.f32 %v1802, %v70
  %v1805 = vadd.f32 %v1803, 1e-05
  %v1806 = vadd.f32 %v1804, 1e-05
  %v1807 = vrsqrt.pop %v1805
  %v1808 = vrsqrt.pop %v1806
  %v1809 = vmul.f32 %v1793, %v1807
  %v1810 = vmul.f32 %v1794, %v1808
  %v1812 = vlaneseq
  %v1813 = vshrl.u32 %v1812, 7
  %v1814 = vsub.s32 0, %v1813
  %v1815 = vrot.slane %v1783, %v1814
  %v1817 = vmul.f32 %v1809, %v1815
  %v1818 = vmul.f32 %v1810, %v1815
  %v1820 = vlaneseq
  %v1821 = vshrl.u32 %v1820, 7
  %v1822 = vsub.s32 0, %v1821
  %v1823 = vrot.slane %v1784, %v1822
  %v1825 = vadd.f32 %v1817, %v1823
  %v1826 = vadd.f32 %v1818, %v1823
  %v1827 = vld [vmem:[%s16] sm:$0x7f]
  %v1828 = vld [vmem:[%s17] sm:$0x1]
  %v1830 = vlaneseq
  %v1831 = vshrl.u32 %v1830, 7
  %v1832 = vsub.s32 0, %v1831
  %v1833 = vrot.slane %v1828, %v1832
  %v1836 = vsel %vm63, %v1825, 0
  %v1839 = vsel %vm63, %v1826, 0
  %v1842 = vsel %vm114, %v1827, 0
  %1844 = vmatprep.subr.mxu0 0.0
  %1845 = vmatpush1.msra.mxu0 0.0
  %1846 = vmatprep.subr.mxu0 0.0
  %1847 = vmatpush1.msra.mxu0 0.0
  %1848 = vmatprep.subr.mxu0 0.0
  %1849 = vmatpush1.msra.mxu0 0.0
  %1850 = vmatprep.subr.mxu0 0.0
  %1851 = vmatpush1.msra.mxu0 0.0
  %1852 = vmatprep.subr.mxu0 0.0
  %1853 = vmatpush1.msra.mxu0 0.0
  %1854 = vmatprep.subr.mxu0 0.0
  %1855 = vmatpush1.msra.mxu0 0.0
  %1856 = vmatprep.subr.mxu0 0.0
  %1857 = vmatpush1.msra.mxu0 0.0
  %1858 = vmatprep.subr.mxu0 0.0
  %1859 = vmatpush1.msra.mxu0 0.0
  %1860 = vmatprep.subr.mxu0 0.0
  %1861 = vmatpush1.msra.mxu0 0.0
  %1862 = vmatprep.subr.mxu0 0.0
  %1863 = vmatpush1.msra.mxu0 0.0
  %1864 = vmatprep.subr.mxu0 0.0
  %1865 = vmatpush1.msra.mxu0 0.0
  %1866 = vmatprep.subr.mxu0 0.0
  %1867 = vmatpush1.msra.mxu0 0.0
  %1868 = vmatprep.subr.mxu0 0.0
  %1869 = vmatpush1.msra.mxu0 0.0
  %1870 = vmatprep.subr.mxu0 0.0
  %1871 = vmatpush1.msra.mxu0 0.0
  %1872 = vmatprep.subr.mxu0 0.0
  %1873 = vmatpush1.msra.mxu0 0.0
  %1874 = vmatprep.subr.mxu0 0.0
  %1875 = vmatpush1.msra.mxu0 %v1842
  %1876 = vmatprep.subr.mxu0 0.0
  %1877 = vmatpush2.msra.mxu0 0.0
  %1878 = vmatprep.subr.mxu0 0.0
  %1879 = vmatpush2.msra.mxu0 0.0
  %1880 = vmatprep.subr.mxu0 0.0
  %1881 = vmatpush2.msra.mxu0 0.0
  %1882 = vmatprep.subr.mxu0 0.0
  %1883 = vmatpush2.msra.mxu0 0.0
  %1884 = vmatprep.subr.mxu0 0.0
  %1885 = vmatpush2.msra.mxu0 0.0
  %1886 = vmatprep.subr.mxu0 0.0
  %1887 = vmatpush2.msra.mxu0 0.0
  %1888 = vmatprep.subr.mxu0 0.0
  %1889 = vmatpush2.msra.mxu0 0.0
  %1890 = vmatprep.subr.mxu0 0.0
  %1891 = vmatpush2.msra.mxu0 0.0
  %1892 = vmatprep.subr.mxu0 0.0
  %1893 = vmatpush2.msra.mxu0 0.0
  %1894 = vmatprep.subr.mxu0 0.0
  %1895 = vmatpush2.msra.mxu0 0.0
  %1896 = vmatprep.subr.mxu0 0.0
  %1897 = vmatpush2.msra.mxu0 0.0
  %1898 = vmatprep.subr.mxu0 0.0
  %1899 = vmatpush2.msra.mxu0 0.0
  %1900 = vmatprep.subr.mxu0 0.0
  %1901 = vmatpush2.msra.mxu0 0.0
  %1902 = vmatprep.subr.mxu0 0.0
  %1903 = vmatpush2.msra.mxu0 0.0
  %1904 = vmatprep.subr.mxu0 0.0
  %1905 = vmatpush2.msra.mxu0 0.0
  %1906 = vmatprep.subr.mxu0 0.0
  %1907 = vmatpush2.msra.mxu0 0.0
  %1908 = vmatprep.mubr.f32.mxu0 0.0
  %1909 = vmatmul.mubr.f32.gmra.mxu0 %v1836
  %v1910 = vpop.f32.mrf.mxu0
  %v1911 = vadd.f32 %v1833, %v1910
  %v1912 = vpop.f32.mrf.mxu0
  %1913 = vmatprep.mubr.f32.mxu0 0.0
  %1914 = vmatmul.mubr.f32.gmra.mxu0 %v1839
  %v1915 = vpop.f32.mrf.mxu0
  %v1916 = vadd.f32 %v1833, %v1915
  %v1917 = vpop.f32.mrf.mxu0
  %1918 = vdwg.mxu0
  %v1919 = vadd.f32 %v1544, %v1911
  %v1920 = vadd.f32 %v1545, %v1916
  %s1921 = scalar_lea.vmem %s1, 1
  %v1922 = vld [vmem:[%s1921] sm:$0x1]
  %s1923 = scalar_lea.vmem %s2, 1
  %v1924 = vld [vmem:[%s1923] sm:$0x1]
  %v1925 = vsel %vm63, %v1919, 0.0
  %1926 = vadd.xlane.f32.xlu0 %v1925
  %v1927 = vpop.xlane.xlu0 %1926
  %v1928 = vsel %vm63, %v1920, 0.0
  %1929 = vadd.xlane.f32.xlu0 %v1928
  %v1930 = vpop.xlane.xlu0 %1929
  %v1931 = vmul.f32 %v1927, %v70
  %v1932 = vmul.f32 %v1930, %v70
  %v1933 = vsub.f32 %v1919, %v1931
  %v1934 = vsub.f32 %v1920, %v1932
  %v1935 = vmul.f32 %v1933, %v1933
  %v1936 = vmul.f32 %v1934, %v1934
  %v1937 = vsel %vm63, %v1935, 0.0
  %1938 = vadd.xlane.f32.xlu0 %v1937
  %v1939 = vpop.xlane.xlu0 %1938
  %v1940 = vsel %vm63, %v1936, 0.0
  %1941 = vadd.xlane.f32.xlu0 %v1940
  %v1942 = vpop.xlane.xlu0 %1941
  %v1943 = vmul.f32 %v1939, %v70
  %v1944 = vmul.f32 %v1942, %v70
  %v1945 = vadd.f32 %v1943, 1e-05
  %v1946 = vadd.f32 %v1944, 1e-05
  %v1947 = vrsqrt.pop %v1945
  %v1948 = vrsqrt.pop %v1946
  %v1949 = vmul.f32 %v1933, %v1947
  %v1950 = vmul.f32 %v1934, %v1948
  %v1952 = vlaneseq
  %v1953 = vshrl.u32 %v1952, 7
  %v1954 = vsub.s32 0, %v1953
  %v1955 = vrot.slane %v1922, %v1954
  %v1957 = vmul.f32 %v1949, %v1955
  %v1958 = vmul.f32 %v1950, %v1955
  %v1960 = vlaneseq
  %v1961 = vshrl.u32 %v1960, 7
  %v1962 = vsub.s32 0, %v1961
  %v1963 = vrot.slane %v1924, %v1962
  %v1965 = vadd.f32 %v1957, %v1963
  %v1966 = vadd.f32 %v1958, %v1963
  %s1967 = scalar_lea.vmem %s3, 16
  %v1968 = vld [vmem:[%s1967] sm:$0x7f]
  %v1970 = vsel %vm63, %v1965, 0
  %v1973 = vsel %vm63, %v1966, 0
  %v1976 = vsel %vm114, %v1968, 0
  %1978 = vmatprep.subr.mxu0 0.0
  %1979 = vmatpush1.msra.mxu0 0.0
  %1980 = vmatprep.subr.mxu0 0.0
  %1981 = vmatpush1.msra.mxu0 0.0
  %1982 = vmatprep.subr.mxu0 0.0
  %1983 = vmatpush1.msra.mxu0 0.0
  %1984 = vmatprep.subr.mxu0 0.0
  %1985 = vmatpush1.msra.mxu0 0.0
  %1986 = vmatprep.subr.mxu0 0.0
  %1987 = vmatpush1.msra.mxu0 0.0
  %1988 = vmatprep.subr.mxu0 0.0
  %1989 = vmatpush1.msra.mxu0 0.0
  %1990 = vmatprep.subr.mxu0 0.0
  %1991 = vmatpush1.msra.mxu0 0.0
  %1992 = vmatprep.subr.mxu0 0.0
  %1993 = vmatpush1.msra.mxu0 0.0
  %1994 = vmatprep.subr.mxu0 0.0
  %1995 = vmatpush1.msra.mxu0 0.0
  %1996 = vmatprep.subr.mxu0 0.0
  %1997 = vmatpush1.msra.mxu0 0.0
  %1998 = vmatprep.subr.mxu0 0.0
  %1999 = vmatpush1.msra.mxu0 0.0
  %2000 = vmatprep.subr.mxu0 0.0
  %2001 = vmatpush1.msra.mxu0 0.0
  %2002 = vmatprep.subr.mxu0 0.0
  %2003 = vmatpush1.msra.mxu0 0.0
  %2004 = vmatprep.subr.mxu0 0.0
  %2005 = vmatpush1.msra.mxu0 0.0
  %2006 = vmatprep.subr.mxu0 0.0
  %2007 = vmatpush1.msra.mxu0 0.0
  %2008 = vmatprep.subr.mxu0 0.0
  %2009 = vmatpush1.msra.mxu0 %v1976
  %2010 = vmatprep.subr.mxu0 0.0
  %2011 = vmatpush2.msra.mxu0 0.0
  %2012 = vmatprep.subr.mxu0 0.0
  %2013 = vmatpush2.msra.mxu0 0.0
  %2014 = vmatprep.subr.mxu0 0.0
  %2015 = vmatpush2.msra.mxu0 0.0
  %2016 = vmatprep.subr.mxu0 0.0
  %2017 = vmatpush2.msra.mxu0 0.0
  %2018 = vmatprep.subr.mxu0 0.0
  %2019 = vmatpush2.msra.mxu0 0.0
  %2020 = vmatprep.subr.mxu0 0.0
  %2021 = vmatpush2.msra.mxu0 0.0
  %2022 = vmatprep.subr.mxu0 0.0
  %2023 = vmatpush2.msra.mxu0 0.0
  %2024 = vmatprep.subr.mxu0 0.0
  %2025 = vmatpush2.msra.mxu0 0.0
  %2026 = vmatprep.subr.mxu0 0.0
  %2027 = vmatpush2.msra.mxu0 0.0
  %2028 = vmatprep.subr.mxu0 0.0
  %2029 = vmatpush2.msra.mxu0 0.0
  %2030 = vmatprep.subr.mxu0 0.0
  %2031 = vmatpush2.msra.mxu0 0.0
  %2032 = vmatprep.subr.mxu0 0.0
  %2033 = vmatpush2.msra.mxu0 0.0
  %2034 = vmatprep.subr.mxu0 0.0
  %2035 = vmatpush2.msra.mxu0 0.0
  %2036 = vmatprep.subr.mxu0 0.0
  %2037 = vmatpush2.msra.mxu0 0.0
  %2038 = vmatprep.subr.mxu0 0.0
  %2039 = vmatpush2.msra.mxu0 0.0
  %2040 = vmatprep.subr.mxu0 0.0
  %2041 = vmatpush2.msra.mxu0 0.0
  %2042 = vmatprep.mubr.f32.mxu0 0.0
  %2043 = vmatmul.mubr.f32.gmra.mxu0 %v1970
  %v2044 = vpop.f32.mrf.mxu0
  %v2045 = vadd.f32 0.0, %v2044
  %v2046 = vpop.f32.mrf.mxu0
  %2047 = vmatprep.mubr.f32.mxu0 0.0
  %2048 = vmatmul.mubr.f32.gmra.mxu0 %v1973
  %v2049 = vpop.f32.mrf.mxu0
  %v2050 = vadd.f32 0.0, %v2049
  %v2051 = vpop.f32.mrf.mxu0
  %2052 = vdwg.mxu0
  %s2053 = scalar_lea.vmem %s4, 16
  %v2054 = vld [vmem:[%s2053] sm:$0x7f]
  %v2056 = vsel %vm114, %v2054, 0
  %2058 = vmatprep.subr.mxu0 0.0
  %2059 = vmatpush1.msra.mxu0 0.0
  %2060 = vmatprep.subr.mxu0 0.0
  %2061 = vmatpush1.msra.mxu0 0.0
  %2062 = vmatprep.subr.mxu0 0.0
  %2063 = vmatpush1.msra.mxu0 0.0
  %2064 = vmatprep.subr.mxu0 0.0
  %2065 = vmatpush1.msra.mxu0 0.0
  %2066 = vmatprep.subr.mxu0 0.0
  %2067 = vmatpush1.msra.mxu0 0.0
  %2068 = vmatprep.subr.mxu0 0.0
  %2069 = vmatpush1.msra.mxu0 0.0
  %2070 = vmatprep.subr.mxu0 0.0
  %2071 = vmatpush1.msra.mxu0 0.0
  %2072 = vmatprep.subr.mxu0 0.0
  %2073 = vmatpush1.msra.mxu0 0.0
  %2074 = vmatprep.subr.mxu0 0.0
  %2075 = vmatpush1.msra.mxu0 0.0
  %2076 = vmatprep.subr.mxu0 0.0
  %2077 = vmatpush1.msra.mxu0 0.0
  %2078 = vmatprep.subr.mxu0 0.0
  %2079 = vmatpush1.msra.mxu0 0.0
  %2080 = vmatprep.subr.mxu0 0.0
  %2081 = vmatpush1.msra.mxu0 0.0
  %2082 = vmatprep.subr.mxu0 0.0
  %2083 = vmatpush1.msra.mxu0 0.0
  %2084 = vmatprep.subr.mxu0 0.0
  %2085 = vmatpush1.msra.mxu0 0.0
  %2086 = vmatprep.subr.mxu0 0.0
  %2087 = vmatpush1.msra.mxu0 0.0
  %2088 = vmatprep.subr.mxu0 0.0
  %2089 = vmatpush1.msra.mxu0 %v2056
  %2090 = vmatprep.subr.mxu0 0.0
  %2091 = vmatpush2.msra.mxu0 0.0
  %2092 = vmatprep.subr.mxu0 0.0
  %2093 = vmatpush2.msra.mxu0 0.0
  %2094 = vmatprep.subr.mxu0 0.0
  %2095 = vmatpush2.msra.mxu0 0.0
  %2096 = vmatprep.subr.mxu0 0.0
  %2097 = vmatpush2.msra.mxu0 0.0
  %2098 = vmatprep.subr.mxu0 0.0
  %2099 = vmatpush2.msra.mxu0 0.0
  %2100 = vmatprep.subr.mxu0 0.0
  %2101 = vmatpush2.msra.mxu0 0.0
  %2102 = vmatprep.subr.mxu0 0.0
  %2103 = vmatpush2.msra.mxu0 0.0
  %2104 = vmatprep.subr.mxu0 0.0
  %2105 = vmatpush2.msra.mxu0 0.0
  %2106 = vmatprep.subr.mxu0 0.0
  %2107 = vmatpush2.msra.mxu0 0.0
  %2108 = vmatprep.subr.mxu0 0.0
  %2109 = vmatpush2.msra.mxu0 0.0
  %2110 = vmatprep.subr.mxu0 0.0
  %2111 = vmatpush2.msra.mxu0 0.0
  %2112 = vmatprep.subr.mxu0 0.0
  %2113 = vmatpush2.msra.mxu0 0.0
  %2114 = vmatprep.subr.mxu0 0.0
  %2115 = vmatpush2.msra.mxu0 0.0
  %2116 = vmatprep.subr.mxu0 0.0
  %2117 = vmatpush2.msra.mxu0 0.0
  %2118 = vmatprep.subr.mxu0 0.0
  %2119 = vmatpush2.msra.mxu0 0.0
  %2120 = vmatprep.subr.mxu0 0.0
  %2121 = vmatpush2.msra.mxu0 0.0
  %2122 = vmatprep.mubr.f32.mxu0 0.0
  %2123 = vmatmul.mubr.f32.gmra.mxu0 %v1970
  %v2124 = vpop.f32.mrf.mxu0
  %v2125 = vadd.f32 0.0, %v2124
  %v2126 = vpop.f32.mrf.mxu0
  %2127 = vmatprep.mubr.f32.mxu0 0.0
  %2128 = vmatmul.mubr.f32.gmra.mxu0 %v1973
  %v2129 = vpop.f32.mrf.mxu0
  %v2130 = vadd.f32 0.0, %v2129
  %v2131 = vpop.f32.mrf.mxu0
  %2132 = vdwg.mxu0
  %s2133 = scalar_lea.vmem %s5, 16
  %v2134 = vld [vmem:[%s2133] sm:$0x7f]
  %v2136 = vsel %vm114, %v2134, 0
  %2138 = vmatprep.subr.mxu0 0.0
  %2139 = vmatpush1.msra.mxu0 0.0
  %2140 = vmatprep.subr.mxu0 0.0
  %2141 = vmatpush1.msra.mxu0 0.0
  %2142 = vmatprep.subr.mxu0 0.0
  %2143 = vmatpush1.msra.mxu0 0.0
  %2144 = vmatprep.subr.mxu0 0.0
  %2145 = vmatpush1.msra.mxu0 0.0
  %2146 = vmatprep.subr.mxu0 0.0
  %2147 = vmatpush1.msra.mxu0 0.0
  %2148 = vmatprep.subr.mxu0 0.0
  %2149 = vmatpush1.msra.mxu0 0.0
  %2150 = vmatprep.subr.mxu0 0.0
  %2151 = vmatpush1.msra.mxu0 0.0
  %2152 = vmatprep.subr.mxu0 0.0
  %2153 = vmatpush1.msra.mxu0 0.0
  %2154 = vmatprep.subr.mxu0 0.0
  %2155 = vmatpush1.msra.mxu0 0.0
  %2156 = vmatprep.subr.mxu0 0.0
  %2157 = vmatpush1.msra.mxu0 0.0
  %2158 = vmatprep.subr.mxu0 0.0
  %2159 = vmatpush1.msra.mxu0 0.0
  %2160 = vmatprep.subr.mxu0 0.0
  %2161 = vmatpush1.msra.mxu0 0.0
  %2162 = vmatprep.subr.mxu0 0.0
  %2163 = vmatpush1.msra.mxu0 0.0
  %2164 = vmatprep.subr.mxu0 0.0
  %2165 = vmatpush1.msra.mxu0 0.0
  %2166 = vmatprep.subr.mxu0 0.0
  %2167 = vmatpush1.msra.mxu0 0.0
  %2168 = vmatprep.subr.mxu0 0.0
  %2169 = vmatpush1.msra.mxu0 %v2136
  %2170 = vmatprep.subr.mxu0 0.0
  %2171 = vmatpush2.msra.mxu0 0.0
  %2172 = vmatprep.subr.mxu0 0.0
  %2173 = vmatpush2.msra.mxu0 0.0
  %2174 = vmatprep.subr.mxu0 0.0
  %2175 = vmatpush2.msra.mxu0 0.0
  %2176 = vmatprep.subr.mxu0 0.0
  %2177 = vmatpush2.msra.mxu0 0.0
  %2178 = vmatprep.subr.mxu0 0.0
  %2179 = vmatpush2.msra.mxu0 0.0
  %2180 = vmatprep.subr.mxu0 0.0
  %2181 = vmatpush2.msra.mxu0 0.0
  %2182 = vmatprep.subr.mxu0 0.0
  %2183 = vmatpush2.msra.mxu0 0.0
  %2184 = vmatprep.subr.mxu0 0.0
  %2185 = vmatpush2.msra.mxu0 0.0
  %2186 = vmatprep.subr.mxu0 0.0
  %2187 = vmatpush2.msra.mxu0 0.0
  %2188 = vmatprep.subr.mxu0 0.0
  %2189 = vmatpush2.msra.mxu0 0.0
  %2190 = vmatprep.subr.mxu0 0.0
  %2191 = vmatpush2.msra.mxu0 0.0
  %2192 = vmatprep.subr.mxu0 0.0
  %2193 = vmatpush2.msra.mxu0 0.0
  %2194 = vmatprep.subr.mxu0 0.0
  %2195 = vmatpush2.msra.mxu0 0.0
  %2196 = vmatprep.subr.mxu0 0.0
  %2197 = vmatpush2.msra.mxu0 0.0
  %2198 = vmatprep.subr.mxu0 0.0
  %2199 = vmatpush2.msra.mxu0 0.0
  %2200 = vmatprep.subr.mxu0 0.0
  %2201 = vmatpush2.msra.mxu0 0.0
  %2202 = vmatprep.mubr.f32.mxu0 0.0
  %2203 = vmatmul.mubr.f32.gmra.mxu0 %v1970
  %v2204 = vpop.f32.mrf.mxu0
  %v2205 = vadd.f32 0.0, %v2204
  %v2206 = vpop.f32.mrf.mxu0
  %2207 = vmatprep.mubr.f32.mxu0 0.0
  %2208 = vmatmul.mubr.f32.gmra.mxu0 %v1973
  %v2209 = vpop.f32.mrf.mxu0
  %v2210 = vadd.f32 0.0, %v2209
  %v2211 = vpop.f32.mrf.mxu0
  %2212 = vdwg.mxu0
  %v2214 = vsel %vm351, %v2045, 0
  %v2217 = vsel %vm351, %v2125, 0
  %2219 = vmatprep.subr.mxu0 0.0
  %2220 = vmatpush1.xpose.msra.mxu0 0.0
  %2221 = vmatprep.subr.mxu0 0.0
  %2222 = vmatpush1.xpose.msra.mxu0 0.0
  %2223 = vmatprep.subr.mxu0 0.0
  %2224 = vmatpush1.xpose.msra.mxu0 0.0
  %2225 = vmatprep.subr.mxu0 0.0
  %2226 = vmatpush1.xpose.msra.mxu0 0.0
  %2227 = vmatprep.subr.mxu0 0.0
  %2228 = vmatpush1.xpose.msra.mxu0 0.0
  %2229 = vmatprep.subr.mxu0 0.0
  %2230 = vmatpush1.xpose.msra.mxu0 0.0
  %2231 = vmatprep.subr.mxu0 0.0
  %2232 = vmatpush1.xpose.msra.mxu0 0.0
  %2233 = vmatprep.subr.mxu0 0.0
  %2234 = vmatpush1.xpose.msra.mxu0 0.0
  %2235 = vmatprep.subr.mxu0 0.0
  %2236 = vmatpush1.xpose.msra.mxu0 0.0
  %2237 = vmatprep.subr.mxu0 0.0
  %2238 = vmatpush1.xpose.msra.mxu0 0.0
  %2239 = vmatprep.subr.mxu0 0.0
  %2240 = vmatpush1.xpose.msra.mxu0 0.0
  %2241 = vmatprep.subr.mxu0 0.0
  %2242 = vmatpush1.xpose.msra.mxu0 0.0
  %2243 = vmatprep.subr.mxu0 0.0
  %2244 = vmatpush1.xpose.msra.mxu0 0.0
  %2245 = vmatprep.subr.mxu0 0.0
  %2246 = vmatpush1.xpose.msra.mxu0 0.0
  %2247 = vmatprep.subr.mxu0 0.0
  %2248 = vmatpush1.xpose.msra.mxu0 0.0
  %2249 = vmatprep.subr.mxu0 0.0
  %2250 = vmatpush1.xpose.msra.mxu0 %v2217
  %2251 = vmatprep.subr.mxu0 0.0
  %2252 = vmatpush2.xpose.msra.mxu0 0.0
  %2253 = vmatprep.subr.mxu0 0.0
  %2254 = vmatpush2.xpose.msra.mxu0 0.0
  %2255 = vmatprep.subr.mxu0 0.0
  %2256 = vmatpush2.xpose.msra.mxu0 0.0
  %2257 = vmatprep.subr.mxu0 0.0
  %2258 = vmatpush2.xpose.msra.mxu0 0.0
  %2259 = vmatprep.subr.mxu0 0.0
  %2260 = vmatpush2.xpose.msra.mxu0 0.0
  %2261 = vmatprep.subr.mxu0 0.0
  %2262 = vmatpush2.xpose.msra.mxu0 0.0
  %2263 = vmatprep.subr.mxu0 0.0
  %2264 = vmatpush2.xpose.msra.mxu0 0.0
  %2265 = vmatprep.subr.mxu0 0.0
  %2266 = vmatpush2.xpose.msra.mxu0 0.0
  %2267 = vmatprep.subr.mxu0 0.0
  %2268 = vmatpush2.xpose.msra.mxu0 0.0
  %2269 = vmatprep.subr.mxu0 0.0
  %2270 = vmatpush2.xpose.msra.mxu0 0.0
  %2271 = vmatprep.subr.mxu0 0.0
  %2272 = vmatpush2.xpose.msra.mxu0 0.0
  %2273 = vmatprep.subr.mxu0 0.0
  %2274 = vmatpush2.xpose.msra.mxu0 0.0
  %2275 = vmatprep.subr.mxu0 0.0
  %2276 = vmatpush2.xpose.msra.mxu0 0.0
  %2277 = vmatprep.subr.mxu0 0.0
  %2278 = vmatpush2.xpose.msra.mxu0 0.0
  %2279 = vmatprep.subr.mxu0 0.0
  %2280 = vmatpush2.xpose.msra.mxu0 0.0
  %2281 = vmatprep.subr.mxu0 0.0
  %2282 = vmatpush2.xpose.msra.mxu0 0.0
  %2283 = vmatprep.mubr.f32.mxu0 0.0
  %2284 = vmatmul.mubr.f32.gmra.mxu0 %v2214
  %v2285 = vpop.f32.mrf.mxu0
  %v2286 = vadd.f32 0.0, %v2285
  %v2287 = vpop.f32.mrf.mxu0
  %2288 = vdwg.mxu0
  %v2289 = vsel %vm428, %v2286, -inf
  %2290 = vmax.xlane.f32.xlu0 %v2289
  %v2291 = vpop.xlane.xlu0 %2290
  %v2292 = vsub.f32 %v2286, %v2291
  %v2293 = vmul.f32 %v2292, 1.442695
  %v2294 = vpow.pop %v2293
  %v2295 = vsel %vm428, %v2294, 0.0
  %2296 = vadd.xlane.f32.xlu0 %v2295
  %v2297 = vpop.xlane.xlu0 %2296
  %v2298 = vrcp.pop %v2297
  %v2299 = vmul.f32 %v2294, %v2298
  %v2301 = vsel %vm428, %v2299, 0
  %2303 = vmatprep.subr.mxu0 0.0
  %2304 = vmatpush1.msra.mxu0 0.0
  %2305 = vmatprep.subr.mxu0 0.0
  %2306 = vmatpush1.msra.mxu0 0.0
  %2307 = vmatprep.subr.mxu0 0.0
  %2308 = vmatpush1.msra.mxu0 0.0
  %2309 = vmatprep.subr.mxu0 0.0
  %2310 = vmatpush1.msra.mxu0 0.0
  %2311 = vmatprep.subr.mxu0 0.0
  %2312 = vmatpush1.msra.mxu0 0.0
  %2313 = vmatprep.subr.mxu0 0.0
  %2314 = vmatpush1.msra.mxu0 0.0
  %2315 = vmatprep.subr.mxu0 0.0
  %2316 = vmatpush1.msra.mxu0 0.0
  %2317 = vmatprep.subr.mxu0 0.0
  %2318 = vmatpush1.msra.mxu0 0.0
  %2319 = vmatprep.subr.mxu0 0.0
  %2320 = vmatpush1.msra.mxu0 0.0
  %2321 = vmatprep.subr.mxu0 0.0
  %2322 = vmatpush1.msra.mxu0 0.0
  %2323 = vmatprep.subr.mxu0 0.0
  %2324 = vmatpush1.msra.mxu0 0.0
  %2325 = vmatprep.subr.mxu0 0.0
  %2326 = vmatpush1.msra.mxu0 0.0
  %2327 = vmatprep.subr.mxu0 0.0
  %2328 = vmatpush1.msra.mxu0 0.0
  %2329 = vmatprep.subr.mxu0 0.0
  %2330 = vmatpush1.msra.mxu0 0.0
  %2331 = vmatprep.subr.mxu0 0.0
  %2332 = vmatpush1.msra.mxu0 0.0
  %2333 = vmatprep.subr.mxu0 0.0
  %2334 = vmatpush1.msra.mxu0 %v2205
  %2335 = vmatprep.subr.mxu0 0.0
  %2336 = vmatpush2.msra.mxu0 0.0
  %2337 = vmatprep.subr.mxu0 0.0
  %2338 = vmatpush2.msra.mxu0 0.0
  %2339 = vmatprep.subr.mxu0 0.0
  %2340 = vmatpush2.msra.mxu0 0.0
  %2341 = vmatprep.subr.mxu0 0.0
  %2342 = vmatpush2.msra.mxu0 0.0
  %2343 = vmatprep.subr.mxu0 0.0
  %2344 = vmatpush2.msra.mxu0 0.0
  %2345 = vmatprep.subr.mxu0 0.0
  %2346 = vmatpush2.msra.mxu0 0.0
  %2347 = vmatprep.subr.mxu0 0.0
  %2348 = vmatpush2.msra.mxu0 0.0
  %2349 = vmatprep.subr.mxu0 0.0
  %2350 = vmatpush2.msra.mxu0 0.0
  %2351 = vmatprep.subr.mxu0 0.0
  %2352 = vmatpush2.msra.mxu0 0.0
  %2353 = vmatprep.subr.mxu0 0.0
  %2354 = vmatpush2.msra.mxu0 0.0
  %2355 = vmatprep.subr.mxu0 0.0
  %2356 = vmatpush2.msra.mxu0 0.0
  %2357 = vmatprep.subr.mxu0 0.0
  %2358 = vmatpush2.msra.mxu0 0.0
  %2359 = vmatprep.subr.mxu0 0.0
  %2360 = vmatpush2.msra.mxu0 0.0
  %2361 = vmatprep.subr.mxu0 0.0
  %2362 = vmatpush2.msra.mxu0 0.0
  %2363 = vmatprep.subr.mxu0 0.0
  %2364 = vmatpush2.msra.mxu0 0.0
  %2365 = vmatprep.subr.mxu0 0.0
  %2366 = vmatpush2.msra.mxu0 0.0
  %2367 = vmatprep.mubr.f32.mxu0 0.0
  %2368 = vmatmul.mubr.f32.gmra.mxu0 %v2301
  %v2369 = vpop.f32.mrf.mxu0
  %v2370 = vadd.f32 0.0, %v2369
  %v2371 = vpop.f32.mrf.mxu0
  %2372 = vdwg.mxu0
  %s2373 = scalar_lea.vmem %s6, 8
  %v2374 = vld [vmem:[%s2373] sm:$0xf]
  %v2376 = vsel %vm351, %v2050, 0
  %v2379 = vsel %vm351, %v2130, 0
  %2381 = vmatprep.subr.mxu0 0.0
  %2382 = vmatpush1.xpose.msra.mxu0 0.0
  %2383 = vmatprep.subr.mxu0 0.0
  %2384 = vmatpush1.xpose.msra.mxu0 0.0
  %2385 = vmatprep.subr.mxu0 0.0
  %2386 = vmatpush1.xpose.msra.mxu0 0.0
  %2387 = vmatprep.subr.mxu0 0.0
  %2388 = vmatpush1.xpose.msra.mxu0 0.0
  %2389 = vmatprep.subr.mxu0 0.0
  %2390 = vmatpush1.xpose.msra.mxu0 0.0
  %2391 = vmatprep.subr.mxu0 0.0
  %2392 = vmatpush1.xpose.msra.mxu0 0.0
  %2393 = vmatprep.subr.mxu0 0.0
  %2394 = vmatpush1.xpose.msra.mxu0 0.0
  %2395 = vmatprep.subr.mxu0 0.0
  %2396 = vmatpush1.xpose.msra.mxu0 0.0
  %2397 = vmatprep.subr.mxu0 0.0
  %2398 = vmatpush1.xpose.msra.mxu0 0.0
  %2399 = vmatprep.subr.mxu0 0.0
  %2400 = vmatpush1.xpose.msra.mxu0 0.0
  %2401 = vmatprep.subr.mxu0 0.0
  %2402 = vmatpush1.xpose.msra.mxu0 0.0
  %2403 = vmatprep.subr.mxu0 0.0
  %2404 = vmatpush1.xpose.msra.mxu0 0.0
  %2405 = vmatprep.subr.mxu0 0.0
  %2406 = vmatpush1.xpose.msra.mxu0 0.0
  %2407 = vmatprep.subr.mxu0 0.0
  %2408 = vmatpush1.xpose.msra.mxu0 0.0
  %2409 = vmatprep.subr.mxu0 0.0
  %2410 = vmatpush1.xpose.msra.mxu0 0.0
  %2411 = vmatprep.subr.mxu0 0.0
  %2412 = vmatpush1.xpose.msra.mxu0 %v2379
  %2413 = vmatprep.subr.mxu0 0.0
  %2414 = vmatpush2.xpose.msra.mxu0 0.0
  %2415 = vmatprep.subr.mxu0 0.0
  %2416 = vmatpush2.xpose.msra.mxu0 0.0
  %2417 = vmatprep.subr.mxu0 0.0
  %2418 = vmatpush2.xpose.msra.mxu0 0.0
  %2419 = vmatprep.subr.mxu0 0.0
  %2420 = vmatpush2.xpose.msra.mxu0 0.0
  %2421 = vmatprep.subr.mxu0 0.0
  %2422 = vmatpush2.xpose.msra.mxu0 0.0
  %2423 = vmatprep.subr.mxu0 0.0
  %2424 = vmatpush2.xpose.msra.mxu0 0.0
  %2425 = vmatprep.subr.mxu0 0.0
  %2426 = vmatpush2.xpose.msra.mxu0 0.0
  %2427 = vmatprep.subr.mxu0 0.0
  %2428 = vmatpush2.xpose.msra.mxu0 0.0
  %2429 = vmatprep.subr.mxu0 0.0
  %2430 = vmatpush2.xpose.msra.mxu0 0.0
  %2431 = vmatprep.subr.mxu0 0.0
  %2432 = vmatpush2.xpose.msra.mxu0 0.0
  %2433 = vmatprep.subr.mxu0 0.0
  %2434 = vmatpush2.xpose.msra.mxu0 0.0
  %2435 = vmatprep.subr.mxu0 0.0
  %2436 = vmatpush2.xpose.msra.mxu0 0.0
  %2437 = vmatprep.subr.mxu0 0.0
  %2438 = vmatpush2.xpose.msra.mxu0 0.0
  %2439 = vmatprep.subr.mxu0 0.0
  %2440 = vmatpush2.xpose.msra.mxu0 0.0
  %2441 = vmatprep.subr.mxu0 0.0
  %2442 = vmatpush2.xpose.msra.mxu0 0.0
  %2443 = vmatprep.subr.mxu0 0.0
  %2444 = vmatpush2.xpose.msra.mxu0 0.0
  %2445 = vmatprep.mubr.f32.mxu0 0.0
  %2446 = vmatmul.mubr.f32.gmra.mxu0 %v2376
  %v2447 = vpop.f32.mrf.mxu0
  %v2448 = vadd.f32 0.0, %v2447
  %v2449 = vpop.f32.mrf.mxu0
  %2450 = vdwg.mxu0
  %v2451 = vsel %vm428, %v2448, -inf
  %2452 = vmax.xlane.f32.xlu0 %v2451
  %v2453 = vpop.xlane.xlu0 %2452
  %v2454 = vsub.f32 %v2448, %v2453
  %v2455 = vmul.f32 %v2454, 1.442695
  %v2456 = vpow.pop %v2455
  %v2457 = vsel %vm428, %v2456, 0.0
  %2458 = vadd.xlane.f32.xlu0 %v2457
  %v2459 = vpop.xlane.xlu0 %2458
  %v2460 = vrcp.pop %v2459
  %v2461 = vmul.f32 %v2456, %v2460
  %v2463 = vsel %vm428, %v2461, 0
  %2465 = vmatprep.subr.mxu0 0.0
  %2466 = vmatpush1.msra.mxu0 0.0
  %2467 = vmatprep.subr.mxu0 0.0
  %2468 = vmatpush1.msra.mxu0 0.0
  %2469 = vmatprep.subr.mxu0 0.0
  %2470 = vmatpush1.msra.mxu0 0.0
  %2471 = vmatprep.subr.mxu0 0.0
  %2472 = vmatpush1.msra.mxu0 0.0
  %2473 = vmatprep.subr.mxu0 0.0
  %2474 = vmatpush1.msra.mxu0 0.0
  %2475 = vmatprep.subr.mxu0 0.0
  %2476 = vmatpush1.msra.mxu0 0.0
  %2477 = vmatprep.subr.mxu0 0.0
  %2478 = vmatpush1.msra.mxu0 0.0
  %2479 = vmatprep.subr.mxu0 0.0
  %2480 = vmatpush1.msra.mxu0 0.0
  %2481 = vmatprep.subr.mxu0 0.0
  %2482 = vmatpush1.msra.mxu0 0.0
  %2483 = vmatprep.subr.mxu0 0.0
  %2484 = vmatpush1.msra.mxu0 0.0
  %2485 = vmatprep.subr.mxu0 0.0
  %2486 = vmatpush1.msra.mxu0 0.0
  %2487 = vmatprep.subr.mxu0 0.0
  %2488 = vmatpush1.msra.mxu0 0.0
  %2489 = vmatprep.subr.mxu0 0.0
  %2490 = vmatpush1.msra.mxu0 0.0
  %2491 = vmatprep.subr.mxu0 0.0
  %2492 = vmatpush1.msra.mxu0 0.0
  %2493 = vmatprep.subr.mxu0 0.0
  %2494 = vmatpush1.msra.mxu0 0.0
  %2495 = vmatprep.subr.mxu0 0.0
  %2496 = vmatpush1.msra.mxu0 %v2210
  %2497 = vmatprep.subr.mxu0 0.0
  %2498 = vmatpush2.msra.mxu0 0.0
  %2499 = vmatprep.subr.mxu0 0.0
  %2500 = vmatpush2.msra.mxu0 0.0
  %2501 = vmatprep.subr.mxu0 0.0
  %2502 = vmatpush2.msra.mxu0 0.0
  %2503 = vmatprep.subr.mxu0 0.0
  %2504 = vmatpush2.msra.mxu0 0.0
  %2505 = vmatprep.subr.mxu0 0.0
  %2506 = vmatpush2.msra.mxu0 0.0
  %2507 = vmatprep.subr.mxu0 0.0
  %2508 = vmatpush2.msra.mxu0 0.0
  %2509 = vmatprep.subr.mxu0 0.0
  %2510 = vmatpush2.msra.mxu0 0.0
  %2511 = vmatprep.subr.mxu0 0.0
  %2512 = vmatpush2.msra.mxu0 0.0
  %2513 = vmatprep.subr.mxu0 0.0
  %2514 = vmatpush2.msra.mxu0 0.0
  %2515 = vmatprep.subr.mxu0 0.0
  %2516 = vmatpush2.msra.mxu0 0.0
  %2517 = vmatprep.subr.mxu0 0.0
  %2518 = vmatpush2.msra.mxu0 0.0
  %2519 = vmatprep.subr.mxu0 0.0
  %2520 = vmatpush2.msra.mxu0 0.0
  %2521 = vmatprep.subr.mxu0 0.0
  %2522 = vmatpush2.msra.mxu0 0.0
  %2523 = vmatprep.subr.mxu0 0.0
  %2524 = vmatpush2.msra.mxu0 0.0
  %2525 = vmatprep.subr.mxu0 0.0
  %2526 = vmatpush2.msra.mxu0 0.0
  %2527 = vmatprep.subr.mxu0 0.0
  %2528 = vmatpush2.msra.mxu0 0.0
  %2529 = vmatprep.mubr.f32.mxu0 0.0
  %2530 = vmatmul.mubr.f32.gmra.mxu0 %v2463
  %v2531 = vpop.f32.mrf.mxu0
  %v2532 = vadd.f32 0.0, %v2531
  %v2533 = vpop.f32.mrf.mxu0
  %2534 = vdwg.mxu0
  %s2535 = scalar_lea.vmem %s3, 24
  %v2536 = vld [vmem:[%s2535] sm:$0x7f]
  %v2538 = vsel %vm114, %v2536, 0
  %2540 = vmatprep.subr.mxu0 0.0
  %2541 = vmatpush1.msra.mxu0 0.0
  %2542 = vmatprep.subr.mxu0 0.0
  %2543 = vmatpush1.msra.mxu0 0.0
  %2544 = vmatprep.subr.mxu0 0.0
  %2545 = vmatpush1.msra.mxu0 0.0
  %2546 = vmatprep.subr.mxu0 0.0
  %2547 = vmatpush1.msra.mxu0 0.0
  %2548 = vmatprep.subr.mxu0 0.0
  %2549 = vmatpush1.msra.mxu0 0.0
  %2550 = vmatprep.subr.mxu0 0.0
  %2551 = vmatpush1.msra.mxu0 0.0
  %2552 = vmatprep.subr.mxu0 0.0
  %2553 = vmatpush1.msra.mxu0 0.0
  %2554 = vmatprep.subr.mxu0 0.0
  %2555 = vmatpush1.msra.mxu0 0.0
  %2556 = vmatprep.subr.mxu0 0.0
  %2557 = vmatpush1.msra.mxu0 0.0
  %2558 = vmatprep.subr.mxu0 0.0
  %2559 = vmatpush1.msra.mxu0 0.0
  %2560 = vmatprep.subr.mxu0 0.0
  %2561 = vmatpush1.msra.mxu0 0.0
  %2562 = vmatprep.subr.mxu0 0.0
  %2563 = vmatpush1.msra.mxu0 0.0
  %2564 = vmatprep.subr.mxu0 0.0
  %2565 = vmatpush1.msra.mxu0 0.0
  %2566 = vmatprep.subr.mxu0 0.0
  %2567 = vmatpush1.msra.mxu0 0.0
  %2568 = vmatprep.subr.mxu0 0.0
  %2569 = vmatpush1.msra.mxu0 0.0
  %2570 = vmatprep.subr.mxu0 0.0
  %2571 = vmatpush1.msra.mxu0 %v2538
  %2572 = vmatprep.subr.mxu0 0.0
  %2573 = vmatpush2.msra.mxu0 0.0
  %2574 = vmatprep.subr.mxu0 0.0
  %2575 = vmatpush2.msra.mxu0 0.0
  %2576 = vmatprep.subr.mxu0 0.0
  %2577 = vmatpush2.msra.mxu0 0.0
  %2578 = vmatprep.subr.mxu0 0.0
  %2579 = vmatpush2.msra.mxu0 0.0
  %2580 = vmatprep.subr.mxu0 0.0
  %2581 = vmatpush2.msra.mxu0 0.0
  %2582 = vmatprep.subr.mxu0 0.0
  %2583 = vmatpush2.msra.mxu0 0.0
  %2584 = vmatprep.subr.mxu0 0.0
  %2585 = vmatpush2.msra.mxu0 0.0
  %2586 = vmatprep.subr.mxu0 0.0
  %2587 = vmatpush2.msra.mxu0 0.0
  %2588 = vmatprep.subr.mxu0 0.0
  %2589 = vmatpush2.msra.mxu0 0.0
  %2590 = vmatprep.subr.mxu0 0.0
  %2591 = vmatpush2.msra.mxu0 0.0
  %2592 = vmatprep.subr.mxu0 0.0
  %2593 = vmatpush2.msra.mxu0 0.0
  %2594 = vmatprep.subr.mxu0 0.0
  %2595 = vmatpush2.msra.mxu0 0.0
  %2596 = vmatprep.subr.mxu0 0.0
  %2597 = vmatpush2.msra.mxu0 0.0
  %2598 = vmatprep.subr.mxu0 0.0
  %2599 = vmatpush2.msra.mxu0 0.0
  %2600 = vmatprep.subr.mxu0 0.0
  %2601 = vmatpush2.msra.mxu0 0.0
  %2602 = vmatprep.subr.mxu0 0.0
  %2603 = vmatpush2.msra.mxu0 0.0
  %2604 = vmatprep.mubr.f32.mxu0 0.0
  %2605 = vmatmul.mubr.f32.gmra.mxu0 %v1970
  %v2606 = vpop.f32.mrf.mxu0
  %v2607 = vadd.f32 0.0, %v2606
  %v2608 = vpop.f32.mrf.mxu0
  %2609 = vmatprep.mubr.f32.mxu0 0.0
  %2610 = vmatmul.mubr.f32.gmra.mxu0 %v1973
  %v2611 = vpop.f32.mrf.mxu0
  %v2612 = vadd.f32 0.0, %v2611
  %v2613 = vpop.f32.mrf.mxu0
  %2614 = vdwg.mxu0
  %s2615 = scalar_lea.vmem %s4, 24
  %v2616 = vld [vmem:[%s2615] sm:$0x7f]
  %v2618 = vsel %vm114, %v2616, 0
  %2620 = vmatprep.subr.mxu0 0.0
  %2621 = vmatpush1.msra.mxu0 0.0
  %2622 = vmatprep.subr.mxu0 0.0
  %2623 = vmatpush1.msra.mxu0 0.0
  %2624 = vmatprep.subr.mxu0 0.0
  %2625 = vmatpush1.msra.mxu0 0.0
  %2626 = vmatprep.subr.mxu0 0.0
  %2627 = vmatpush1.msra.mxu0 0.0
  %2628 = vmatprep.subr.mxu0 0.0
  %2629 = vmatpush1.msra.mxu0 0.0
  %2630 = vmatprep.subr.mxu0 0.0
  %2631 = vmatpush1.msra.mxu0 0.0
  %2632 = vmatprep.subr.mxu0 0.0
  %2633 = vmatpush1.msra.mxu0 0.0
  %2634 = vmatprep.subr.mxu0 0.0
  %2635 = vmatpush1.msra.mxu0 0.0
  %2636 = vmatprep.subr.mxu0 0.0
  %2637 = vmatpush1.msra.mxu0 0.0
  %2638 = vmatprep.subr.mxu0 0.0
  %2639 = vmatpush1.msra.mxu0 0.0
  %2640 = vmatprep.subr.mxu0 0.0
  %2641 = vmatpush1.msra.mxu0 0.0
  %2642 = vmatprep.subr.mxu0 0.0
  %2643 = vmatpush1.msra.mxu0 0.0
  %2644 = vmatprep.subr.mxu0 0.0
  %2645 = vmatpush1.msra.mxu0 0.0
  %2646 = vmatprep.subr.mxu0 0.0
  %2647 = vmatpush1.msra.mxu0 0.0
  %2648 = vmatprep.subr.mxu0 0.0
  %2649 = vmatpush1.msra.mxu0 0.0
  %2650 = vmatprep.subr.mxu0 0.0
  %2651 = vmatpush1.msra.mxu0 %v2618
  %2652 = vmatprep.subr.mxu0 0.0
  %2653 = vmatpush2.msra.mxu0 0.0
  %2654 = vmatprep.subr.mxu0 0.0
  %2655 = vmatpush2.msra.mxu0 0.0
  %2656 = vmatprep.subr.mxu0 0.0
  %2657 = vmatpush2.msra.mxu0 0.0
  %2658 = vmatprep.subr.mxu0 0.0
  %2659 = vmatpush2.msra.mxu0 0.0
  %2660 = vmatprep.subr.mxu0 0.0
  %2661 = vmatpush2.msra.mxu0 0.0
  %2662 = vmatprep.subr.mxu0 0.0
  %2663 = vmatpush2.msra.mxu0 0.0
  %2664 = vmatprep.subr.mxu0 0.0
  %2665 = vmatpush2.msra.mxu0 0.0
  %2666 = vmatprep.subr.mxu0 0.0
  %2667 = vmatpush2.msra.mxu0 0.0
  %2668 = vmatprep.subr.mxu0 0.0
  %2669 = vmatpush2.msra.mxu0 0.0
  %2670 = vmatprep.subr.mxu0 0.0
  %2671 = vmatpush2.msra.mxu0 0.0
  %2672 = vmatprep.subr.mxu0 0.0
  %2673 = vmatpush2.msra.mxu0 0.0
  %2674 = vmatprep.subr.mxu0 0.0
  %2675 = vmatpush2.msra.mxu0 0.0
  %2676 = vmatprep.subr.mxu0 0.0
  %2677 = vmatpush2.msra.mxu0 0.0
  %2678 = vmatprep.subr.mxu0 0.0
  %2679 = vmatpush2.msra.mxu0 0.0
  %2680 = vmatprep.subr.mxu0 0.0
  %2681 = vmatpush2.msra.mxu0 0.0
  %2682 = vmatprep.subr.mxu0 0.0
  %2683 = vmatpush2.msra.mxu0 0.0
  %2684 = vmatprep.mubr.f32.mxu0 0.0
  %2685 = vmatmul.mubr.f32.gmra.mxu0 %v1970
  %v2686 = vpop.f32.mrf.mxu0
  %v2687 = vadd.f32 0.0, %v2686
  %v2688 = vpop.f32.mrf.mxu0
  %2689 = vmatprep.mubr.f32.mxu0 0.0
  %2690 = vmatmul.mubr.f32.gmra.mxu0 %v1973
  %v2691 = vpop.f32.mrf.mxu0
  %v2692 = vadd.f32 0.0, %v2691
  %v2693 = vpop.f32.mrf.mxu0
  %2694 = vdwg.mxu0
  %s2695 = scalar_lea.vmem %s5, 24
  %v2696 = vld [vmem:[%s2695] sm:$0x7f]
  %v2698 = vsel %vm114, %v2696, 0
  %2700 = vmatprep.subr.mxu0 0.0
  %2701 = vmatpush1.msra.mxu0 0.0
  %2702 = vmatprep.subr.mxu0 0.0
  %2703 = vmatpush1.msra.mxu0 0.0
  %2704 = vmatprep.subr.mxu0 0.0
  %2705 = vmatpush1.msra.mxu0 0.0
  %2706 = vmatprep.subr.mxu0 0.0
  %2707 = vmatpush1.msra.mxu0 0.0
  %2708 = vmatprep.subr.mxu0 0.0
  %2709 = vmatpush1.msra.mxu0 0.0
  %2710 = vmatprep.subr.mxu0 0.0
  %2711 = vmatpush1.msra.mxu0 0.0
  %2712 = vmatprep.subr.mxu0 0.0
  %2713 = vmatpush1.msra.mxu0 0.0
  %2714 = vmatprep.subr.mxu0 0.0
  %2715 = vmatpush1.msra.mxu0 0.0
  %2716 = vmatprep.subr.mxu0 0.0
  %2717 = vmatpush1.msra.mxu0 0.0
  %2718 = vmatprep.subr.mxu0 0.0
  %2719 = vmatpush1.msra.mxu0 0.0
  %2720 = vmatprep.subr.mxu0 0.0
  %2721 = vmatpush1.msra.mxu0 0.0
  %2722 = vmatprep.subr.mxu0 0.0
  %2723 = vmatpush1.msra.mxu0 0.0
  %2724 = vmatprep.subr.mxu0 0.0
  %2725 = vmatpush1.msra.mxu0 0.0
  %2726 = vmatprep.subr.mxu0 0.0
  %2727 = vmatpush1.msra.mxu0 0.0
  %2728 = vmatprep.subr.mxu0 0.0
  %2729 = vmatpush1.msra.mxu0 0.0
  %2730 = vmatprep.subr.mxu0 0.0
  %2731 = vmatpush1.msra.mxu0 %v2698
  %2732 = vmatprep.subr.mxu0 0.0
  %2733 = vmatpush2.msra.mxu0 0.0
  %2734 = vmatprep.subr.mxu0 0.0
  %2735 = vmatpush2.msra.mxu0 0.0
  %2736 = vmatprep.subr.mxu0 0.0
  %2737 = vmatpush2.msra.mxu0 0.0
  %2738 = vmatprep.subr.mxu0 0.0
  %2739 = vmatpush2.msra.mxu0 0.0
  %2740 = vmatprep.subr.mxu0 0.0
  %2741 = vmatpush2.msra.mxu0 0.0
  %2742 = vmatprep.subr.mxu0 0.0
  %2743 = vmatpush2.msra.mxu0 0.0
  %2744 = vmatprep.subr.mxu0 0.0
  %2745 = vmatpush2.msra.mxu0 0.0
  %2746 = vmatprep.subr.mxu0 0.0
  %2747 = vmatpush2.msra.mxu0 0.0
  %2748 = vmatprep.subr.mxu0 0.0
  %2749 = vmatpush2.msra.mxu0 0.0
  %2750 = vmatprep.subr.mxu0 0.0
  %2751 = vmatpush2.msra.mxu0 0.0
  %2752 = vmatprep.subr.mxu0 0.0
  %2753 = vmatpush2.msra.mxu0 0.0
  %2754 = vmatprep.subr.mxu0 0.0
  %2755 = vmatpush2.msra.mxu0 0.0
  %2756 = vmatprep.subr.mxu0 0.0
  %2757 = vmatpush2.msra.mxu0 0.0
  %2758 = vmatprep.subr.mxu0 0.0
  %2759 = vmatpush2.msra.mxu0 0.0
  %2760 = vmatprep.subr.mxu0 0.0
  %2761 = vmatpush2.msra.mxu0 0.0
  %2762 = vmatprep.subr.mxu0 0.0
  %2763 = vmatpush2.msra.mxu0 0.0
  %2764 = vmatprep.mubr.f32.mxu0 0.0
  %2765 = vmatmul.mubr.f32.gmra.mxu0 %v1970
  %v2766 = vpop.f32.mrf.mxu0
  %v2767 = vadd.f32 0.0, %v2766
  %v2768 = vpop.f32.mrf.mxu0
  %2769 = vmatprep.mubr.f32.mxu0 0.0
  %2770 = vmatmul.mubr.f32.gmra.mxu0 %v1973
  %v2771 = vpop.f32.mrf.mxu0
  %v2772 = vadd.f32 0.0, %v2771
  %v2773 = vpop.f32.mrf.mxu0
  %2774 = vdwg.mxu0
  %v2776 = vsel %vm351, %v2607, 0
  %v2779 = vsel %vm351, %v2687, 0
  %2781 = vmatprep.subr.mxu0 0.0
  %2782 = vmatpush1.xpose.msra.mxu0 0.0
  %2783 = vmatprep.subr.mxu0 0.0
  %2784 = vmatpush1.xpose.msra.mxu0 0.0
  %2785 = vmatprep.subr.mxu0 0.0
  %2786 = vmatpush1.xpose.msra.mxu0 0.0
  %2787 = vmatprep.subr.mxu0 0.0
  %2788 = vmatpush1.xpose.msra.mxu0 0.0
  %2789 = vmatprep.subr.mxu0 0.0
  %2790 = vmatpush1.xpose.msra.mxu0 0.0
  %2791 = vmatprep.subr.mxu0 0.0
  %2792 = vmatpush1.xpose.msra.mxu0 0.0
  %2793 = vmatprep.subr.mxu0 0.0
  %2794 = vmatpush1.xpose.msra.mxu0 0.0
  %2795 = vmatprep.subr.mxu0 0.0
  %2796 = vmatpush1.xpose.msra.mxu0 0.0
  %2797 = vmatprep.subr.mxu0 0.0
  %2798 = vmatpush1.xpose.msra.mxu0 0.0
  %2799 = vmatprep.subr.mxu0 0.0
  %2800 = vmatpush1.xpose.msra.mxu0 0.0
  %2801 = vmatprep.subr.mxu0 0.0
  %2802 = vmatpush1.xpose.msra.mxu0 0.0
  %2803 = vmatprep.subr.mxu0 0.0
  %2804 = vmatpush1.xpose.msra.mxu0 0.0
  %2805 = vmatprep.subr.mxu0 0.0
  %2806 = vmatpush1.xpose.msra.mxu0 0.0
  %2807 = vmatprep.subr.mxu0 0.0
  %2808 = vmatpush1.xpose.msra.mxu0 0.0
  %2809 = vmatprep.subr.mxu0 0.0
  %2810 = vmatpush1.xpose.msra.mxu0 0.0
  %2811 = vmatprep.subr.mxu0 0.0
  %2812 = vmatpush1.xpose.msra.mxu0 %v2779
  %2813 = vmatprep.subr.mxu0 0.0
  %2814 = vmatpush2.xpose.msra.mxu0 0.0
  %2815 = vmatprep.subr.mxu0 0.0
  %2816 = vmatpush2.xpose.msra.mxu0 0.0
  %2817 = vmatprep.subr.mxu0 0.0
  %2818 = vmatpush2.xpose.msra.mxu0 0.0
  %2819 = vmatprep.subr.mxu0 0.0
  %2820 = vmatpush2.xpose.msra.mxu0 0.0
  %2821 = vmatprep.subr.mxu0 0.0
  %2822 = vmatpush2.xpose.msra.mxu0 0.0
  %2823 = vmatprep.subr.mxu0 0.0
  %2824 = vmatpush2.xpose.msra.mxu0 0.0
  %2825 = vmatprep.subr.mxu0 0.0
  %2826 = vmatpush2.xpose.msra.mxu0 0.0
  %2827 = vmatprep.subr.mxu0 0.0
  %2828 = vmatpush2.xpose.msra.mxu0 0.0
  %2829 = vmatprep.subr.mxu0 0.0
  %2830 = vmatpush2.xpose.msra.mxu0 0.0
  %2831 = vmatprep.subr.mxu0 0.0
  %2832 = vmatpush2.xpose.msra.mxu0 0.0
  %2833 = vmatprep.subr.mxu0 0.0
  %2834 = vmatpush2.xpose.msra.mxu0 0.0
  %2835 = vmatprep.subr.mxu0 0.0
  %2836 = vmatpush2.xpose.msra.mxu0 0.0
  %2837 = vmatprep.subr.mxu0 0.0
  %2838 = vmatpush2.xpose.msra.mxu0 0.0
  %2839 = vmatprep.subr.mxu0 0.0
  %2840 = vmatpush2.xpose.msra.mxu0 0.0
  %2841 = vmatprep.subr.mxu0 0.0
  %2842 = vmatpush2.xpose.msra.mxu0 0.0
  %2843 = vmatprep.subr.mxu0 0.0
  %2844 = vmatpush2.xpose.msra.mxu0 0.0
  %2845 = vmatprep.mubr.f32.mxu0 0.0
  %2846 = vmatmul.mubr.f32.gmra.mxu0 %v2776
  %v2847 = vpop.f32.mrf.mxu0
  %v2848 = vadd.f32 0.0, %v2847
  %v2849 = vpop.f32.mrf.mxu0
  %2850 = vdwg.mxu0
  %v2851 = vsel %vm428, %v2848, -inf
  %2852 = vmax.xlane.f32.xlu0 %v2851
  %v2853 = vpop.xlane.xlu0 %2852
  %v2854 = vsub.f32 %v2848, %v2853
  %v2855 = vmul.f32 %v2854, 1.442695
  %v2856 = vpow.pop %v2855
  %v2857 = vsel %vm428, %v2856, 0.0
  %2858 = vadd.xlane.f32.xlu0 %v2857
  %v2859 = vpop.xlane.xlu0 %2858
  %v2860 = vrcp.pop %v2859
  %v2861 = vmul.f32 %v2856, %v2860
  %v2863 = vsel %vm428, %v2861, 0
  %2865 = vmatprep.subr.mxu0 0.0
  %2866 = vmatpush1.msra.mxu0 0.0
  %2867 = vmatprep.subr.mxu0 0.0
  %2868 = vmatpush1.msra.mxu0 0.0
  %2869 = vmatprep.subr.mxu0 0.0
  %2870 = vmatpush1.msra.mxu0 0.0
  %2871 = vmatprep.subr.mxu0 0.0
  %2872 = vmatpush1.msra.mxu0 0.0
  %2873 = vmatprep.subr.mxu0 0.0
  %2874 = vmatpush1.msra.mxu0 0.0
  %2875 = vmatprep.subr.mxu0 0.0
  %2876 = vmatpush1.msra.mxu0 0.0
  %2877 = vmatprep.subr.mxu0 0.0
  %2878 = vmatpush1.msra.mxu0 0.0
  %2879 = vmatprep.subr.mxu0 0.0
  %2880 = vmatpush1.msra.mxu0 0.0
  %2881 = vmatprep.subr.mxu0 0.0
  %2882 = vmatpush1.msra.mxu0 0.0
  %2883 = vmatprep.subr.mxu0 0.0
  %2884 = vmatpush1.msra.mxu0 0.0
  %2885 = vmatprep.subr.mxu0 0.0
  %2886 = vmatpush1.msra.mxu0 0.0
  %2887 = vmatprep.subr.mxu0 0.0
  %2888 = vmatpush1.msra.mxu0 0.0
  %2889 = vmatprep.subr.mxu0 0.0
  %2890 = vmatpush1.msra.mxu0 0.0
  %2891 = vmatprep.subr.mxu0 0.0
  %2892 = vmatpush1.msra.mxu0 0.0
  %2893 = vmatprep.subr.mxu0 0.0
  %2894 = vmatpush1.msra.mxu0 0.0
  %2895 = vmatprep.subr.mxu0 0.0
  %2896 = vmatpush1.msra.mxu0 %v2767
  %2897 = vmatprep.subr.mxu0 0.0
  %2898 = vmatpush2.msra.mxu0 0.0
  %2899 = vmatprep.subr.mxu0 0.0
  %2900 = vmatpush2.msra.mxu0 0.0
  %2901 = vmatprep.subr.mxu0 0.0
  %2902 = vmatpush2.msra.mxu0 0.0
  %2903 = vmatprep.subr.mxu0 0.0
  %2904 = vmatpush2.msra.mxu0 0.0
  %2905 = vmatprep.subr.mxu0 0.0
  %2906 = vmatpush2.msra.mxu0 0.0
  %2907 = vmatprep.subr.mxu0 0.0
  %2908 = vmatpush2.msra.mxu0 0.0
  %2909 = vmatprep.subr.mxu0 0.0
  %2910 = vmatpush2.msra.mxu0 0.0
  %2911 = vmatprep.subr.mxu0 0.0
  %2912 = vmatpush2.msra.mxu0 0.0
  %2913 = vmatprep.subr.mxu0 0.0
  %2914 = vmatpush2.msra.mxu0 0.0
  %2915 = vmatprep.subr.mxu0 0.0
  %2916 = vmatpush2.msra.mxu0 0.0
  %2917 = vmatprep.subr.mxu0 0.0
  %2918 = vmatpush2.msra.mxu0 0.0
  %2919 = vmatprep.subr.mxu0 0.0
  %2920 = vmatpush2.msra.mxu0 0.0
  %2921 = vmatprep.subr.mxu0 0.0
  %2922 = vmatpush2.msra.mxu0 0.0
  %2923 = vmatprep.subr.mxu0 0.0
  %2924 = vmatpush2.msra.mxu0 0.0
  %2925 = vmatprep.subr.mxu0 0.0
  %2926 = vmatpush2.msra.mxu0 0.0
  %2927 = vmatprep.subr.mxu0 0.0
  %2928 = vmatpush2.msra.mxu0 0.0
  %2929 = vmatprep.mubr.f32.mxu0 0.0
  %2930 = vmatmul.mubr.f32.gmra.mxu0 %v2863
  %v2931 = vpop.f32.mrf.mxu0
  %v2932 = vadd.f32 0.0, %v2931
  %v2933 = vpop.f32.mrf.mxu0
  %2934 = vdwg.mxu0
  %s2935 = scalar_lea.vmem %s6, 12
  %v2936 = vld [vmem:[%s2935] sm:$0xf]
  %v2938 = vsel %vm351, %v2932, 0
  %v2941 = vsel %vm1079, %v2936, 0
  %2943 = vmatprep.subr.mxu0 0.0
  %2944 = vmatpush1.msra.mxu0 0.0
  %2945 = vmatprep.subr.mxu0 0.0
  %2946 = vmatpush1.msra.mxu0 0.0
  %2947 = vmatprep.subr.mxu0 0.0
  %2948 = vmatpush1.msra.mxu0 0.0
  %2949 = vmatprep.subr.mxu0 0.0
  %2950 = vmatpush1.msra.mxu0 0.0
  %2951 = vmatprep.subr.mxu0 0.0
  %2952 = vmatpush1.msra.mxu0 0.0
  %2953 = vmatprep.subr.mxu0 0.0
  %2954 = vmatpush1.msra.mxu0 0.0
  %2955 = vmatprep.subr.mxu0 0.0
  %2956 = vmatpush1.msra.mxu0 0.0
  %2957 = vmatprep.subr.mxu0 0.0
  %2958 = vmatpush1.msra.mxu0 0.0
  %2959 = vmatprep.subr.mxu0 0.0
  %2960 = vmatpush1.msra.mxu0 0.0
  %2961 = vmatprep.subr.mxu0 0.0
  %2962 = vmatpush1.msra.mxu0 0.0
  %2963 = vmatprep.subr.mxu0 0.0
  %2964 = vmatpush1.msra.mxu0 0.0
  %2965 = vmatprep.subr.mxu0 0.0
  %2966 = vmatpush1.msra.mxu0 0.0
  %2967 = vmatprep.subr.mxu0 0.0
  %2968 = vmatpush1.msra.mxu0 0.0
  %2969 = vmatprep.subr.mxu0 0.0
  %2970 = vmatpush1.msra.mxu0 0.0
  %2971 = vmatprep.subr.mxu0 0.0
  %2972 = vmatpush1.msra.mxu0 0.0
  %2973 = vmatprep.subr.mxu0 0.0
  %2974 = vmatpush1.msra.mxu0 %v2941
  %2975 = vmatprep.subr.mxu0 0.0
  %2976 = vmatpush2.msra.mxu0 0.0
  %2977 = vmatprep.subr.mxu0 0.0
  %2978 = vmatpush2.msra.mxu0 0.0
  %2979 = vmatprep.subr.mxu0 0.0
  %2980 = vmatpush2.msra.mxu0 0.0
  %2981 = vmatprep.subr.mxu0 0.0
  %2982 = vmatpush2.msra.mxu0 0.0
  %2983 = vmatprep.subr.mxu0 0.0
  %2984 = vmatpush2.msra.mxu0 0.0
  %2985 = vmatprep.subr.mxu0 0.0
  %2986 = vmatpush2.msra.mxu0 0.0
  %2987 = vmatprep.subr.mxu0 0.0
  %2988 = vmatpush2.msra.mxu0 0.0
  %2989 = vmatprep.subr.mxu0 0.0
  %2990 = vmatpush2.msra.mxu0 0.0
  %2991 = vmatprep.subr.mxu0 0.0
  %2992 = vmatpush2.msra.mxu0 0.0
  %2993 = vmatprep.subr.mxu0 0.0
  %2994 = vmatpush2.msra.mxu0 0.0
  %2995 = vmatprep.subr.mxu0 0.0
  %2996 = vmatpush2.msra.mxu0 0.0
  %2997 = vmatprep.subr.mxu0 0.0
  %2998 = vmatpush2.msra.mxu0 0.0
  %2999 = vmatprep.subr.mxu0 0.0
  %3000 = vmatpush2.msra.mxu0 0.0
  %3001 = vmatprep.subr.mxu0 0.0
  %3002 = vmatpush2.msra.mxu0 0.0
  %3003 = vmatprep.subr.mxu0 0.0
  %3004 = vmatpush2.msra.mxu0 0.0
  %3005 = vmatprep.subr.mxu0 0.0
  %3006 = vmatpush2.msra.mxu0 0.0
  %3007 = vmatprep.mubr.f32.mxu0 0.0
  %3008 = vmatmul.mubr.f32.gmra.mxu0 %v2938
  %v3009 = vpop.f32.mrf.mxu0
  %v3010 = vadd.f32 0.0, %v3009
  %v3011 = vpop.f32.mrf.mxu0
  %3012 = vdwg.mxu0
  %v3014 = vsel %vm351, %v2370, 0
  %v3017 = vsel %vm1079, %v2374, 0
  %3019 = vmatprep.subr.mxu0 0.0
  %3020 = vmatpush1.msra.mxu0 0.0
  %3021 = vmatprep.subr.mxu0 0.0
  %3022 = vmatpush1.msra.mxu0 0.0
  %3023 = vmatprep.subr.mxu0 0.0
  %3024 = vmatpush1.msra.mxu0 0.0
  %3025 = vmatprep.subr.mxu0 0.0
  %3026 = vmatpush1.msra.mxu0 0.0
  %3027 = vmatprep.subr.mxu0 0.0
  %3028 = vmatpush1.msra.mxu0 0.0
  %3029 = vmatprep.subr.mxu0 0.0
  %3030 = vmatpush1.msra.mxu0 0.0
  %3031 = vmatprep.subr.mxu0 0.0
  %3032 = vmatpush1.msra.mxu0 0.0
  %3033 = vmatprep.subr.mxu0 0.0
  %3034 = vmatpush1.msra.mxu0 0.0
  %3035 = vmatprep.subr.mxu0 0.0
  %3036 = vmatpush1.msra.mxu0 0.0
  %3037 = vmatprep.subr.mxu0 0.0
  %3038 = vmatpush1.msra.mxu0 0.0
  %3039 = vmatprep.subr.mxu0 0.0
  %3040 = vmatpush1.msra.mxu0 0.0
  %3041 = vmatprep.subr.mxu0 0.0
  %3042 = vmatpush1.msra.mxu0 0.0
  %3043 = vmatprep.subr.mxu0 0.0
  %3044 = vmatpush1.msra.mxu0 0.0
  %3045 = vmatprep.subr.mxu0 0.0
  %3046 = vmatpush1.msra.mxu0 0.0
  %3047 = vmatprep.subr.mxu0 0.0
  %3048 = vmatpush1.msra.mxu0 0.0
  %3049 = vmatprep.subr.mxu0 0.0
  %3050 = vmatpush1.msra.mxu0 %v3017
  %3051 = vmatprep.subr.mxu0 0.0
  %3052 = vmatpush2.msra.mxu0 0.0
  %3053 = vmatprep.subr.mxu0 0.0
  %3054 = vmatpush2.msra.mxu0 0.0
  %3055 = vmatprep.subr.mxu0 0.0
  %3056 = vmatpush2.msra.mxu0 0.0
  %3057 = vmatprep.subr.mxu0 0.0
  %3058 = vmatpush2.msra.mxu0 0.0
  %3059 = vmatprep.subr.mxu0 0.0
  %3060 = vmatpush2.msra.mxu0 0.0
  %3061 = vmatprep.subr.mxu0 0.0
  %3062 = vmatpush2.msra.mxu0 0.0
  %3063 = vmatprep.subr.mxu0 0.0
  %3064 = vmatpush2.msra.mxu0 0.0
  %3065 = vmatprep.subr.mxu0 0.0
  %3066 = vmatpush2.msra.mxu0 0.0
  %3067 = vmatprep.subr.mxu0 0.0
  %3068 = vmatpush2.msra.mxu0 0.0
  %3069 = vmatprep.subr.mxu0 0.0
  %3070 = vmatpush2.msra.mxu0 0.0
  %3071 = vmatprep.subr.mxu0 0.0
  %3072 = vmatpush2.msra.mxu0 0.0
  %3073 = vmatprep.subr.mxu0 0.0
  %3074 = vmatpush2.msra.mxu0 0.0
  %3075 = vmatprep.subr.mxu0 0.0
  %3076 = vmatpush2.msra.mxu0 0.0
  %3077 = vmatprep.subr.mxu0 0.0
  %3078 = vmatpush2.msra.mxu0 0.0
  %3079 = vmatprep.subr.mxu0 0.0
  %3080 = vmatpush2.msra.mxu0 0.0
  %3081 = vmatprep.subr.mxu0 0.0
  %3082 = vmatpush2.msra.mxu0 0.0
  %3083 = vmatprep.mubr.f32.mxu0 0.0
  %3084 = vmatmul.mubr.f32.gmra.mxu0 %v3014
  %v3085 = vpop.f32.mrf.mxu0
  %v3086 = vadd.f32 %v3010, %v3085
  %v3087 = vpop.f32.mrf.mxu0
  %3088 = vdwg.mxu0
  %v3090 = vsel %vm351, %v2612, 0
  %v3093 = vsel %vm351, %v2692, 0
  %3095 = vmatprep.subr.mxu0 0.0
  %3096 = vmatpush1.xpose.msra.mxu0 0.0
  %3097 = vmatprep.subr.mxu0 0.0
  %3098 = vmatpush1.xpose.msra.mxu0 0.0
  %3099 = vmatprep.subr.mxu0 0.0
  %3100 = vmatpush1.xpose.msra.mxu0 0.0
  %3101 = vmatprep.subr.mxu0 0.0
  %3102 = vmatpush1.xpose.msra.mxu0 0.0
  %3103 = vmatprep.subr.mxu0 0.0
  %3104 = vmatpush1.xpose.msra.mxu0 0.0
  %3105 = vmatprep.subr.mxu0 0.0
  %3106 = vmatpush1.xpose.msra.mxu0 0.0
  %3107 = vmatprep.subr.mxu0 0.0
  %3108 = vmatpush1.xpose.msra.mxu0 0.0
  %3109 = vmatprep.subr.mxu0 0.0
  %3110 = vmatpush1.xpose.msra.mxu0 0.0
  %3111 = vmatprep.subr.mxu0 0.0
  %3112 = vmatpush1.xpose.msra.mxu0 0.0
  %3113 = vmatprep.subr.mxu0 0.0
  %3114 = vmatpush1.xpose.msra.mxu0 0.0
  %3115 = vmatprep.subr.mxu0 0.0
  %3116 = vmatpush1.xpose.msra.mxu0 0.0
  %3117 = vmatprep.subr.mxu0 0.0
  %3118 = vmatpush1.xpose.msra.mxu0 0.0
  %3119 = vmatprep.subr.mxu0 0.0
  %3120 = vmatpush1.xpose.msra.mxu0 0.0
  %3121 = vmatprep.subr.mxu0 0.0
  %3122 = vmatpush1.xpose.msra.mxu0 0.0
  %3123 = vmatprep.subr.mxu0 0.0
  %3124 = vmatpush1.xpose.msra.mxu0 0.0
  %3125 = vmatprep.subr.mxu0 0.0
  %3126 = vmatpush1.xpose.msra.mxu0 %v3093
  %3127 = vmatprep.subr.mxu0 0.0
  %3128 = vmatpush2.xpose.msra.mxu0 0.0
  %3129 = vmatprep.subr.mxu0 0.0
  %3130 = vmatpush2.xpose.msra.mxu0 0.0
  %3131 = vmatprep.subr.mxu0 0.0
  %3132 = vmatpush2.xpose.msra.mxu0 0.0
  %3133 = vmatprep.subr.mxu0 0.0
  %3134 = vmatpush2.xpose.msra.mxu0 0.0
  %3135 = vmatprep.subr.mxu0 0.0
  %3136 = vmatpush2.xpose.msra.mxu0 0.0
  %3137 = vmatprep.subr.mxu0 0.0
  %3138 = vmatpush2.xpose.msra.mxu0 0.0
  %3139 = vmatprep.subr.mxu0 0.0
  %3140 = vmatpush2.xpose.msra.mxu0 0.0
  %3141 = vmatprep.subr.mxu0 0.0
  %3142 = vmatpush2.xpose.msra.mxu0 0.0
  %3143 = vmatprep.subr.mxu0 0.0
  %3144 = vmatpush2.xpose.msra.mxu0 0.0
  %3145 = vmatprep.subr.mxu0 0.0
  %3146 = vmatpush2.xpose.msra.mxu0 0.0
  %3147 = vmatprep.subr.mxu0 0.0
  %3148 = vmatpush2.xpose.msra.mxu0 0.0
  %3149 = vmatprep.subr.mxu0 0.0
  %3150 = vmatpush2.xpose.msra.mxu0 0.0
  %3151 = vmatprep.subr.mxu0 0.0
  %3152 = vmatpush2.xpose.msra.mxu0 0.0
  %3153 = vmatprep.subr.mxu0 0.0
  %3154 = vmatpush2.xpose.msra.mxu0 0.0
  %3155 = vmatprep.subr.mxu0 0.0
  %3156 = vmatpush2.xpose.msra.mxu0 0.0
  %3157 = vmatprep.subr.mxu0 0.0
  %3158 = vmatpush2.xpose.msra.mxu0 0.0
  %3159 = vmatprep.mubr.f32.mxu0 0.0
  %3160 = vmatmul.mubr.f32.gmra.mxu0 %v3090
  %v3161 = vpop.f32.mrf.mxu0
  %v3162 = vadd.f32 0.0, %v3161
  %v3163 = vpop.f32.mrf.mxu0
  %3164 = vdwg.mxu0
  %v3165 = vsel %vm428, %v3162, -inf
  %3166 = vmax.xlane.f32.xlu0 %v3165
  %v3167 = vpop.xlane.xlu0 %3166
  %v3168 = vsub.f32 %v3162, %v3167
  %v3169 = vmul.f32 %v3168, 1.442695
  %v3170 = vpow.pop %v3169
  %v3171 = vsel %vm428, %v3170, 0.0
  %3172 = vadd.xlane.f32.xlu0 %v3171
  %v3173 = vpop.xlane.xlu0 %3172
  %v3174 = vrcp.pop %v3173
  %v3175 = vmul.f32 %v3170, %v3174
  %v3177 = vsel %vm428, %v3175, 0
  %3179 = vmatprep.subr.mxu0 0.0
  %3180 = vmatpush1.msra.mxu0 0.0
  %3181 = vmatprep.subr.mxu0 0.0
  %3182 = vmatpush1.msra.mxu0 0.0
  %3183 = vmatprep.subr.mxu0 0.0
  %3184 = vmatpush1.msra.mxu0 0.0
  %3185 = vmatprep.subr.mxu0 0.0
  %3186 = vmatpush1.msra.mxu0 0.0
  %3187 = vmatprep.subr.mxu0 0.0
  %3188 = vmatpush1.msra.mxu0 0.0
  %3189 = vmatprep.subr.mxu0 0.0
  %3190 = vmatpush1.msra.mxu0 0.0
  %3191 = vmatprep.subr.mxu0 0.0
  %3192 = vmatpush1.msra.mxu0 0.0
  %3193 = vmatprep.subr.mxu0 0.0
  %3194 = vmatpush1.msra.mxu0 0.0
  %3195 = vmatprep.subr.mxu0 0.0
  %3196 = vmatpush1.msra.mxu0 0.0
  %3197 = vmatprep.subr.mxu0 0.0
  %3198 = vmatpush1.msra.mxu0 0.0
  %3199 = vmatprep.subr.mxu0 0.0
  %3200 = vmatpush1.msra.mxu0 0.0
  %3201 = vmatprep.subr.mxu0 0.0
  %3202 = vmatpush1.msra.mxu0 0.0
  %3203 = vmatprep.subr.mxu0 0.0
  %3204 = vmatpush1.msra.mxu0 0.0
  %3205 = vmatprep.subr.mxu0 0.0
  %3206 = vmatpush1.msra.mxu0 0.0
  %3207 = vmatprep.subr.mxu0 0.0
  %3208 = vmatpush1.msra.mxu0 0.0
  %3209 = vmatprep.subr.mxu0 0.0
  %3210 = vmatpush1.msra.mxu0 %v2772
  %3211 = vmatprep.subr.mxu0 0.0
  %3212 = vmatpush2.msra.mxu0 0.0
  %3213 = vmatprep.subr.mxu0 0.0
  %3214 = vmatpush2.msra.mxu0 0.0
  %3215 = vmatprep.subr.mxu0 0.0
  %3216 = vmatpush2.msra.mxu0 0.0
  %3217 = vmatprep.subr.mxu0 0.0
  %3218 = vmatpush2.msra.mxu0 0.0
  %3219 = vmatprep.subr.mxu0 0.0
  %3220 = vmatpush2.msra.mxu0 0.0
  %3221 = vmatprep.subr.mxu0 0.0
  %3222 = vmatpush2.msra.mxu0 0.0
  %3223 = vmatprep.subr.mxu0 0.0
  %3224 = vmatpush2.msra.mxu0 0.0
  %3225 = vmatprep.subr.mxu0 0.0
  %3226 = vmatpush2.msra.mxu0 0.0
  %3227 = vmatprep.subr.mxu0 0.0
  %3228 = vmatpush2.msra.mxu0 0.0
  %3229 = vmatprep.subr.mxu0 0.0
  %3230 = vmatpush2.msra.mxu0 0.0
  %3231 = vmatprep.subr.mxu0 0.0
  %3232 = vmatpush2.msra.mxu0 0.0
  %3233 = vmatprep.subr.mxu0 0.0
  %3234 = vmatpush2.msra.mxu0 0.0
  %3235 = vmatprep.subr.mxu0 0.0
  %3236 = vmatpush2.msra.mxu0 0.0
  %3237 = vmatprep.subr.mxu0 0.0
  %3238 = vmatpush2.msra.mxu0 0.0
  %3239 = vmatprep.subr.mxu0 0.0
  %3240 = vmatpush2.msra.mxu0 0.0
  %3241 = vmatprep.subr.mxu0 0.0
  %3242 = vmatpush2.msra.mxu0 0.0
  %3243 = vmatprep.mubr.f32.mxu0 0.0
  %3244 = vmatmul.mubr.f32.gmra.mxu0 %v3177
  %v3245 = vpop.f32.mrf.mxu0
  %v3246 = vadd.f32 0.0, %v3245
  %v3247 = vpop.f32.mrf.mxu0
  %3248 = vdwg.mxu0
  %v3250 = vsel %vm351, %v3246, 0
  %3252 = vmatprep.subr.mxu0 0.0
  %3253 = vmatpush1.msra.mxu0 0.0
  %3254 = vmatprep.subr.mxu0 0.0
  %3255 = vmatpush1.msra.mxu0 0.0
  %3256 = vmatprep.subr.mxu0 0.0
  %3257 = vmatpush1.msra.mxu0 0.0
  %3258 = vmatprep.subr.mxu0 0.0
  %3259 = vmatpush1.msra.mxu0 0.0
  %3260 = vmatprep.subr.mxu0 0.0
  %3261 = vmatpush1.msra.mxu0 0.0
  %3262 = vmatprep.subr.mxu0 0.0
  %3263 = vmatpush1.msra.mxu0 0.0
  %3264 = vmatprep.subr.mxu0 0.0
  %3265 = vmatpush1.msra.mxu0 0.0
  %3266 = vmatprep.subr.mxu0 0.0
  %3267 = vmatpush1.msra.mxu0 0.0
  %3268 = vmatprep.subr.mxu0 0.0
  %3269 = vmatpush1.msra.mxu0 0.0
  %3270 = vmatprep.subr.mxu0 0.0
  %3271 = vmatpush1.msra.mxu0 0.0
  %3272 = vmatprep.subr.mxu0 0.0
  %3273 = vmatpush1.msra.mxu0 0.0
  %3274 = vmatprep.subr.mxu0 0.0
  %3275 = vmatpush1.msra.mxu0 0.0
  %3276 = vmatprep.subr.mxu0 0.0
  %3277 = vmatpush1.msra.mxu0 0.0
  %3278 = vmatprep.subr.mxu0 0.0
  %3279 = vmatpush1.msra.mxu0 0.0
  %3280 = vmatprep.subr.mxu0 0.0
  %3281 = vmatpush1.msra.mxu0 0.0
  %3282 = vmatprep.subr.mxu0 0.0
  %3283 = vmatpush1.msra.mxu0 %v2941
  %3284 = vmatprep.subr.mxu0 0.0
  %3285 = vmatpush2.msra.mxu0 0.0
  %3286 = vmatprep.subr.mxu0 0.0
  %3287 = vmatpush2.msra.mxu0 0.0
  %3288 = vmatprep.subr.mxu0 0.0
  %3289 = vmatpush2.msra.mxu0 0.0
  %3290 = vmatprep.subr.mxu0 0.0
  %3291 = vmatpush2.msra.mxu0 0.0
  %3292 = vmatprep.subr.mxu0 0.0
  %3293 = vmatpush2.msra.mxu0 0.0
  %3294 = vmatprep.subr.mxu0 0.0
  %3295 = vmatpush2.msra.mxu0 0.0
  %3296 = vmatprep.subr.mxu0 0.0
  %3297 = vmatpush2.msra.mxu0 0.0
  %3298 = vmatprep.subr.mxu0 0.0
  %3299 = vmatpush2.msra.mxu0 0.0
  %3300 = vmatprep.subr.mxu0 0.0
  %3301 = vmatpush2.msra.mxu0 0.0
  %3302 = vmatprep.subr.mxu0 0.0
  %3303 = vmatpush2.msra.mxu0 0.0
  %3304 = vmatprep.subr.mxu0 0.0
  %3305 = vmatpush2.msra.mxu0 0.0
  %3306 = vmatprep.subr.mxu0 0.0
  %3307 = vmatpush2.msra.mxu0 0.0
  %3308 = vmatprep.subr.mxu0 0.0
  %3309 = vmatpush2.msra.mxu0 0.0
  %3310 = vmatprep.subr.mxu0 0.0
  %3311 = vmatpush2.msra.mxu0 0.0
  %3312 = vmatprep.subr.mxu0 0.0
  %3313 = vmatpush2.msra.mxu0 0.0
  %3314 = vmatprep.subr.mxu0 0.0
  %3315 = vmatpush2.msra.mxu0 0.0
  %3316 = vmatprep.mubr.f32.mxu0 0.0
  %3317 = vmatmul.mubr.f32.gmra.mxu0 %v3250
  %v3318 = vpop.f32.mrf.mxu0
  %v3319 = vadd.f32 0.0, %v3318
  %v3320 = vpop.f32.mrf.mxu0
  %3321 = vdwg.mxu0
  %v3323 = vsel %vm351, %v2532, 0
  %3325 = vmatprep.subr.mxu0 0.0
  %3326 = vmatpush1.msra.mxu0 0.0
  %3327 = vmatprep.subr.mxu0 0.0
  %3328 = vmatpush1.msra.mxu0 0.0
  %3329 = vmatprep.subr.mxu0 0.0
  %3330 = vmatpush1.msra.mxu0 0.0
  %3331 = vmatprep.subr.mxu0 0.0
  %3332 = vmatpush1.msra.mxu0 0.0
  %3333 = vmatprep.subr.mxu0 0.0
  %3334 = vmatpush1.msra.mxu0 0.0
  %3335 = vmatprep.subr.mxu0 0.0
  %3336 = vmatpush1.msra.mxu0 0.0
  %3337 = vmatprep.subr.mxu0 0.0
  %3338 = vmatpush1.msra.mxu0 0.0
  %3339 = vmatprep.subr.mxu0 0.0
  %3340 = vmatpush1.msra.mxu0 0.0
  %3341 = vmatprep.subr.mxu0 0.0
  %3342 = vmatpush1.msra.mxu0 0.0
  %3343 = vmatprep.subr.mxu0 0.0
  %3344 = vmatpush1.msra.mxu0 0.0
  %3345 = vmatprep.subr.mxu0 0.0
  %3346 = vmatpush1.msra.mxu0 0.0
  %3347 = vmatprep.subr.mxu0 0.0
  %3348 = vmatpush1.msra.mxu0 0.0
  %3349 = vmatprep.subr.mxu0 0.0
  %3350 = vmatpush1.msra.mxu0 0.0
  %3351 = vmatprep.subr.mxu0 0.0
  %3352 = vmatpush1.msra.mxu0 0.0
  %3353 = vmatprep.subr.mxu0 0.0
  %3354 = vmatpush1.msra.mxu0 0.0
  %3355 = vmatprep.subr.mxu0 0.0
  %3356 = vmatpush1.msra.mxu0 %v3017
  %3357 = vmatprep.subr.mxu0 0.0
  %3358 = vmatpush2.msra.mxu0 0.0
  %3359 = vmatprep.subr.mxu0 0.0
  %3360 = vmatpush2.msra.mxu0 0.0
  %3361 = vmatprep.subr.mxu0 0.0
  %3362 = vmatpush2.msra.mxu0 0.0
  %3363 = vmatprep.subr.mxu0 0.0
  %3364 = vmatpush2.msra.mxu0 0.0
  %3365 = vmatprep.subr.mxu0 0.0
  %3366 = vmatpush2.msra.mxu0 0.0
  %3367 = vmatprep.subr.mxu0 0.0
  %3368 = vmatpush2.msra.mxu0 0.0
  %3369 = vmatprep.subr.mxu0 0.0
  %3370 = vmatpush2.msra.mxu0 0.0
  %3371 = vmatprep.subr.mxu0 0.0
  %3372 = vmatpush2.msra.mxu0 0.0
  %3373 = vmatprep.subr.mxu0 0.0
  %3374 = vmatpush2.msra.mxu0 0.0
  %3375 = vmatprep.subr.mxu0 0.0
  %3376 = vmatpush2.msra.mxu0 0.0
  %3377 = vmatprep.subr.mxu0 0.0
  %3378 = vmatpush2.msra.mxu0 0.0
  %3379 = vmatprep.subr.mxu0 0.0
  %3380 = vmatpush2.msra.mxu0 0.0
  %3381 = vmatprep.subr.mxu0 0.0
  %3382 = vmatpush2.msra.mxu0 0.0
  %3383 = vmatprep.subr.mxu0 0.0
  %3384 = vmatpush2.msra.mxu0 0.0
  %3385 = vmatprep.subr.mxu0 0.0
  %3386 = vmatpush2.msra.mxu0 0.0
  %3387 = vmatprep.subr.mxu0 0.0
  %3388 = vmatpush2.msra.mxu0 0.0
  %3389 = vmatprep.mubr.f32.mxu0 0.0
  %3390 = vmatmul.mubr.f32.gmra.mxu0 %v3323
  %v3391 = vpop.f32.mrf.mxu0
  %v3392 = vadd.f32 %v3319, %v3391
  %v3393 = vpop.f32.mrf.mxu0
  %3394 = vdwg.mxu0
  %s3395 = scalar_lea.vmem %s7, 1
  %v3396 = vld [vmem:[%s3395] sm:$0x1]
  %v3398 = vlaneseq
  %v3399 = vshrl.u32 %v3398, 7
  %v3400 = vsub.s32 0, %v3399
  %v3401 = vrot.slane %v3396, %v3400
  %v3403 = vadd.f32 %v3086, %v3401
  %v3404 = vadd.f32 %v3392, %v3401
  %v3405 = vadd.f32 %v1919, %v3403
  %v3406 = vadd.f32 %v1920, %v3404
  %s3407 = scalar_lea.vmem %s8, 1
  %v3408 = vld [vmem:[%s3407] sm:$0x1]
  %s3409 = scalar_lea.vmem %s9, 1
  %v3410 = vld [vmem:[%s3409] sm:$0x1]
  %v3411 = vsel %vm63, %v3405, 0.0
  %3412 = vadd.xlane.f32.xlu0 %v3411
  %v3413 = vpop.xlane.xlu0 %3412
  %v3414 = vsel %vm63, %v3406, 0.0
  %3415 = vadd.xlane.f32.xlu0 %v3414
  %v3416 = vpop.xlane.xlu0 %3415
  %v3417 = vmul.f32 %v3413, %v70
  %v3418 = vmul.f32 %v3416, %v70
  %v3419 = vsub.f32 %v3405, %v3417
  %v3420 = vsub.f32 %v3406, %v3418
  %v3421 = vmul.f32 %v3419, %v3419
  %v3422 = vmul.f32 %v3420, %v3420
  %v3423 = vsel %vm63, %v3421, 0.0
  %3424 = vadd.xlane.f32.xlu0 %v3423
  %v3425 = vpop.xlane.xlu0 %3424
  %v3426 = vsel %vm63, %v3422, 0.0
  %3427 = vadd.xlane.f32.xlu0 %v3426
  %v3428 = vpop.xlane.xlu0 %3427
  %v3429 = vmul.f32 %v3425, %v70
  %v3430 = vmul.f32 %v3428, %v70
  %v3431 = vadd.f32 %v3429, 1e-05
  %v3432 = vadd.f32 %v3430, 1e-05
  %v3433 = vrsqrt.pop %v3431
  %v3434 = vrsqrt.pop %v3432
  %v3435 = vmul.f32 %v3419, %v3433
  %v3436 = vmul.f32 %v3420, %v3434
  %v3438 = vlaneseq
  %v3439 = vshrl.u32 %v3438, 7
  %v3440 = vsub.s32 0, %v3439
  %v3441 = vrot.slane %v3408, %v3440
  %v3443 = vmul.f32 %v3435, %v3441
  %v3444 = vmul.f32 %v3436, %v3441
  %v3446 = vlaneseq
  %v3447 = vshrl.u32 %v3446, 7
  %v3448 = vsub.s32 0, %v3447
  %v3449 = vrot.slane %v3410, %v3448
  %v3451 = vadd.f32 %v3443, %v3449
  %v3452 = vadd.f32 %v3444, %v3449
  %s3453 = scalar_lea.vmem %s10, 8
  %v3454 = vld [vmem:[%s3453] sm:$0x7f]
  %s3455 = scalar_lea.vmem %s11, 1
  %v3456 = vld [vmem:[%s3455] sm:$0x1]
  %v3458 = vlaneseq
  %v3459 = vshrl.u32 %v3458, 7
  %v3460 = vsub.s32 0, %v3459
  %v3461 = vrot.slane %v3456, %v3460
  %v3464 = vsel %vm63, %v3451, 0
  %v3467 = vsel %vm63, %v3452, 0
  %v3470 = vsel %vm114, %v3454, 0
  %3472 = vmatprep.subr.mxu0 0.0
  %3473 = vmatpush1.msra.mxu0 0.0
  %3474 = vmatprep.subr.mxu0 0.0
  %3475 = vmatpush1.msra.mxu0 0.0
  %3476 = vmatprep.subr.mxu0 0.0
  %3477 = vmatpush1.msra.mxu0 0.0
  %3478 = vmatprep.subr.mxu0 0.0
  %3479 = vmatpush1.msra.mxu0 0.0
  %3480 = vmatprep.subr.mxu0 0.0
  %3481 = vmatpush1.msra.mxu0 0.0
  %3482 = vmatprep.subr.mxu0 0.0
  %3483 = vmatpush1.msra.mxu0 0.0
  %3484 = vmatprep.subr.mxu0 0.0
  %3485 = vmatpush1.msra.mxu0 0.0
  %3486 = vmatprep.subr.mxu0 0.0
  %3487 = vmatpush1.msra.mxu0 0.0
  %3488 = vmatprep.subr.mxu0 0.0
  %3489 = vmatpush1.msra.mxu0 0.0
  %3490 = vmatprep.subr.mxu0 0.0
  %3491 = vmatpush1.msra.mxu0 0.0
  %3492 = vmatprep.subr.mxu0 0.0
  %3493 = vmatpush1.msra.mxu0 0.0
  %3494 = vmatprep.subr.mxu0 0.0
  %3495 = vmatpush1.msra.mxu0 0.0
  %3496 = vmatprep.subr.mxu0 0.0
  %3497 = vmatpush1.msra.mxu0 0.0
  %3498 = vmatprep.subr.mxu0 0.0
  %3499 = vmatpush1.msra.mxu0 0.0
  %3500 = vmatprep.subr.mxu0 0.0
  %3501 = vmatpush1.msra.mxu0 0.0
  %3502 = vmatprep.subr.mxu0 0.0
  %3503 = vmatpush1.msra.mxu0 %v3470
  %3504 = vmatprep.subr.mxu0 0.0
  %3505 = vmatpush2.msra.mxu0 0.0
  %3506 = vmatprep.subr.mxu0 0.0
  %3507 = vmatpush2.msra.mxu0 0.0
  %3508 = vmatprep.subr.mxu0 0.0
  %3509 = vmatpush2.msra.mxu0 0.0
  %3510 = vmatprep.subr.mxu0 0.0
  %3511 = vmatpush2.msra.mxu0 0.0
  %3512 = vmatprep.subr.mxu0 0.0
  %3513 = vmatpush2.msra.mxu0 0.0
  %3514 = vmatprep.subr.mxu0 0.0
  %3515 = vmatpush2.msra.mxu0 0.0
  %3516 = vmatprep.subr.mxu0 0.0
  %3517 = vmatpush2.msra.mxu0 0.0
  %3518 = vmatprep.subr.mxu0 0.0
  %3519 = vmatpush2.msra.mxu0 0.0
  %3520 = vmatprep.subr.mxu0 0.0
  %3521 = vmatpush2.msra.mxu0 0.0
  %3522 = vmatprep.subr.mxu0 0.0
  %3523 = vmatpush2.msra.mxu0 0.0
  %3524 = vmatprep.subr.mxu0 0.0
  %3525 = vmatpush2.msra.mxu0 0.0
  %3526 = vmatprep.subr.mxu0 0.0
  %3527 = vmatpush2.msra.mxu0 0.0
  %3528 = vmatprep.subr.mxu0 0.0
  %3529 = vmatpush2.msra.mxu0 0.0
  %3530 = vmatprep.subr.mxu0 0.0
  %3531 = vmatpush2.msra.mxu0 0.0
  %3532 = vmatprep.subr.mxu0 0.0
  %3533 = vmatpush2.msra.mxu0 0.0
  %3534 = vmatprep.subr.mxu0 0.0
  %3535 = vmatpush2.msra.mxu0 0.0
  %3536 = vmatprep.mubr.f32.mxu0 0.0
  %3537 = vmatmul.mubr.f32.gmra.mxu0 %v3464
  %v3538 = vpop.f32.mrf.mxu0
  %v3539 = vadd.f32 %v3461, %v3538
  %v3540 = vpop.f32.mrf.mxu0
  %3541 = vmatprep.mubr.f32.mxu0 0.0
  %3542 = vmatmul.mubr.f32.gmra.mxu0 %v3467
  %v3543 = vpop.f32.mrf.mxu0
  %v3544 = vadd.f32 %v3461, %v3543
  %v3545 = vpop.f32.mrf.mxu0
  %3546 = vdwg.mxu0
  %v3547 = vmul.f32 %v3539, 0.5
  %v3548 = vmul.f32 %v3544, 0.5
  %v3549 = vmul.f32 %v3539, 0.70710677
  %v3550 = vmul.f32 %v3544, 0.70710677
  %v3551 = verf.f32.pop %v3549
  %v3552 = verf.f32.pop %v3550
  %v3553 = vadd.f32 %v3551, 1.0
  %v3554 = vadd.f32 %v3552, 1.0
  %v3555 = vmul.f32 %v3547, %v3553
  %v3556 = vmul.f32 %v3548, %v3554
  %s3557 = scalar_lea.vmem %s12, 16
  %v3558 = vld [vmem:[%s3557] sm:$0xff]
  %v3559 = vld [vmem:[%s3557 + $0x8] sm:$0xff]
  %s3560 = scalar_lea.vmem %s13, 1
  %v3561 = vld [vmem:[%s3560] sm:$0x1]
  %v3563 = vlaneseq
  %v3564 = vshrl.u32 %v3563, 7
  %v3565 = vsub.s32 0, %v3564
  %v3566 = vrot.slane %v3561, %v3565
  %v3569 = vsel %vm1701, %v3555, 0
  %v3572 = vsel %vm1701, %v3556, 0
  %3574 = vmatprep.subr.mxu0 0.0
  %3575 = vmatpush1.msra.mxu0 0.0
  %3576 = vmatprep.subr.mxu0 0.0
  %3577 = vmatpush1.msra.mxu0 0.0
  %3578 = vmatprep.subr.mxu0 0.0
  %3579 = vmatpush1.msra.mxu0 0.0
  %3580 = vmatprep.subr.mxu0 0.0
  %3581 = vmatpush1.msra.mxu0 0.0
  %3582 = vmatprep.subr.mxu0 0.0
  %3583 = vmatpush1.msra.mxu0 0.0
  %3584 = vmatprep.subr.mxu0 0.0
  %3585 = vmatpush1.msra.mxu0 0.0
  %3586 = vmatprep.subr.mxu0 0.0
  %3587 = vmatpush1.msra.mxu0 0.0
  %3588 = vmatprep.subr.mxu0 0.0
  %3589 = vmatpush1.msra.mxu0 0.0
  %3590 = vmatprep.subr.mxu0 0.0
  %3591 = vmatpush1.msra.mxu0 0.0
  %3592 = vmatprep.subr.mxu0 0.0
  %3593 = vmatpush1.msra.mxu0 0.0
  %3594 = vmatprep.subr.mxu0 0.0
  %3595 = vmatpush1.msra.mxu0 0.0
  %3596 = vmatprep.subr.mxu0 0.0
  %3597 = vmatpush1.msra.mxu0 0.0
  %3598 = vmatprep.subr.mxu0 0.0
  %3599 = vmatpush1.msra.mxu0 0.0
  %3600 = vmatprep.subr.mxu0 0.0
  %3601 = vmatpush1.msra.mxu0 0.0
  %3602 = vmatprep.subr.mxu0 0.0
  %3603 = vmatpush1.msra.mxu0 %v3559
  %3604 = vmatprep.subr.mxu0 0.0
  %3605 = vmatpush1.msra.mxu0 %v3558
  %3606 = vmatprep.subr.mxu0 0.0
  %3607 = vmatpush2.msra.mxu0 0.0
  %3608 = vmatprep.subr.mxu0 0.0
  %3609 = vmatpush2.msra.mxu0 0.0
  %3610 = vmatprep.subr.mxu0 0.0
  %3611 = vmatpush2.msra.mxu0 0.0
  %3612 = vmatprep.subr.mxu0 0.0
  %3613 = vmatpush2.msra.mxu0 0.0
  %3614 = vmatprep.subr.mxu0 0.0
  %3615 = vmatpush2.msra.mxu0 0.0
  %3616 = vmatprep.subr.mxu0 0.0
  %3617 = vmatpush2.msra.mxu0 0.0
  %3618 = vmatprep.subr.mxu0 0.0
  %3619 = vmatpush2.msra.mxu0 0.0
  %3620 = vmatprep.subr.mxu0 0.0
  %3621 = vmatpush2.msra.mxu0 0.0
  %3622 = vmatprep.subr.mxu0 0.0
  %3623 = vmatpush2.msra.mxu0 0.0
  %3624 = vmatprep.subr.mxu0 0.0
  %3625 = vmatpush2.msra.mxu0 0.0
  %3626 = vmatprep.subr.mxu0 0.0
  %3627 = vmatpush2.msra.mxu0 0.0
  %3628 = vmatprep.subr.mxu0 0.0
  %3629 = vmatpush2.msra.mxu0 0.0
  %3630 = vmatprep.subr.mxu0 0.0
  %3631 = vmatpush2.msra.mxu0 0.0
  %3632 = vmatprep.subr.mxu0 0.0
  %3633 = vmatpush2.msra.mxu0 0.0
  %3634 = vmatprep.subr.mxu0 0.0
  %3635 = vmatpush2.msra.mxu0 0.0
  %3636 = vmatprep.subr.mxu0 0.0
  %3637 = vmatpush2.msra.mxu0 0.0
  %3638 = vmatprep.mubr.f32.mxu0 0.0
  %3639 = vmatmul.mubr.f32.gmra.mxu0 %v3569
  %v3640 = vpop.f32.mrf.mxu0
  %v3641 = vadd.f32 %v3566, %v3640
  %v3642 = vpop.f32.mrf.mxu0
  %3643 = vmatprep.mubr.f32.mxu0 0.0
  %3644 = vmatmul.mubr.f32.gmra.mxu0 %v3572
  %v3645 = vpop.f32.mrf.mxu0
  %v3646 = vadd.f32 %v3566, %v3645
  %v3647 = vpop.f32.mrf.mxu0
  %3648 = vdwg.mxu0
  %s3649 = scalar_lea.vmem %s14, 1
  %v3650 = vld [vmem:[%s3649] sm:$0x1]
  %s3651 = scalar_lea.vmem %s15, 1
  %v3652 = vld [vmem:[%s3651] sm:$0x1]
  %v3653 = vsel %vm63, %v3641, 0.0
  %3654 = vadd.xlane.f32.xlu0 %v3653
  %v3655 = vpop.xlane.xlu0 %3654
  %v3656 = vsel %vm63, %v3646, 0.0
  %3657 = vadd.xlane.f32.xlu0 %v3656
  %v3658 = vpop.xlane.xlu0 %3657
  %v3659 = vmul.f32 %v3655, %v70
  %v3660 = vmul.f32 %v3658, %v70
  %v3661 = vsub.f32 %v3641, %v3659
  %v3662 = vsub.f32 %v3646, %v3660
  %v3663 = vmul.f32 %v3661, %v3661
  %v3664 = vmul.f32 %v3662, %v3662
  %v3665 = vsel %vm63, %v3663, 0.0
  %3666 = vadd.xlane.f32.xlu0 %v3665
  %v3667 = vpop.xlane.xlu0 %3666
  %v3668 = vsel %vm63, %v3664, 0.0
  %3669 = vadd.xlane.f32.xlu0 %v3668
  %v3670 = vpop.xlane.xlu0 %3669
  %v3671 = vmul.f32 %v3667, %v70
  %v3672 = vmul.f32 %v3670, %v70
  %v3673 = vadd.f32 %v3671, 1e-05
  %v3674 = vadd.f32 %v3672, 1e-05
  %v3675 = vrsqrt.pop %v3673
  %v3676 = vrsqrt.pop %v3674
  %v3677 = vmul.f32 %v3661, %v3675
  %v3678 = vmul.f32 %v3662, %v3676
  %v3680 = vlaneseq
  %v3681 = vshrl.u32 %v3680, 7
  %v3682 = vsub.s32 0, %v3681
  %v3683 = vrot.slane %v3650, %v3682
  %v3685 = vmul.f32 %v3677, %v3683
  %v3686 = vmul.f32 %v3678, %v3683
  %v3688 = vlaneseq
  %v3689 = vshrl.u32 %v3688, 7
  %v3690 = vsub.s32 0, %v3689
  %v3691 = vrot.slane %v3652, %v3690
  %v3693 = vadd.f32 %v3685, %v3691
  %v3694 = vadd.f32 %v3686, %v3691
  %s3695 = scalar_lea.vmem %s16, 8
  %v3696 = vld [vmem:[%s3695] sm:$0x7f]
  %s3697 = scalar_lea.vmem %s17, 1
  %v3698 = vld [vmem:[%s3697] sm:$0x1]
  %v3700 = vlaneseq
  %v3701 = vshrl.u32 %v3700, 7
  %v3702 = vsub.s32 0, %v3701
  %v3703 = vrot.slane %v3698, %v3702
  %v3706 = vsel %vm63, %v3693, 0
  %v3709 = vsel %vm63, %v3694, 0
  %v3712 = vsel %vm114, %v3696, 0
  %3714 = vmatprep.subr.mxu0 0.0
  %3715 = vmatpush1.msra.mxu0 0.0
  %3716 = vmatprep.subr.mxu0 0.0
  %3717 = vmatpush1.msra.mxu0 0.0
  %3718 = vmatprep.subr.mxu0 0.0
  %3719 = vmatpush1.msra.mxu0 0.0
  %3720 = vmatprep.subr.mxu0 0.0
  %3721 = vmatpush1.msra.mxu0 0.0
  %3722 = vmatprep.subr.mxu0 0.0
  %3723 = vmatpush1.msra.mxu0 0.0
  %3724 = vmatprep.subr.mxu0 0.0
  %3725 = vmatpush1.msra.mxu0 0.0
  %3726 = vmatprep.subr.mxu0 0.0
  %3727 = vmatpush1.msra.mxu0 0.0
  %3728 = vmatprep.subr.mxu0 0.0
  %3729 = vmatpush1.msra.mxu0 0.0
  %3730 = vmatprep.subr.mxu0 0.0
  %3731 = vmatpush1.msra.mxu0 0.0
  %3732 = vmatprep.subr.mxu0 0.0
  %3733 = vmatpush1.msra.mxu0 0.0
  %3734 = vmatprep.subr.mxu0 0.0
  %3735 = vmatpush1.msra.mxu0 0.0
  %3736 = vmatprep.subr.mxu0 0.0
  %3737 = vmatpush1.msra.mxu0 0.0
  %3738 = vmatprep.subr.mxu0 0.0
  %3739 = vmatpush1.msra.mxu0 0.0
  %3740 = vmatprep.subr.mxu0 0.0
  %3741 = vmatpush1.msra.mxu0 0.0
  %3742 = vmatprep.subr.mxu0 0.0
  %3743 = vmatpush1.msra.mxu0 0.0
  %3744 = vmatprep.subr.mxu0 0.0
  %3745 = vmatpush1.msra.mxu0 %v3712
  %3746 = vmatprep.subr.mxu0 0.0
  %3747 = vmatpush2.msra.mxu0 0.0
  %3748 = vmatprep.subr.mxu0 0.0
  %3749 = vmatpush2.msra.mxu0 0.0
  %3750 = vmatprep.subr.mxu0 0.0
  %3751 = vmatpush2.msra.mxu0 0.0
  %3752 = vmatprep.subr.mxu0 0.0
  %3753 = vmatpush2.msra.mxu0 0.0
  %3754 = vmatprep.subr.mxu0 0.0
  %3755 = vmatpush2.msra.mxu0 0.0
  %3756 = vmatprep.subr.mxu0 0.0
  %3757 = vmatpush2.msra.mxu0 0.0
  %3758 = vmatprep.subr.mxu0 0.0
  %3759 = vmatpush2.msra.mxu0 0.0
  %3760 = vmatprep.subr.mxu0 0.0
  %3761 = vmatpush2.msra.mxu0 0.0
  %3762 = vmatprep.subr.mxu0 0.0
  %3763 = vmatpush2.msra.mxu0 0.0
  %3764 = vmatprep.subr.mxu0 0.0
  %3765 = vmatpush2.msra.mxu0 0.0
  %3766 = vmatprep.subr.mxu0 0.0
  %3767 = vmatpush2.msra.mxu0 0.0
  %3768 = vmatprep.subr.mxu0 0.0
  %3769 = vmatpush2.msra.mxu0 0.0
  %3770 = vmatprep.subr.mxu0 0.0
  %3771 = vmatpush2.msra.mxu0 0.0
  %3772 = vmatprep.subr.mxu0 0.0
  %3773 = vmatpush2.msra.mxu0 0.0
  %3774 = vmatprep.subr.mxu0 0.0
  %3775 = vmatpush2.msra.mxu0 0.0
  %3776 = vmatprep.subr.mxu0 0.0
  %3777 = vmatpush2.msra.mxu0 0.0
  %3778 = vmatprep.mubr.f32.mxu0 0.0
  %3779 = vmatmul.mubr.f32.gmra.mxu0 %v3706
  %v3780 = vpop.f32.mrf.mxu0
  %v3781 = vadd.f32 %v3703, %v3780
  %v3782 = vpop.f32.mrf.mxu0
  %3783 = vmatprep.mubr.f32.mxu0 0.0
  %3784 = vmatmul.mubr.f32.gmra.mxu0 %v3709
  %v3785 = vpop.f32.mrf.mxu0
  %v3786 = vadd.f32 %v3703, %v3785
  %v3787 = vpop.f32.mrf.mxu0
  %3788 = vdwg.mxu0
  %v3789 = vadd.f32 %v3405, %v3781
  %v3790 = vadd.f32 %v3406, %v3786
  %3791 = vst.msk [vmem:[%s18] sm:$0xff] %vm63, %v3789
  %3792 = vst.msk [vmem:[%s18 + $0x8] sm:$0xff] %vm63, %v3790
  // Predicated region
  $region74: #{transformer_forward.1} parent=0 // pred_check
    _
  $region75: #{transformer_forward.1} parent=0 // pred_check_branch
    %3794 = sbr.rel (0) target = $region77
  $region76: #{transformer_forward.1} parent=0 // pred_region
    _
  $region77: #{transformer_forward.1} parent=0 // pred_fallthru
    _
  // Predicated region
  $region78: #{transformer_forward.1} parent=0 // pred_check
    _
  $region79: #{transformer_forward.1} parent=0 // pred_check_branch
    %3796 = sbr.rel (0) target = $region81
  $region80: #{transformer_forward.1} parent=0 // pred_region
    _
  $region81: #{transformer_forward.1} parent=0 // pred_fallthru
    _

</llo_original>
